<compile_context>
chip_gen: v7x
topology: tpu7x:2x2x1
jax: 0.10.0
libtpu: 0.0.40
codegen_flags: <defaults>
</compile_context>

<pallas_src>
import functools

import jax
import jax.numpy as jnp
from jax import lax
from jax.experimental import pallas as pl
from jax.experimental.pallas import tpu as pltpu


def _round_up(v, m):
    return (v + m - 1) // m * m


# ---------------------------------------------------------------------------
# In-kernel math (operates on lane-padded tensors).
# ---------------------------------------------------------------------------

def _layer_norm_padded(x, g, b, d_valid):
    """LayerNorm matching torch (unbiased var, eps=1e-12) on lane-padded x.

    Only the first `d_valid` columns are real data; padded columns of x are
    zero on entry and stay zero on exit (g / b are zero-padded).
    """
    col = lax.broadcasted_iota(jnp.int32, x.shape, x.ndim - 1)
    valid = col < d_valid
    xm = jnp.where(valid, x, 0.0)
    mean = jnp.sum(xm, axis=-1, keepdims=True) / d_valid
    xc = jnp.where(valid, x - mean, 0.0)
    var = jnp.sum(xc * xc, axis=-1, keepdims=True) / (d_valid - 1)
    return xc * g * lax.rsqrt(var + 1e-12) + b


def _attn_core(q, k, v, wp_heads, pb, *, masked):
    """Batched-over-heads attention. q/k/v: (H, S, d_head_padded)."""
    # Contract the head (lane) dim directly -- no explicit K transpose.
    s = jnp.einsum("hqd,hkd->hqk", q, k, preferred_element_type=jnp.float32)
    if masked:
        qi = lax.broadcasted_iota(jnp.int32, s.shape, 1)
        kj = lax.broadcasted_iota(jnp.int32, s.shape, 2)
        s = jnp.where(kj > qi, -jnp.inf, s)
    # NOTE: softmax over dim=-2 (the *query* axis), exactly as the reference.
    m = jnp.max(s, axis=-2, keepdims=True)
    e = jnp.exp(s - m)
    denom = jnp.sum(e, axis=-2, keepdims=True)
    p = e * pl.reciprocal(denom, approx=True)
    o = jnp.einsum("hqk,hkd->hqd", p, v, preferred_element_type=jnp.float32)
    # concat-over-heads followed by the output projection == sum_h (o_h @ Wp_h)
    part = jnp.einsum("hqd,hdm->hqm", o, wp_heads,
                      preferred_element_type=jnp.float32)
    return jnp.sum(part, axis=0) + pb


def _decoder_math_padded(x, y, p, *, num_heads, dhp, d_model):
    H = num_heads

    # --- masked self-attention (fused per-head QKV projection) ---
    xb = jnp.broadcast_to(x, (H,) + x.shape)
    qkv = jnp.einsum("hsk,hkd->hsd", xb, p["wqkv_s"],
                     preferred_element_type=jnp.float32)
    q = qkv[:, :, 0 * dhp:1 * dhp]
    k = qkv[:, :, 1 * dhp:2 * dhp]
    v = qkv[:, :, 2 * dhp:3 * dhp]
    x = x + _attn_core(q, k, v, p["wp_s"], p["pb_s"], masked=True)
    x = _layer_norm_padded(x, p["g1"], p["b1"], d_model)

    # --- cross-attention (fused per-head KV projection from y) ---
    xb = jnp.broadcast_to(x, (H,) + x.shape)
    q = jnp.einsum("hsk,hkd->hsd", xb, p["wq_c"],
                   preferred_element_type=jnp.float32)
    yb = jnp.broadcast_to(y, (H,) + y.shape)
    kv = jnp.einsum("hsk,hkd->hsd", yb, p["wkv_c"],
                    preferred_element_type=jnp.float32)
    k = kv[:, :, 0 * dhp:1 * dhp]
    v = kv[:, :, 1 * dhp:2 * dhp]
    x = x + _attn_core(q, k, v, p["wp_c"], p["pb_c"], masked=False)
    x = _layer_norm_padded(x, p["g2"], p["b2"], d_model)

    # --- feed-forward ---
    h = jnp.maximum(
        jnp.dot(x, p["w1"], preferred_element_type=jnp.float32) + p["bb1"], 0.0)
    x = x + jnp.dot(h, p["w2"], preferred_element_type=jnp.float32) + p["bb2"]
    x = _layer_norm_padded(x, p["g3"], p["b3"], d_model)
    return x


_PARAM_ORDER = ("wqkv_s", "wp_s", "pb_s", "g1", "b1",
                "wq_c", "wkv_c", "wp_c", "pb_c", "g2", "b2",
                "w1", "bb1", "w2", "bb2", "g3", "b3")


def _decoder_kernel(num_heads, dhp, d_model, x_ref, y_ref, *refs):
    param_refs, out_ref = refs[:-1], refs[-1]
    p = {name: r[...] for name, r in zip(_PARAM_ORDER, param_refs)}
    out_ref[...] = _decoder_math_padded(x_ref[...], y_ref[...], p,
                                        num_heads=num_heads, dhp=dhp,
                                        d_model=d_model)


# ---------------------------------------------------------------------------
# Wrapper: pad / restructure parameters, call the kernel, slice the output.
# ---------------------------------------------------------------------------

def _pack_params(params, *, num_heads, d_model):
    D = d_model
    dh = D // num_heads
    Dp = _round_up(D, 128)
    dhp = _round_up(dh, 128)
    Hff = 4 * D
    Hffp = _round_up(Hff, 128)
    scale = 1.0 / float(dh) ** 0.5

    def pad2(w, rows, cols):
        out = jnp.zeros((rows, cols), jnp.float32)
        return out.at[:w.shape[0], :w.shape[1]].set(w)

    wqkv_s = jnp.zeros((num_heads, Dp, 3 * dhp), jnp.float32)
    wq_c = jnp.zeros((num_heads, Dp, dhp), jnp.float32)
    wkv_c = jnp.zeros((num_heads, Dp, 2 * dhp), jnp.float32)
    wp_s = jnp.zeros((num_heads, dhp, Dp), jnp.float32)
    wp_c = jnp.zeros((num_heads, dhp, Dp), jnp.float32)
    for h in range(num_heads):
        sl = slice(h * dh, (h + 1) * dh)
        # 1/sqrt(d_head) is folded into the Q projection weights.
        wqkv_s = wqkv_s.at[h, :D, 0:dh].set(params["wq_s"][:, sl] * scale)
        wqkv_s = wqkv_s.at[h, :D, dhp:dhp + dh].set(params["wk_s"][:, sl])
        wqkv_s = wqkv_s.at[h, :D, 2 * dhp:2 * dhp + dh].set(params["wv_s"][:, sl])
        wq_c = wq_c.at[h, :D, 0:dh].set(params["wq_c"][:, sl] * scale)
        wkv_c = wkv_c.at[h, :D, 0:dh].set(params["wk_c"][:, sl])
        wkv_c = wkv_c.at[h, :D, dhp:dhp + dh].set(params["wv_c"][:, sl])
        wp_s = wp_s.at[h, :dh, :D].set(params["pw_s"][sl, :])
        wp_c = wp_c.at[h, :dh, :D].set(params["pw_c"][sl, :])

    packed = {
        "wqkv_s": wqkv_s, "wp_s": wp_s, "pb_s": pad2(params["pb_s"], 1, Dp),
        "g1": pad2(params["g1"], 1, Dp), "b1": pad2(params["b1"], 1, Dp),
        "wq_c": wq_c, "wkv_c": wkv_c, "wp_c": wp_c,
        "pb_c": pad2(params["pb_c"], 1, Dp),
        "g2": pad2(params["g2"], 1, Dp), "b2": pad2(params["b2"], 1, Dp),
        "w1": pad2(params["w1"], Dp, Hffp), "bb1": pad2(params["bb1"], 1, Hffp),
        "w2": pad2(params["w2"], Hffp, Dp), "bb2": pad2(params["bb2"], 1, Dp),
        "g3": pad2(params["g3"], 1, Dp), "b3": pad2(params["b3"], 1, Dp),
    }
    return packed, Dp, dhp, Hffp


def transformers_decoder(x, y, params, *, num_heads):
    S_x, D = x.shape
    S_y, _ = y.shape
    packed, Dp, dhp, Hffp = _pack_params(params, num_heads=num_heads, d_model=D)
    x_p = jnp.zeros((S_x, Dp), jnp.float32).at[:, :D].set(x)
    y_p = jnp.zeros((S_y, Dp), jnp.float32).at[:, :D].set(y)
    flat = [packed[k] for k in _PARAM_ORDER]
    n_in = 2 + len(flat)

    # Rough cost hints so XLA schedules the wrapper-side packing sensibly.
    H = num_heads
    flops = int(2 * H * S_x * Dp * 3 * dhp            # fused self-attn QKV
                + 2 * H * S_x * S_x * dhp * 2         # self-attn scores + PV
                + 2 * H * S_x * dhp * Dp              # self-attn out proj
                + 2 * H * S_x * Dp * dhp              # cross-attn Q
                + 2 * H * S_y * Dp * 2 * dhp          # cross-attn fused KV
                + 2 * H * S_x * S_y * dhp * 2         # cross-attn scores + PV
                + 2 * H * S_x * dhp * Dp              # cross-attn out proj
                + 2 * S_x * Dp * Hffp * 2)            # FFN
    transcendentals = int(H * S_x * (S_x + S_y) + 6 * S_x)
    bytes_accessed = int(sum(a.size for a in ([x_p, y_p] + flat)) * 4
                         + S_x * Dp * 4)

    kernel = functools.partial(_decoder_kernel, num_heads, dhp, D)
    # Shapes are small; run the whole decoder as one grid-less kernel with
    # every (padded, lane-dense) operand resident in VMEM.
    out_p = pl.pallas_call(
        kernel,
        out_shape=jax.ShapeDtypeStruct((S_x, Dp), jnp.float32),
        in_specs=[pl.BlockSpec(memory_space=pltpu.MemorySpace.VMEM)] * n_in,
        out_specs=pl.BlockSpec(memory_space=pltpu.MemorySpace.VMEM),
        cost_estimate=pl.CostEstimate(flops=flops,
                                      transcendentals=transcendentals,
                                      bytes_accessed=bytes_accessed),
    )(x_p, y_p, *flat)
    return out_p[:, :D]


# ---------------------------------------------------------------------------
# Pure-JAX reference (mirrors the PyTorch module exactly, unpadded).
# ---------------------------------------------------------------------------

def _layer_norm_ref(x, g, b):
    mean = jnp.mean(x, axis=-1, keepdims=True)
    n = x.shape[-1]
    var = jnp.sum((x - mean) ** 2, axis=-1, keepdims=True) / (n - 1)
    return (x - mean) * g / jnp.sqrt(var + 1e-12) + b


def _mha_ref(q_in, k_in, v_in, wq, wk, wv, pw, pb, *, num_heads, d_head, masked):
    outs = []
    for h in range(num_heads):
        sl = slice(h * d_head, (h + 1) * d_head)
        Q = q_in @ wq[:, sl]
        K = k_in @ wk[:, sl]
        V = v_in @ wv[:, sl]
        scores = (Q @ K.T) / d_head ** 0.5
        if masked:
            i = lax.broadcasted_iota(jnp.int32, scores.shape, 0)
            j = lax.broadcasted_iota(jnp.int32, scores.shape, 1)
            scores = jnp.where(j > i, -jnp.inf, scores)
        m = jnp.max(scores, axis=-2, keepdims=True)
        e = jnp.exp(scores - m)
        p = e / jnp.sum(e, axis=-2, keepdims=True)
        outs.append(p @ V)
    cat = jnp.concatenate(outs, axis=-1)
    return cat @ pw + pb


def _decoder_ref(x, y, p, *, num_heads, d_head):
    x = x + _mha_ref(x, x, x, p["wq_s"], p["wk_s"], p["wv_s"], p["pw_s"],
                     p["pb_s"], num_heads=num_heads, d_head=d_head, masked=True)
    x = _layer_norm_ref(x, p["g1"], p["b1"])
    x = x + _mha_ref(x, y, y, p["wq_c"], p["wk_c"], p["wv_c"], p["pw_c"],
                     p["pb_c"], num_heads=num_heads, d_head=d_head, masked=False)
    x = _layer_norm_ref(x, p["g2"], p["b2"])
    h = jnp.maximum(x @ p["w1"] + p["bb1"], 0.0)
    x = x + h @ p["w2"] + p["bb2"]
    x = _layer_norm_ref(x, p["g3"], p["b3"])
    return x


def _init_params(key, d_model):
    def nrm(k, shape, scale=0.1):
        return scale * jax.random.normal(k, shape, dtype=jnp.float32)

    ks = jax.random.split(key, 12)
    D = d_model
    params = {
        # self-attention (per-head q/k/v weights fused along output dim)
        "wq_s": nrm(ks[0], (D, D)),
        "wk_s": nrm(ks[1], (D, D)),
        "wv_s": nrm(ks[2], (D, D)),
        "pw_s": nrm(ks[3], (D, D)),
        "pb_s": nrm(ks[4], (1, D)),
        "g1": jnp.ones((1, D), jnp.float32),
        "b1": jnp.zeros((1, D), jnp.float32),
        # cross-attention
        "wq_c": nrm(ks[5], (D, D)),
        "wk_c": nrm(ks[6], (D, D)),
        "wv_c": nrm(ks[7], (D, D)),
        "pw_c": nrm(ks[8], (D, D)),
        "pb_c": nrm(ks[9], (1, D)),
        "g2": jnp.ones((1, D), jnp.float32),
        "b2": jnp.zeros((1, D), jnp.float32),
        # feed-forward
        "w1": nrm(ks[10], (D, 4 * D)),
        "bb1": jnp.zeros((1, 4 * D), jnp.float32),
        "w2": nrm(ks[11], (4 * D, D)),
        "bb2": jnp.zeros((1, D), jnp.float32),
        "g3": jnp.ones((1, D), jnp.float32),
        "b3": jnp.zeros((1, D), jnp.float32),
    }
    return params


if __name__ == "__main__":
    S_X, S_Y, D_MODEL, NUM_HEADS = 8, 16, 32, 4

    key = jax.random.PRNGKey(0)
    kx, ky, kp = jax.random.split(key, 3)
    x = jax.random.normal(kx, (S_X, D_MODEL), dtype=jnp.float32)
    y = jax.random.normal(ky, (S_Y, D_MODEL), dtype=jnp.float32)
    params = _init_params(kp, D_MODEL)

    out = transformers_decoder(x, y, params, num_heads=NUM_HEADS)
    out = jax.block_until_ready(out)

    # Faithful pure-JAX reference (per-head loop, exact divides) for sanity.
    ref = _decoder_ref(x, y, params,
                       num_heads=NUM_HEADS, d_head=D_MODEL // NUM_HEADS)
    ref = jax.block_until_ready(ref)

    assert out.shape == (S_X, D_MODEL)
    max_err = float(jnp.max(jnp.abs(out - ref)))
    if max_err > 2e-3:
        raise AssertionError(f"kernel mismatch vs reference, max_err={max_err}")

    print("KERNEL_OK")
</pallas_src>

<mosaic_0001>
module attributes {stable_mosaic.version = 11 : i64} {
  func.func @_decoder_kernel(%arg0: memref<8x128xf32, #tpu.memory_space<vmem>>, %arg1: memref<16x128xf32, #tpu.memory_space<vmem>>, %arg2: memref<4x128x384xf32, #tpu.memory_space<vmem>>, %arg3: memref<4x128x128xf32, #tpu.memory_space<vmem>>, %arg4: memref<1x128xf32, #tpu.memory_space<vmem>>, %arg5: memref<1x128xf32, #tpu.memory_space<vmem>>, %arg6: memref<1x128xf32, #tpu.memory_space<vmem>>, %arg7: memref<4x128x128xf32, #tpu.memory_space<vmem>>, %arg8: memref<4x128x256xf32, #tpu.memory_space<vmem>>, %arg9: memref<4x128x128xf32, #tpu.memory_space<vmem>>, %arg10: memref<1x128xf32, #tpu.memory_space<vmem>>, %arg11: memref<1x128xf32, #tpu.memory_space<vmem>>, %arg12: memref<1x128xf32, #tpu.memory_space<vmem>>, %arg13: memref<128x128xf32, #tpu.memory_space<vmem>>, %arg14: memref<1x128xf32, #tpu.memory_space<vmem>>, %arg15: memref<128x128xf32, #tpu.memory_space<vmem>>, %arg16: memref<1x128xf32, #tpu.memory_space<vmem>>, %arg17: memref<1x128xf32, #tpu.memory_space<vmem>>, %arg18: memref<1x128xf32, #tpu.memory_space<vmem>>, %arg19: memref<8x128xf32, #tpu.memory_space<vmem>>) attributes {dimension_semantics = [], scalar_prefetch = 0 : i64, scratch_operands = 0 : i64, tpu.core_type = #tpu.core_type<tc>} {
    %c0 = arith.constant 0 : index
    %c0_0 = arith.constant 0 : index
    %c0_1 = arith.constant 0 : index
    %0 = vector.load %arg2[%c0, %c0_0, %c0_1] : memref<4x128x384xf32, #tpu.memory_space<vmem>>, vector<4x128x384xf32>
    %c0_2 = arith.constant 0 : index
    %c0_3 = arith.constant 0 : index
    %c0_4 = arith.constant 0 : index
    %1 = vector.load %arg3[%c0_2, %c0_3, %c0_4] : memref<4x128x128xf32, #tpu.memory_space<vmem>>, vector<4x128x128xf32>
    %c0_5 = arith.constant 0 : index
    %c0_6 = arith.constant 0 : index
    %2 = vector.load %arg4[%c0_5, %c0_6] : memref<1x128xf32, #tpu.memory_space<vmem>>, vector<1x128xf32>
    %c0_7 = arith.constant 0 : index
    %c0_8 = arith.constant 0 : index
    %3 = vector.load %arg5[%c0_7, %c0_8] : memref<1x128xf32, #tpu.memory_space<vmem>>, vector<1x128xf32>
    %c0_9 = arith.constant 0 : index
    %c0_10 = arith.constant 0 : index
    %4 = vector.load %arg6[%c0_9, %c0_10] : memref<1x128xf32, #tpu.memory_space<vmem>>, vector<1x128xf32>
    %c0_11 = arith.constant 0 : index
    %c0_12 = arith.constant 0 : index
    %c0_13 = arith.constant 0 : index
    %5 = vector.load %arg7[%c0_11, %c0_12, %c0_13] : memref<4x128x128xf32, #tpu.memory_space<vmem>>, vector<4x128x128xf32>
    %c0_14 = arith.constant 0 : index
    %c0_15 = arith.constant 0 : index
    %c0_16 = arith.constant 0 : index
    %6 = vector.load %arg8[%c0_14, %c0_15, %c0_16] : memref<4x128x256xf32, #tpu.memory_space<vmem>>, vector<4x128x256xf32>
    %c0_17 = arith.constant 0 : index
    %c0_18 = arith.constant 0 : index
    %c0_19 = arith.constant 0 : index
    %7 = vector.load %arg9[%c0_17, %c0_18, %c0_19] : memref<4x128x128xf32, #tpu.memory_space<vmem>>, vector<4x128x128xf32>
    %c0_20 = arith.constant 0 : index
    %c0_21 = arith.constant 0 : index
    %8 = vector.load %arg10[%c0_20, %c0_21] : memref<1x128xf32, #tpu.memory_space<vmem>>, vector<1x128xf32>
    %c0_22 = arith.constant 0 : index
    %c0_23 = arith.constant 0 : index
    %9 = vector.load %arg11[%c0_22, %c0_23] : memref<1x128xf32, #tpu.memory_space<vmem>>, vector<1x128xf32>
    %c0_24 = arith.constant 0 : index
    %c0_25 = arith.constant 0 : index
    %10 = vector.load %arg12[%c0_24, %c0_25] : memref<1x128xf32, #tpu.memory_space<vmem>>, vector<1x128xf32>
    %c0_26 = arith.constant 0 : index
    %c0_27 = arith.constant 0 : index
    %11 = vector.load %arg13[%c0_26, %c0_27] : memref<128x128xf32, #tpu.memory_space<vmem>>, vector<128x128xf32>
    %c0_28 = arith.constant 0 : index
    %c0_29 = arith.constant 0 : index
    %12 = vector.load %arg14[%c0_28, %c0_29] : memref<1x128xf32, #tpu.memory_space<vmem>>, vector<1x128xf32>
    %c0_30 = arith.constant 0 : index
    %c0_31 = arith.constant 0 : index
    %13 = vector.load %arg15[%c0_30, %c0_31] : memref<128x128xf32, #tpu.memory_space<vmem>>, vector<128x128xf32>
    %c0_32 = arith.constant 0 : index
    %c0_33 = arith.constant 0 : index
    %14 = vector.load %arg16[%c0_32, %c0_33] : memref<1x128xf32, #tpu.memory_space<vmem>>, vector<1x128xf32>
    %c0_34 = arith.constant 0 : index
    %c0_35 = arith.constant 0 : index
    %15 = vector.load %arg17[%c0_34, %c0_35] : memref<1x128xf32, #tpu.memory_space<vmem>>, vector<1x128xf32>
    %c0_36 = arith.constant 0 : index
    %c0_37 = arith.constant 0 : index
    %16 = vector.load %arg18[%c0_36, %c0_37] : memref<1x128xf32, #tpu.memory_space<vmem>>, vector<1x128xf32>
    %c0_38 = arith.constant 0 : index
    %c0_39 = arith.constant 0 : index
    %17 = vector.load %arg0[%c0_38, %c0_39] : memref<8x128xf32, #tpu.memory_space<vmem>>, vector<8x128xf32>
    %c0_40 = arith.constant 0 : index
    %c0_41 = arith.constant 0 : index
    %18 = vector.load %arg1[%c0_40, %c0_41] : memref<16x128xf32, #tpu.memory_space<vmem>>, vector<16x128xf32>
    %19 = vector.shape_cast %17 : vector<8x128xf32> to vector<1x8x128xf32>
    %20 = vector.broadcast %19 : vector<1x8x128xf32> to vector<4x8x128xf32>
    "tpu.trace_start"() <{level = 10 : i32, message = "hsk,hkd->hsd"}> : () -> ()
    %cst = arith.constant dense<0.000000e+00> : vector<4x8x384xf32>
    %21 = tpu.matmul %20, %0, %cst {dimension_numbers = #tpu.dot_dimension_numbers<[2], [1], [1], [2], [0, 0, 0, 1, 1, 2], [0], [0]>} : vector<4x8x128xf32>, vector<4x128x384xf32>, vector<4x8x384xf32> -> vector<4x8x384xf32>
    "tpu.trace_stop"() : () -> ()
    %22 = vector.extract_strided_slice %21 {offsets = [0, 0, 0], sizes = [4, 8, 128], strides = [1, 1, 1]} : vector<4x8x384xf32> to vector<4x8x128xf32>
    %23 = vector.extract_strided_slice %21 {offsets = [0, 0, 128], sizes = [4, 8, 128], strides = [1, 1, 1]} : vector<4x8x384xf32> to vector<4x8x128xf32>
    %24 = vector.extract_strided_slice %21 {offsets = [0, 0, 256], sizes = [4, 8, 128], strides = [1, 1, 1]} : vector<4x8x384xf32> to vector<4x8x128xf32>
    "tpu.trace_start"() <{level = 10 : i32, message = "hqd,hkd->hqk"}> : () -> ()
    %cst_42 = arith.constant dense<0.000000e+00> : vector<4x8x8xf32>
    %25 = tpu.matmul %22, %23, %cst_42 {dimension_numbers = #tpu.dot_dimension_numbers<[2], [2], [1], [1], [0, 0, 0, 1, 1, 1], [0], [0]>} : vector<4x8x128xf32>, vector<4x8x128xf32>, vector<4x8x8xf32> -> vector<4x8x8xf32>
    "tpu.trace_stop"() : () -> ()
    %26 = tpu.iota {dimensions = array<i32: 1>} : vector<4x8x8xi32>
    %27 = tpu.iota {dimensions = array<i32: 2>} : vector<4x8x8xi32>
    %28 = arith.cmpi sgt, %27, %26 : vector<4x8x8xi32>
    %cst_43 = arith.constant 0xFF800000 : f32
    %29 = vector.broadcast %cst_43 : f32 to vector<4x8x8xf32>
    %30 = arith.select %28, %29, %25 : vector<4x8x8xi1>, vector<4x8x8xf32>
    %cst_44 = arith.constant dense<0xFF800000> : vector<4x8xf32>
    %31 = vector.multi_reduction <maximumf>, %30, %cst_44 [1] : vector<4x8x8xf32> to vector<4x8xf32>
    %32 = vector.shape_cast %31 : vector<4x8xf32> to vector<4x1x8xf32>
    %33 = vector.broadcast %32 : vector<4x1x8xf32> to vector<4x8x8xf32>
    %34 = arith.subf %30, %33 : vector<4x8x8xf32>
    %35 = math.exp %34 : vector<4x8x8xf32>
    %cst_45 = arith.constant dense<0.000000e+00> : vector<4x8xf32>
    %36 = vector.multi_reduction <add>, %35, %cst_45 [1] : vector<4x8x8xf32> to vector<4x8xf32>
    %37 = vector.shape_cast %36 : vector<4x8xf32> to vector<4x1x8xf32>
    %38 = tpu.reciprocal %37 {approx = true} : vector<4x1x8xf32> -> vector<4x1x8xf32>
    %39 = vector.broadcast %38 : vector<4x1x8xf32> to vector<4x8x8xf32>
    %40 = arith.mulf %35, %39 : vector<4x8x8xf32>
    "tpu.trace_start"() <{level = 10 : i32, message = "hqk,hkd->hqd"}> : () -> ()
    %cst_46 = arith.constant dense<0.000000e+00> : vector<4x8x128xf32>
    %41 = tpu.matmul %40, %24, %cst_46 {dimension_numbers = #tpu.dot_dimension_numbers<[2], [1], [1], [2], [0, 0, 0, 1, 1, 2], [0], [0]>} : vector<4x8x8xf32>, vector<4x8x128xf32>, vector<4x8x128xf32> -> vector<4x8x128xf32>
    "tpu.trace_stop"() : () -> ()
    "tpu.trace_start"() <{level = 10 : i32, message = "hqd,hdm->hqm"}> : () -> ()
    %cst_47 = arith.constant dense<0.000000e+00> : vector<4x8x128xf32>
    %42 = tpu.matmul %41, %1, %cst_47 {dimension_numbers = #tpu.dot_dimension_numbers<[2], [1], [1], [2], [0, 0, 0, 1, 1, 2], [0], [0]>} : vector<4x8x128xf32>, vector<4x128x128xf32>, vector<4x8x128xf32> -> vector<4x8x128xf32>
    "tpu.trace_stop"() : () -> ()
    %cst_48 = arith.constant dense<0.000000e+00> : vector<8x128xf32>
    %43 = vector.multi_reduction <add>, %42, %cst_48 [0] : vector<4x8x128xf32> to vector<8x128xf32>
    %44 = vector.broadcast %2 : vector<1x128xf32> to vector<8x128xf32>
    %45 = arith.addf %43, %44 : vector<8x128xf32>
    %46 = arith.addf %17, %45 : vector<8x128xf32>
    %47 = tpu.iota {dimensions = array<i32: 1>} : vector<8x128xi32>
    %c32_i32 = arith.constant 32 : i32
    %48 = vector.broadcast %c32_i32 : i32 to vector<8x128xi32>
    %49 = arith.cmpi slt, %47, %48 : vector<8x128xi32>
    %cst_49 = arith.constant 0.000000e+00 : f32
    %50 = vector.broadcast %cst_49 : f32 to vector<8x128xf32>
    %51 = arith.select %49, %46, %50 : vector<8x128xi1>, vector<8x128xf32>
    %cst_50 = arith.constant dense<0.000000e+00> : vector<8xf32>
    %52 = vector.multi_reduction <add>, %51, %cst_50 [1] : vector<8x128xf32> to vector<8xf32>
    %53 = vector.shape_cast %52 : vector<8xf32> to vector<8x1xf32>
    %cst_51 = arith.constant 3.200000e+01 : f32
    %54 = vector.broadcast %cst_51 : f32 to vector<8x1xf32>
    %55 = arith.divf %53, %54 : vector<8x1xf32>
    %56 = vector.broadcast %55 : vector<8x1xf32> to vector<8x128xf32>
    %57 = arith.subf %46, %56 : vector<8x128xf32>
    %cst_52 = arith.constant 0.000000e+00 : f32
    %58 = vector.broadcast %cst_52 : f32 to vector<8x128xf32>
    %59 = arith.select %49, %57, %58 : vector<8x128xi1>, vector<8x128xf32>
    %60 = arith.mulf %59, %59 : vector<8x128xf32>
    %cst_53 = arith.constant dense<0.000000e+00> : vector<8xf32>
    %61 = vector.multi_reduction <add>, %60, %cst_53 [1] : vector<8x128xf32> to vector<8xf32>
    %62 = vector.shape_cast %61 : vector<8xf32> to vector<8x1xf32>
    %cst_54 = arith.constant 3.100000e+01 : f32
    %63 = vector.broadcast %cst_54 : f32 to vector<8x1xf32>
    %64 = arith.divf %62, %63 : vector<8x1xf32>
    %65 = vector.broadcast %3 : vector<1x128xf32> to vector<8x128xf32>
    %66 = arith.mulf %59, %65 : vector<8x128xf32>
    %cst_55 = arith.constant 9.99999996E-13 : f32
    %67 = vector.broadcast %cst_55 : f32 to vector<8x1xf32>
    %68 = arith.addf %64, %67 : vector<8x1xf32>
    %69 = math.rsqrt %68 : vector<8x1xf32>
    %70 = vector.broadcast %69 : vector<8x1xf32> to vector<8x128xf32>
    %71 = arith.mulf %66, %70 : vector<8x128xf32>
    %72 = vector.broadcast %4 : vector<1x128xf32> to vector<8x128xf32>
    %73 = arith.addf %71, %72 : vector<8x128xf32>
    %74 = vector.shape_cast %73 : vector<8x128xf32> to vector<1x8x128xf32>
    %75 = vector.broadcast %74 : vector<1x8x128xf32> to vector<4x8x128xf32>
    "tpu.trace_start"() <{level = 10 : i32, message = "hsk,hkd->hsd"}> : () -> ()
    %cst_56 = arith.constant dense<0.000000e+00> : vector<4x8x128xf32>
    %76 = tpu.matmul %75, %5, %cst_56 {dimension_numbers = #tpu.dot_dimension_numbers<[2], [1], [1], [2], [0, 0, 0, 1, 1, 2], [0], [0]>} : vector<4x8x128xf32>, vector<4x128x128xf32>, vector<4x8x128xf32> -> vector<4x8x128xf32>
    "tpu.trace_stop"() : () -> ()
    %77 = vector.shape_cast %18 : vector<16x128xf32> to vector<1x16x128xf32>
    %78 = vector.broadcast %77 : vector<1x16x128xf32> to vector<4x16x128xf32>
    "tpu.trace_start"() <{level = 10 : i32, message = "hsk,hkd->hsd"}> : () -> ()
    %cst_57 = arith.constant dense<0.000000e+00> : vector<4x16x256xf32>
    %79 = tpu.matmul %78, %6, %cst_57 {dimension_numbers = #tpu.dot_dimension_numbers<[2], [1], [1], [2], [0, 0, 0, 1, 1, 2], [0], [0]>} : vector<4x16x128xf32>, vector<4x128x256xf32>, vector<4x16x256xf32> -> vector<4x16x256xf32>
    "tpu.trace_stop"() : () -> ()
    %80 = vector.extract_strided_slice %79 {offsets = [0, 0, 0], sizes = [4, 16, 128], strides = [1, 1, 1]} : vector<4x16x256xf32> to vector<4x16x128xf32>
    %81 = vector.extract_strided_slice %79 {offsets = [0, 0, 128], sizes = [4, 16, 128], strides = [1, 1, 1]} : vector<4x16x256xf32> to vector<4x16x128xf32>
    "tpu.trace_start"() <{level = 10 : i32, message = "hqd,hkd->hqk"}> : () -> ()
    %cst_58 = arith.constant dense<0.000000e+00> : vector<4x8x16xf32>
    %82 = tpu.matmul %76, %80, %cst_58 {dimension_numbers = #tpu.dot_dimension_numbers<[2], [2], [1], [1], [0, 0, 0, 1, 1, 1], [0], [0]>} : vector<4x8x128xf32>, vector<4x16x128xf32>, vector<4x8x16xf32> -> vector<4x8x16xf32>
    "tpu.trace_stop"() : () -> ()
    %cst_59 = arith.constant dense<0xFF800000> : vector<4x16xf32>
    %83 = vector.multi_reduction <maximumf>, %82, %cst_59 [1] : vector<4x8x16xf32> to vector<4x16xf32>
    %84 = vector.shape_cast %83 : vector<4x16xf32> to vector<4x1x16xf32>
    %85 = vector.broadcast %84 : vector<4x1x16xf32> to vector<4x8x16xf32>
    %86 = arith.subf %82, %85 : vector<4x8x16xf32>
    %87 = math.exp %86 : vector<4x8x16xf32>
    %cst_60 = arith.constant dense<0.000000e+00> : vector<4x16xf32>
    %88 = vector.multi_reduction <add>, %87, %cst_60 [1] : vector<4x8x16xf32> to vector<4x16xf32>
    %89 = vector.shape_cast %88 : vector<4x16xf32> to vector<4x1x16xf32>
    %90 = tpu.reciprocal %89 {approx = true} : vector<4x1x16xf32> -> vector<4x1x16xf32>
    %91 = vector.broadcast %90 : vector<4x1x16xf32> to vector<4x8x16xf32>
    %92 = arith.mulf %87, %91 : vector<4x8x16xf32>
    "tpu.trace_start"() <{level = 10 : i32, message = "hqk,hkd->hqd"}> : () -> ()
    %cst_61 = arith.constant dense<0.000000e+00> : vector<4x8x128xf32>
    %93 = tpu.matmul %92, %81, %cst_61 {dimension_numbers = #tpu.dot_dimension_numbers<[2], [1], [1], [2], [0, 0, 0, 1, 1, 2], [0], [0]>} : vector<4x8x16xf32>, vector<4x16x128xf32>, vector<4x8x128xf32> -> vector<4x8x128xf32>
    "tpu.trace_stop"() : () -> ()
    "tpu.trace_start"() <{level = 10 : i32, message = "hqd,hdm->hqm"}> : () -> ()
    %cst_62 = arith.constant dense<0.000000e+00> : vector<4x8x128xf32>
    %94 = tpu.matmul %93, %7, %cst_62 {dimension_numbers = #tpu.dot_dimension_numbers<[2], [1], [1], [2], [0, 0, 0, 1, 1, 2], [0], [0]>} : vector<4x8x128xf32>, vector<4x128x128xf32>, vector<4x8x128xf32> -> vector<4x8x128xf32>
    "tpu.trace_stop"() : () -> ()
    %cst_63 = arith.constant dense<0.000000e+00> : vector<8x128xf32>
    %95 = vector.multi_reduction <add>, %94, %cst_63 [0] : vector<4x8x128xf32> to vector<8x128xf32>
    %96 = vector.broadcast %8 : vector<1x128xf32> to vector<8x128xf32>
    %97 = arith.addf %95, %96 : vector<8x128xf32>
    %98 = arith.addf %73, %97 : vector<8x128xf32>
    %99 = tpu.iota {dimensions = array<i32: 1>} : vector<8x128xi32>
    %c32_i32_64 = arith.constant 32 : i32
    %100 = vector.broadcast %c32_i32_64 : i32 to vector<8x128xi32>
    %101 = arith.cmpi slt, %99, %100 : vector<8x128xi32>
    %cst_65 = arith.constant 0.000000e+00 : f32
    %102 = vector.broadcast %cst_65 : f32 to vector<8x128xf32>
    %103 = arith.select %101, %98, %102 : vector<8x128xi1>, vector<8x128xf32>
    %cst_66 = arith.constant dense<0.000000e+00> : vector<8xf32>
    %104 = vector.multi_reduction <add>, %103, %cst_66 [1] : vector<8x128xf32> to vector<8xf32>
    %105 = vector.shape_cast %104 : vector<8xf32> to vector<8x1xf32>
    %cst_67 = arith.constant 3.200000e+01 : f32
    %106 = vector.broadcast %cst_67 : f32 to vector<8x1xf32>
    %107 = arith.divf %105, %106 : vector<8x1xf32>
    %108 = vector.broadcast %107 : vector<8x1xf32> to vector<8x128xf32>
    %109 = arith.subf %98, %108 : vector<8x128xf32>
    %cst_68 = arith.constant 0.000000e+00 : f32
    %110 = vector.broadcast %cst_68 : f32 to vector<8x128xf32>
    %111 = arith.select %101, %109, %110 : vector<8x128xi1>, vector<8x128xf32>
    %112 = arith.mulf %111, %111 : vector<8x128xf32>
    %cst_69 = arith.constant dense<0.000000e+00> : vector<8xf32>
    %113 = vector.multi_reduction <add>, %112, %cst_69 [1] : vector<8x128xf32> to vector<8xf32>
    %114 = vector.shape_cast %113 : vector<8xf32> to vector<8x1xf32>
    %cst_70 = arith.constant 3.100000e+01 : f32
    %115 = vector.broadcast %cst_70 : f32 to vector<8x1xf32>
    %116 = arith.divf %114, %115 : vector<8x1xf32>
    %117 = vector.broadcast %9 : vector<1x128xf32> to vector<8x128xf32>
    %118 = arith.mulf %111, %117 : vector<8x128xf32>
    %cst_71 = arith.constant 9.99999996E-13 : f32
    %119 = vector.broadcast %cst_71 : f32 to vector<8x1xf32>
    %120 = arith.addf %116, %119 : vector<8x1xf32>
    %121 = math.rsqrt %120 : vector<8x1xf32>
    %122 = vector.broadcast %121 : vector<8x1xf32> to vector<8x128xf32>
    %123 = arith.mulf %118, %122 : vector<8x128xf32>
    %124 = vector.broadcast %10 : vector<1x128xf32> to vector<8x128xf32>
    %125 = arith.addf %123, %124 : vector<8x128xf32>
    %cst_72 = arith.constant dense<0.000000e+00> : vector<8x128xf32>
    %126 = tpu.matmul %125, %11, %cst_72 {dimension_numbers = #tpu.dot_dimension_numbers<[1], [0], [0], [1], [0, 0, 1, 1], [], []>} : vector<8x128xf32>, vector<128x128xf32>, vector<8x128xf32> -> vector<8x128xf32>
    %127 = vector.broadcast %12 : vector<1x128xf32> to vector<8x128xf32>
    %128 = arith.addf %126, %127 : vector<8x128xf32>
    %cst_73 = arith.constant 0.000000e+00 : f32
    %129 = vector.broadcast %cst_73 : f32 to vector<8x128xf32>
    %130 = arith.maximumf %128, %129 : vector<8x128xf32>
    %cst_74 = arith.constant dense<0.000000e+00> : vector<8x128xf32>
    %131 = tpu.matmul %130, %13, %cst_74 {dimension_numbers = #tpu.dot_dimension_numbers<[1], [0], [0], [1], [0, 0, 1, 1], [], []>} : vector<8x128xf32>, vector<128x128xf32>, vector<8x128xf32> -> vector<8x128xf32>
    %132 = arith.addf %125, %131 : vector<8x128xf32>
    %133 = vector.broadcast %14 : vector<1x128xf32> to vector<8x128xf32>
    %134 = arith.addf %132, %133 : vector<8x128xf32>
    %135 = tpu.iota {dimensions = array<i32: 1>} : vector<8x128xi32>
    %c32_i32_75 = arith.constant 32 : i32
    %136 = vector.broadcast %c32_i32_75 : i32 to vector<8x128xi32>
    %137 = arith.cmpi slt, %135, %136 : vector<8x128xi32>
    %cst_76 = arith.constant 0.000000e+00 : f32
    %138 = vector.broadcast %cst_76 : f32 to vector<8x128xf32>
    %139 = arith.select %137, %134, %138 : vector<8x128xi1>, vector<8x128xf32>
    %cst_77 = arith.constant dense<0.000000e+00> : vector<8xf32>
    %140 = vector.multi_reduction <add>, %139, %cst_77 [1] : vector<8x128xf32> to vector<8xf32>
    %141 = vector.shape_cast %140 : vector<8xf32> to vector<8x1xf32>
    %cst_78 = arith.constant 3.200000e+01 : f32
    %142 = vector.broadcast %cst_78 : f32 to vector<8x1xf32>
    %143 = arith.divf %141, %142 : vector<8x1xf32>
    %144 = vector.broadcast %143 : vector<8x1xf32> to vector<8x128xf32>
    %145 = arith.subf %134, %144 : vector<8x128xf32>
    %cst_79 = arith.constant 0.000000e+00 : f32
    %146 = vector.broadcast %cst_79 : f32 to vector<8x128xf32>
    %147 = arith.select %137, %145, %146 : vector<8x128xi1>, vector<8x128xf32>
    %148 = arith.mulf %147, %147 : vector<8x128xf32>
    %cst_80 = arith.constant dense<0.000000e+00> : vector<8xf32>
    %149 = vector.multi_reduction <add>, %148, %cst_80 [1] : vector<8x128xf32> to vector<8xf32>
    %150 = vector.shape_cast %149 : vector<8xf32> to vector<8x1xf32>
    %cst_81 = arith.constant 3.100000e+01 : f32
    %151 = vector.broadcast %cst_81 : f32 to vector<8x1xf32>
    %152 = arith.divf %150, %151 : vector<8x1xf32>
    %153 = vector.broadcast %15 : vector<1x128xf32> to vector<8x128xf32>
    %154 = arith.mulf %147, %153 : vector<8x128xf32>
    %cst_82 = arith.constant 9.99999996E-13 : f32
    %155 = vector.broadcast %cst_82 : f32 to vector<8x1xf32>
    %156 = arith.addf %152, %155 : vector<8x1xf32>
    %157 = math.rsqrt %156 : vector<8x1xf32>
    %158 = vector.broadcast %157 : vector<8x1xf32> to vector<8x128xf32>
    %159 = arith.mulf %154, %158 : vector<8x128xf32>
    %160 = vector.broadcast %16 : vector<1x128xf32> to vector<8x128xf32>
    %161 = arith.addf %159, %160 : vector<8x128xf32>
    %c0_83 = arith.constant 0 : index
    %c0_84 = arith.constant 0 : index
    %162 = vector.load %arg19[%c0_83, %c0_84] : memref<8x128xf32, #tpu.memory_space<vmem>>, vector<8x128xf32>
    tpu.vector_store %arg19[%c0_83, %c0_84], %161 {strides = array<i32>} : memref<8x128xf32, #tpu.memory_space<vmem>>, vector<8x128xf32>,
    return
  }
}

</mosaic_0001>

<llo_original>
// kernel: tpu_custom_call.1
$region0: #{tpu_custom_call.1}
  #allocation0 [shape = 'u32[]', space=smem, size = 0x4, offset = 0x4, fixed_abs, tag = 'smem constant byte address 0x4 - core index']
  #allocation1 [shape = 'u32[144,128]{1,0:T(1,128)}', space=vmem, size = 0x12000, scoped, tag = 'internal scratch']
  %s0 = inlined_call_operand.hbm [shape: f32[8,128], index: 0, kind: input, shape index: {}]
  %s1 = inlined_call_operand.hbm [shape: f32[16,128], index: 1, kind: input, shape index: {}]
  %s2 = inlined_call_operand.hbm [shape: f32[4,128,384], index: 2, kind: input, shape index: {}]
  %s3 = inlined_call_operand.hbm [shape: f32[4,128,128], index: 3, kind: input, shape index: {}]
  %s4 = inlined_call_operand.vmem [shape: f32[1,128], index: 4, kind: input, shape index: {}]
  %s5 = inlined_call_operand.vmem [shape: f32[1,128], index: 5, kind: input, shape index: {}]
  %s6 = inlined_call_operand.vmem [shape: f32[1,128], index: 6, kind: input, shape index: {}]
  %s7 = inlined_call_operand.hbm [shape: f32[4,128,128], index: 7, kind: input, shape index: {}]
  %s8 = inlined_call_operand.hbm [shape: f32[4,128,256], index: 8, kind: input, shape index: {}]
  %s9 = inlined_call_operand.hbm [shape: f32[4,128,128], index: 9, kind: input, shape index: {}]
  %s10 = inlined_call_operand.vmem [shape: f32[1,128], index: 10, kind: input, shape index: {}]
  %s11 = inlined_call_operand.vmem [shape: f32[1,128], index: 11, kind: input, shape index: {}]
  %s12 = inlined_call_operand.vmem [shape: f32[1,128], index: 12, kind: input, shape index: {}]
  %s13 = inlined_call_operand.hbm [shape: f32[128,128], index: 13, kind: input, shape index: {}]
  %s14 = inlined_call_operand.vmem [shape: f32[1,128], index: 14, kind: input, shape index: {}]
  %s15 = inlined_call_operand.hbm [shape: f32[128,128], index: 15, kind: input, shape index: {}]
  %s16 = inlined_call_operand.vmem [shape: f32[1,128], index: 16, kind: input, shape index: {}]
  %s17 = inlined_call_operand.vmem [shape: f32[1,128], index: 17, kind: input, shape index: {}]
  %s18 = inlined_call_operand.vmem [shape: f32[1,128], index: 18, kind: input, shape index: {}]
  %s19 = inlined_call_operand.hbm [shape: f32[8,128], index: 19, kind: output, shape index: {}]
  %s20 = sld [smem:[#allocation0]]
  $region122: #{tpu_custom_call.1} parent=0
    _
  %s22 = ssub.s32 1, %s20
  %s23 = scalar_select 0, %s22, %s20
  $region1: #{tpu_custom_call.1} parent=0
    #allocation2 [shape = 'u8[4096]{0}', space=vmem, size = 0x1000, scoped, tag = 'input window, operand 0, single buffered']
    #allocation3 [shape = 's32[1]{0}', space=sflag, size = 0x4, scoped, tag = 'scoped memory for tpu_custom_call.1']
    #allocation4 [shape = 's32[1]{0}', space=sflag, size = 0x4, scoped, tag = 'scoped memory for tpu_custom_call.1']
    #allocation5 [shape = 'u8[8192]{0}', space=vmem, size = 0x2000, scoped, tag = 'input window, operand 1, single buffered']
    #allocation6 [shape = 's32[1]{0}', space=sflag, size = 0x4, scoped, tag = 'scoped memory for tpu_custom_call.1']
    #allocation7 [shape = 'u8[786432]{0}', space=vmem, size = 0xc0000, scoped, tag = 'input window, operand 2, single buffered']
    #allocation8 [shape = 'u8[262144]{0}', space=vmem, size = 0x40000, scoped, tag = 'input window, operand 3, single buffered']
    #allocation9 [shape = 's32[1]{0}', space=sflag, size = 0x4, scoped, tag = 'scoped memory for tpu_custom_call.1']
    #allocation10 [shape = 'u8[262144]{0}', space=vmem, size = 0x40000, scoped, tag = 'input window, operand 7, single buffered']
    #allocation11 [shape = 'u8[524288]{0}', space=vmem, size = 0x80000, scoped, tag = 'input window, operand 8, single buffered']
    #allocation12 [shape = 's32[1]{0}', space=sflag, size = 0x4, scoped, tag = 'scoped memory for tpu_custom_call.1']
    #allocation13 [shape = 'u8[262144]{0}', space=vmem, size = 0x40000, scoped, tag = 'input window, operand 9, single buffered']
    #allocation14 [shape = 'u8[65536]{0}', space=vmem, size = 0x10000, scoped, tag = 'input window, operand 13, single buffered']
    #allocation15 [shape = 's32[1]{0}', space=sflag, size = 0x4, scoped, tag = 'scoped memory for tpu_custom_call.1']
    #allocation16 [shape = 'u8[65536]{0}', space=vmem, size = 0x10000, scoped, tag = 'input window, operand 15, single buffered']
    #allocation17 [shape = 'u8[4096]{0}', space=vmem, size = 0x1000, scoped, tag = 'output window, operand 0, single buffered']
    %24 = vsyncpa [#allocation3], 0
    %25 = vsyncpa [#allocation6], 0
    %26 = vsyncpa [#allocation9], 0
    %27 = vsyncpa [#allocation12], 0
    %28 = vsyncpa [#allocation15], 0
    %29 = vsyncpa [#allocation4], 0
    // Predicated region
    $region2: #{tpu_custom_call.1} parent=1 // pred_check
      _
    $region3: #{tpu_custom_call.1} parent=1 // pred_check_branch
      %31 = sbr.rel (0) target = $region5
    $region4: #{tpu_custom_call.1} parent=1 // pred_region
      %s33 = ssub.s32 128, 128
      %34 = vsyncadd [#allocation3], %s33
      %s36 = sshll.u32 [#allocation2], 4
      %s37 = int_to_ptr.vmem [resolvable:$true] %s36
      %39 = dma.hbm_to_vmem [thread:$0]  %s0, 128, %s37, [#allocation3]
    $region5: #{tpu_custom_call.1} parent=1 // pred_fallthru
      _
    // Predicated region
    $region6: #{tpu_custom_call.1} parent=1 // pred_check
      _
    $region7: #{tpu_custom_call.1} parent=1 // pred_check_branch
      %41 = sbr.rel (0) target = $region9
    $region8: #{tpu_custom_call.1} parent=1 // pred_region
      %s43 = ssub.s32 256, 256
      %44 = vsyncadd [#allocation6], %s43
      %s45 = sshll.u32 [#allocation5], 4
      %s46 = int_to_ptr.vmem [resolvable:$true] %s45
      %51 = dma.hbm_to_vmem [thread:$0]  %s1, 256, %s46, [#allocation6], 128, 128, 8
    $region9: #{tpu_custom_call.1} parent=1 // pred_fallthru
      _
    // Predicated region
    $region10: #{tpu_custom_call.1} parent=1 // pred_check
      _
    $region11: #{tpu_custom_call.1} parent=1 // pred_check_branch
      %53 = sbr.rel (0) target = $region13
    $region12: #{tpu_custom_call.1} parent=1 // pred_region
      %s55 = ssub.s32 24576, 24576
      %56 = vsyncadd [#allocation6], %s55
      %s57 = sshll.u32 [#allocation7], 4
      %s58 = int_to_ptr.vmem [resolvable:$true] %s57
      %63 = dma.hbm_to_vmem [thread:$0]  %s2, 24576, %s58, [#allocation6], 384, 384, 24
    $region13: #{tpu_custom_call.1} parent=1 // pred_fallthru
      _
    // Predicated region
    $region14: #{tpu_custom_call.1} parent=1 // pred_check
      _
    $region15: #{tpu_custom_call.1} parent=1 // pred_check_branch
      %65 = sbr.rel (0) target = $region17
    $region16: #{tpu_custom_call.1} parent=1 // pred_region
      %s67 = ssub.s32 8192, 8192
      %68 = vsyncadd [#allocation9], %s67
      %s69 = sshll.u32 [#allocation8], 4
      %s70 = int_to_ptr.vmem [resolvable:$true] %s69
      %75 = dma.hbm_to_vmem [thread:$0]  %s3, 8192, %s70, [#allocation9], 128, 128, 8
    $region17: #{tpu_custom_call.1} parent=1 // pred_fallthru
      _
    // Predicated region
    $region18: #{tpu_custom_call.1} parent=1 // pred_check
      _
    $region19: #{tpu_custom_call.1} parent=1 // pred_check_branch
      %77 = sbr.rel (0) target = $region21
    $region20: #{tpu_custom_call.1} parent=1 // pred_region
      _
    $region21: #{tpu_custom_call.1} parent=1 // pred_fallthru
      _
    // Predicated region
    $region22: #{tpu_custom_call.1} parent=1 // pred_check
      _
    $region23: #{tpu_custom_call.1} parent=1 // pred_check_branch
      %79 = sbr.rel (0) target = $region25
    $region24: #{tpu_custom_call.1} parent=1 // pred_region
      _
    $region25: #{tpu_custom_call.1} parent=1 // pred_fallthru
      _
    // Predicated region
    $region26: #{tpu_custom_call.1} parent=1 // pred_check
      _
    $region27: #{tpu_custom_call.1} parent=1 // pred_check_branch
      %81 = sbr.rel (0) target = $region29
    $region28: #{tpu_custom_call.1} parent=1 // pred_region
      _
    $region29: #{tpu_custom_call.1} parent=1 // pred_fallthru
      _
    // Predicated region
    $region30: #{tpu_custom_call.1} parent=1 // pred_check
      _
    $region31: #{tpu_custom_call.1} parent=1 // pred_check_branch
      %83 = sbr.rel (0) target = $region33
    $region32: #{tpu_custom_call.1} parent=1 // pred_region
      %s85 = ssub.s32 8192, 8192
      %86 = vsyncadd [#allocation9], %s85
      %s87 = sshll.u32 [#allocation10], 4
      %s88 = int_to_ptr.vmem [resolvable:$true] %s87
      %93 = dma.hbm_to_vmem [thread:$0]  %s7, 8192, %s88, [#allocation9], 128, 128, 8
    $region33: #{tpu_custom_call.1} parent=1 // pred_fallthru
      _
    // Predicated region
    $region34: #{tpu_custom_call.1} parent=1 // pred_check
      _
    $region35: #{tpu_custom_call.1} parent=1 // pred_check_branch
      %95 = sbr.rel (0) target = $region37
    $region36: #{tpu_custom_call.1} parent=1 // pred_region
      %s97 = ssub.s32 16384, 16384
      %98 = vsyncadd [#allocation12], %s97
      %s99 = sshll.u32 [#allocation11], 4
      %s100 = int_to_ptr.vmem [resolvable:$true] %s99
      %105 = dma.hbm_to_vmem [thread:$0]  %s8, 16384, %s100, [#allocation12], 256, 256, 16
    $region37: #{tpu_custom_call.1} parent=1 // pred_fallthru
      _
    // Predicated region
    $region38: #{tpu_custom_call.1} parent=1 // pred_check
      _
    $region39: #{tpu_custom_call.1} parent=1 // pred_check_branch
      %107 = sbr.rel (0) target = $region41
    $region40: #{tpu_custom_call.1} parent=1 // pred_region
      %s109 = ssub.s32 8192, 8192
      %110 = vsyncadd [#allocation12], %s109
      %s111 = sshll.u32 [#allocation13], 4
      %s112 = int_to_ptr.vmem [resolvable:$true] %s111
      %117 = dma.hbm_to_vmem [thread:$0]  %s9, 8192, %s112, [#allocation12], 128, 128, 8
    $region41: #{tpu_custom_call.1} parent=1 // pred_fallthru
      _
    // Predicated region
    $region42: #{tpu_custom_call.1} parent=1 // pred_check
      _
    $region43: #{tpu_custom_call.1} parent=1 // pred_check_branch
      %119 = sbr.rel (0) target = $region45
    $region44: #{tpu_custom_call.1} parent=1 // pred_region
      _
    $region45: #{tpu_custom_call.1} parent=1 // pred_fallthru
      _
    // Predicated region
    $region46: #{tpu_custom_call.1} parent=1 // pred_check
      _
    $region47: #{tpu_custom_call.1} parent=1 // pred_check_branch
      %121 = sbr.rel (0) target = $region49
    $region48: #{tpu_custom_call.1} parent=1 // pred_region
      _
    $region49: #{tpu_custom_call.1} parent=1 // pred_fallthru
      _
    // Predicated region
    $region50: #{tpu_custom_call.1} parent=1 // pred_check
      _
    $region51: #{tpu_custom_call.1} parent=1 // pred_check_branch
      %123 = sbr.rel (0) target = $region53
    $region52: #{tpu_custom_call.1} parent=1 // pred_region
      _
    $region53: #{tpu_custom_call.1} parent=1 // pred_fallthru
      _
    // Predicated region
    $region54: #{tpu_custom_call.1} parent=1 // pred_check
      _
    $region55: #{tpu_custom_call.1} parent=1 // pred_check_branch
      %125 = sbr.rel (0) target = $region57
    $region56: #{tpu_custom_call.1} parent=1 // pred_region
      %s127 = ssub.s32 2048, 2048
      %128 = vsyncadd [#allocation15], %s127
      %s129 = sshll.u32 [#allocation14], 4
      %s130 = int_to_ptr.vmem [resolvable:$true] %s129
      %135 = dma.hbm_to_vmem [thread:$0]  %s13, 2048, %s130, [#allocation15], 128, 128, 8
    $region57: #{tpu_custom_call.1} parent=1 // pred_fallthru
      _
    // Predicated region
    $region58: #{tpu_custom_call.1} parent=1 // pred_check
      _
    $region59: #{tpu_custom_call.1} parent=1 // pred_check_branch
      %137 = sbr.rel (0) target = $region61
    $region60: #{tpu_custom_call.1} parent=1 // pred_region
      _
    $region61: #{tpu_custom_call.1} parent=1 // pred_fallthru
      _
    // Predicated region
    $region62: #{tpu_custom_call.1} parent=1 // pred_check
      _
    $region63: #{tpu_custom_call.1} parent=1 // pred_check_branch
      %139 = sbr.rel (0) target = $region65
    $region64: #{tpu_custom_call.1} parent=1 // pred_region
      %s141 = ssub.s32 2048, 2048
      %142 = vsyncadd [#allocation15], %s141
      %s143 = sshll.u32 [#allocation16], 4
      %s144 = int_to_ptr.vmem [resolvable:$true] %s143
      %149 = dma.hbm_to_vmem [thread:$0]  %s15, 2048, %s144, [#allocation15], 128, 128, 8
    $region65: #{tpu_custom_call.1} parent=1 // pred_fallthru
      _
    // Predicated region
    $region66: #{tpu_custom_call.1} parent=1 // pred_check
      _
    $region67: #{tpu_custom_call.1} parent=1 // pred_check_branch
      %151 = sbr.rel (0) target = $region69
    $region68: #{tpu_custom_call.1} parent=1 // pred_region
      _
    $region69: #{tpu_custom_call.1} parent=1 // pred_fallthru
      _
    // Predicated region
    $region70: #{tpu_custom_call.1} parent=1 // pred_check
      _
    $region71: #{tpu_custom_call.1} parent=1 // pred_check_branch
      %153 = sbr.rel (0) target = $region73
    $region72: #{tpu_custom_call.1} parent=1 // pred_region
      _
    $region73: #{tpu_custom_call.1} parent=1 // pred_fallthru
      _
    // Predicated region
    $region74: #{tpu_custom_call.1} parent=1 // pred_check
      _
    $region75: #{tpu_custom_call.1} parent=1 // pred_check_branch
      %155 = sbr.rel (0) target = $region77
    $region76: #{tpu_custom_call.1} parent=1 // pred_region
      _
    $region77: #{tpu_custom_call.1} parent=1 // pred_fallthru
      _
    // Predicated region
    $region78: #{tpu_custom_call.1} parent=1 // pred_check
      _
    $region79: #{tpu_custom_call.1} parent=1 // pred_check_branch
      %157 = sbr.rel (0) target = $region81
    $region80: #{tpu_custom_call.1} parent=1 // pred_region
      %158 = dma.done [#allocation3], 128
    $region81: #{tpu_custom_call.1} parent=1 // pred_fallthru
      _
    // Predicated region
    $region82: #{tpu_custom_call.1} parent=1 // pred_check
      _
    $region83: #{tpu_custom_call.1} parent=1 // pred_check_branch
      %160 = sbr.rel (0) target = $region85
    $region84: #{tpu_custom_call.1} parent=1 // pred_region
      %161 = dma.done [#allocation6], 256
    $region85: #{tpu_custom_call.1} parent=1 // pred_fallthru
      _
    // Predicated region
    $region86: #{tpu_custom_call.1} parent=1 // pred_check
      _
    $region87: #{tpu_custom_call.1} parent=1 // pred_check_branch
      %163 = sbr.rel (0) target = $region89
    $region88: #{tpu_custom_call.1} parent=1 // pred_region
      %164 = dma.done [#allocation6], 24576
    $region89: #{tpu_custom_call.1} parent=1 // pred_fallthru
      _
    // Predicated region
    $region90: #{tpu_custom_call.1} parent=1 // pred_check
      _
    $region91: #{tpu_custom_call.1} parent=1 // pred_check_branch
      %166 = sbr.rel (0) target = $region93
    $region92: #{tpu_custom_call.1} parent=1 // pred_region
      %167 = dma.done [#allocation9], 8192
    $region93: #{tpu_custom_call.1} parent=1 // pred_fallthru
      _
    // Predicated region
    $region94: #{tpu_custom_call.1} parent=1 // pred_check
      _
    $region95: #{tpu_custom_call.1} parent=1 // pred_check_branch
      %169 = sbr.rel (0) target = $region97
    $region96: #{tpu_custom_call.1} parent=1 // pred_region
      %170 = dma.done [#allocation9], 8192
    $region97: #{tpu_custom_call.1} parent=1 // pred_fallthru
      _
    // Predicated region
    $region98: #{tpu_custom_call.1} parent=1 // pred_check
      _
    $region99: #{tpu_custom_call.1} parent=1 // pred_check_branch
      %172 = sbr.rel (0) target = $region101
    $region100: #{tpu_custom_call.1} parent=1 // pred_region
      %173 = dma.done [#allocation12], 16384
    $region101: #{tpu_custom_call.1} parent=1 // pred_fallthru
      _
    // Predicated region
    $region102: #{tpu_custom_call.1} parent=1 // pred_check
      _
    $region103: #{tpu_custom_call.1} parent=1 // pred_check_branch
      %175 = sbr.rel (0) target = $region105
    $region104: #{tpu_custom_call.1} parent=1 // pred_region
      %176 = dma.done [#allocation12], 8192
    $region105: #{tpu_custom_call.1} parent=1 // pred_fallthru
      _
    // Predicated region
    $region106: #{tpu_custom_call.1} parent=1 // pred_check
      _
    $region107: #{tpu_custom_call.1} parent=1 // pred_check_branch
      %178 = sbr.rel (0) target = $region109
    $region108: #{tpu_custom_call.1} parent=1 // pred_region
      %179 = dma.done [#allocation15], 2048
    $region109: #{tpu_custom_call.1} parent=1 // pred_fallthru
      _
    // Predicated region
    $region110: #{tpu_custom_call.1} parent=1 // pred_check
      _
    $region111: #{tpu_custom_call.1} parent=1 // pred_check_branch
      %181 = sbr.rel (0) target = $region113
    $region112: #{tpu_custom_call.1} parent=1 // pred_region
      %182 = dma.done [#allocation15], 2048
    $region113: #{tpu_custom_call.1} parent=1 // pred_fallthru
      _
    %v183 = vld [vmem:[#allocation7] sm:$0xff]
    %v184 = vld [vmem:[#allocation7 + $0x8] sm:$0xff]
    %v185 = vld [vmem:[#allocation7 + $0x10] sm:$0xff]
    %v186 = vld [vmem:[#allocation7 + $0x18] sm:$0xff]
    %v187 = vld [vmem:[#allocation7 + $0x20] sm:$0xff]
    %v188 = vld [vmem:[#allocation7 + $0x28] sm:$0xff]
    %v189 = vld [vmem:[#allocation7 + $0x30] sm:$0xff]
    %v190 = vld [vmem:[#allocation7 + $0x38] sm:$0xff]
    %v191 = vld [vmem:[#allocation7 + $0x40] sm:$0xff]
    %v192 = vld [vmem:[#allocation7 + $0x48] sm:$0xff]
    %v193 = vld [vmem:[#allocation7 + $0x50] sm:$0xff]
    %v194 = vld [vmem:[#allocation7 + $0x58] sm:$0xff]
    %v195 = vld [vmem:[#allocation7 + $0x60] sm:$0xff]
    %v196 = vld [vmem:[#allocation7 + $0x68] sm:$0xff]
    %v197 = vld [vmem:[#allocation7 + $0x70] sm:$0xff]
    %v198 = vld [vmem:[#allocation7 + $0x78] sm:$0xff]
    %v199 = vld [vmem:[#allocation7 + $0x80] sm:$0xff]
    %v200 = vld [vmem:[#allocation7 + $0x88] sm:$0xff]
    %v201 = vld [vmem:[#allocation7 + $0x90] sm:$0xff]
    %v202 = vld [vmem:[#allocation7 + $0x98] sm:$0xff]
    %v203 = vld [vmem:[#allocation7 + $0xa0] sm:$0xff]
    %v204 = vld [vmem:[#allocation7 + $0xa8] sm:$0xff]
    %v205 = vld [vmem:[#allocation7 + $0xb0] sm:$0xff]
    %v206 = vld [vmem:[#allocation7 + $0xb8] sm:$0xff]
    %v207 = vld [vmem:[#allocation7 + $0xc0] sm:$0xff]
    %v208 = vld [vmem:[#allocation7 + $0xc8] sm:$0xff]
    %v209 = vld [vmem:[#allocation7 + $0xd0] sm:$0xff]
    %v210 = vld [vmem:[#allocation7 + $0xd8] sm:$0xff]
    %v211 = vld [vmem:[#allocation7 + $0xe0] sm:$0xff]
    %v212 = vld [vmem:[#allocation7 + $0xe8] sm:$0xff]
    %v213 = vld [vmem:[#allocation7 + $0xf0] sm:$0xff]
    %v214 = vld [vmem:[#allocation7 + $0xf8] sm:$0xff]
    %v215 = vld [vmem:[#allocation7 + $0x100] sm:$0xff]
    %v216 = vld [vmem:[#allocation7 + $0x108] sm:$0xff]
    %v217 = vld [vmem:[#allocation7 + $0x110] sm:$0xff]
    %v218 = vld [vmem:[#allocation7 + $0x118] sm:$0xff]
    %v219 = vld [vmem:[#allocation7 + $0x120] sm:$0xff]
    %v220 = vld [vmem:[#allocation7 + $0x128] sm:$0xff]
    %v221 = vld [vmem:[#allocation7 + $0x130] sm:$0xff]
    %v222 = vld [vmem:[#allocation7 + $0x138] sm:$0xff]
    %v223 = vld [vmem:[#allocation7 + $0x140] sm:$0xff]
    %v224 = vld [vmem:[#allocation7 + $0x148] sm:$0xff]
    %v225 = vld [vmem:[#allocation7 + $0x150] sm:$0xff]
    %v226 = vld [vmem:[#allocation7 + $0x158] sm:$0xff]
    %v227 = vld [vmem:[#allocation7 + $0x160] sm:$0xff]
    %v228 = vld [vmem:[#allocation7 + $0x168] sm:$0xff]
    %v229 = vld [vmem:[#allocation7 + $0x170] sm:$0xff]
    %v230 = vld [vmem:[#allocation7 + $0x178] sm:$0xff]
    %v231 = vld [vmem:[#allocation7 + $0x180] sm:$0xff]
    %v232 = vld [vmem:[#allocation7 + $0x188] sm:$0xff]
    %v233 = vld [vmem:[#allocation7 + $0x190] sm:$0xff]
    %v234 = vld [vmem:[#allocation7 + $0x198] sm:$0xff]
    %v235 = vld [vmem:[#allocation7 + $0x1a0] sm:$0xff]
    %v236 = vld [vmem:[#allocation7 + $0x1a8] sm:$0xff]
    %v237 = vld [vmem:[#allocation7 + $0x1b0] sm:$0xff]
    %v238 = vld [vmem:[#allocation7 + $0x1b8] sm:$0xff]
    %v239 = vld [vmem:[#allocation7 + $0x1c0] sm:$0xff]
    %v240 = vld [vmem:[#allocation7 + $0x1c8] sm:$0xff]
    %v241 = vld [vmem:[#allocation7 + $0x1d0] sm:$0xff]
    %v242 = vld [vmem:[#allocation7 + $0x1d8] sm:$0xff]
    %v243 = vld [vmem:[#allocation7 + $0x1e0] sm:$0xff]
    %v244 = vld [vmem:[#allocation7 + $0x1e8] sm:$0xff]
    %v245 = vld [vmem:[#allocation7 + $0x1f0] sm:$0xff]
    %v246 = vld [vmem:[#allocation7 + $0x1f8] sm:$0xff]
    %v247 = vld [vmem:[#allocation7 + $0x200] sm:$0xff]
    %v248 = vld [vmem:[#allocation7 + $0x208] sm:$0xff]
    %v249 = vld [vmem:[#allocation7 + $0x210] sm:$0xff]
    %v250 = vld [vmem:[#allocation7 + $0x218] sm:$0xff]
    %v251 = vld [vmem:[#allocation7 + $0x220] sm:$0xff]
    %v252 = vld [vmem:[#allocation7 + $0x228] sm:$0xff]
    %v253 = vld [vmem:[#allocation7 + $0x230] sm:$0xff]
    %v254 = vld [vmem:[#allocation7 + $0x238] sm:$0xff]
    %v255 = vld [vmem:[#allocation7 + $0x240] sm:$0xff]
    %v256 = vld [vmem:[#allocation7 + $0x248] sm:$0xff]
    %v257 = vld [vmem:[#allocation7 + $0x250] sm:$0xff]
    %v258 = vld [vmem:[#allocation7 + $0x258] sm:$0xff]
    %v259 = vld [vmem:[#allocation7 + $0x260] sm:$0xff]
    %v260 = vld [vmem:[#allocation7 + $0x268] sm:$0xff]
    %v261 = vld [vmem:[#allocation7 + $0x270] sm:$0xff]
    %v262 = vld [vmem:[#allocation7 + $0x278] sm:$0xff]
    %v263 = vld [vmem:[#allocation7 + $0x280] sm:$0xff]
    %v264 = vld [vmem:[#allocation7 + $0x288] sm:$0xff]
    %v265 = vld [vmem:[#allocation7 + $0x290] sm:$0xff]
    %v266 = vld [vmem:[#allocation7 + $0x298] sm:$0xff]
    %v267 = vld [vmem:[#allocation7 + $0x2a0] sm:$0xff]
    %v268 = vld [vmem:[#allocation7 + $0x2a8] sm:$0xff]
    %v269 = vld [vmem:[#allocation7 + $0x2b0] sm:$0xff]
    %v270 = vld [vmem:[#allocation7 + $0x2b8] sm:$0xff]
    %v271 = vld [vmem:[#allocation7 + $0x2c0] sm:$0xff]
    %v272 = vld [vmem:[#allocation7 + $0x2c8] sm:$0xff]
    %v273 = vld [vmem:[#allocation7 + $0x2d0] sm:$0xff]
    %v274 = vld [vmem:[#allocation7 + $0x2d8] sm:$0xff]
    %v275 = vld [vmem:[#allocation7 + $0x2e0] sm:$0xff]
    %v276 = vld [vmem:[#allocation7 + $0x2e8] sm:$0xff]
    %v277 = vld [vmem:[#allocation7 + $0x2f0] sm:$0xff]
    %v278 = vld [vmem:[#allocation7 + $0x2f8] sm:$0xff]
    %v279 = vld [vmem:[#allocation7 + $0x300] sm:$0xff]
    %v280 = vld [vmem:[#allocation7 + $0x308] sm:$0xff]
    %v281 = vld [vmem:[#allocation7 + $0x310] sm:$0xff]
    %v282 = vld [vmem:[#allocation7 + $0x318] sm:$0xff]
    %v283 = vld [vmem:[#allocation7 + $0x320] sm:$0xff]
    %v284 = vld [vmem:[#allocation7 + $0x328] sm:$0xff]
    %v285 = vld [vmem:[#allocation7 + $0x330] sm:$0xff]
    %v286 = vld [vmem:[#allocation7 + $0x338] sm:$0xff]
    %v287 = vld [vmem:[#allocation7 + $0x340] sm:$0xff]
    %v288 = vld [vmem:[#allocation7 + $0x348] sm:$0xff]
    %v289 = vld [vmem:[#allocation7 + $0x350] sm:$0xff]
    %v290 = vld [vmem:[#allocation7 + $0x358] sm:$0xff]
    %v291 = vld [vmem:[#allocation7 + $0x360] sm:$0xff]
    %v292 = vld [vmem:[#allocation7 + $0x368] sm:$0xff]
    %v293 = vld [vmem:[#allocation7 + $0x370] sm:$0xff]
    %v294 = vld [vmem:[#allocation7 + $0x378] sm:$0xff]
    %v295 = vld [vmem:[#allocation7 + $0x380] sm:$0xff]
    %v296 = vld [vmem:[#allocation7 + $0x388] sm:$0xff]
    %v297 = vld [vmem:[#allocation7 + $0x390] sm:$0xff]
    %v298 = vld [vmem:[#allocation7 + $0x398] sm:$0xff]
    %v299 = vld [vmem:[#allocation7 + $0x3a0] sm:$0xff]
    %v300 = vld [vmem:[#allocation7 + $0x3a8] sm:$0xff]
    %v301 = vld [vmem:[#allocation7 + $0x3b0] sm:$0xff]
    %v302 = vld [vmem:[#allocation7 + $0x3b8] sm:$0xff]
    %v303 = vld [vmem:[#allocation7 + $0x3c0] sm:$0xff]
    %v304 = vld [vmem:[#allocation7 + $0x3c8] sm:$0xff]
    %v305 = vld [vmem:[#allocation7 + $0x3d0] sm:$0xff]
    %v306 = vld [vmem:[#allocation7 + $0x3d8] sm:$0xff]
    %v307 = vld [vmem:[#allocation7 + $0x3e0] sm:$0xff]
    %v308 = vld [vmem:[#allocation7 + $0x3e8] sm:$0xff]
    %v309 = vld [vmem:[#allocation7 + $0x3f0] sm:$0xff]
    %v310 = vld [vmem:[#allocation7 + $0x3f8] sm:$0xff]
    %v311 = vld [vmem:[#allocation7 + $0x400] sm:$0xff]
    %v312 = vld [vmem:[#allocation7 + $0x408] sm:$0xff]
    %v313 = vld [vmem:[#allocation7 + $0x410] sm:$0xff]
    %v314 = vld [vmem:[#allocation7 + $0x418] sm:$0xff]
    %v315 = vld [vmem:[#allocation7 + $0x420] sm:$0xff]
    %v316 = vld [vmem:[#allocation7 + $0x428] sm:$0xff]
    %v317 = vld [vmem:[#allocation7 + $0x430] sm:$0xff]
    %v318 = vld [vmem:[#allocation7 + $0x438] sm:$0xff]
    %v319 = vld [vmem:[#allocation7 + $0x440] sm:$0xff]
    %v320 = vld [vmem:[#allocation7 + $0x448] sm:$0xff]
    %v321 = vld [vmem:[#allocation7 + $0x450] sm:$0xff]
    %v322 = vld [vmem:[#allocation7 + $0x458] sm:$0xff]
    %v323 = vld [vmem:[#allocation7 + $0x460] sm:$0xff]
    %v324 = vld [vmem:[#allocation7 + $0x468] sm:$0xff]
    %v325 = vld [vmem:[#allocation7 + $0x470] sm:$0xff]
    %v326 = vld [vmem:[#allocation7 + $0x478] sm:$0xff]
    %v327 = vld [vmem:[#allocation7 + $0x480] sm:$0xff]
    %v328 = vld [vmem:[#allocation7 + $0x488] sm:$0xff]
    %v329 = vld [vmem:[#allocation7 + $0x490] sm:$0xff]
    %v330 = vld [vmem:[#allocation7 + $0x498] sm:$0xff]
    %v331 = vld [vmem:[#allocation7 + $0x4a0] sm:$0xff]
    %v332 = vld [vmem:[#allocation7 + $0x4a8] sm:$0xff]
    %v333 = vld [vmem:[#allocation7 + $0x4b0] sm:$0xff]
    %v334 = vld [vmem:[#allocation7 + $0x4b8] sm:$0xff]
    %v335 = vld [vmem:[#allocation7 + $0x4c0] sm:$0xff]
    %v336 = vld [vmem:[#allocation7 + $0x4c8] sm:$0xff]
    %v337 = vld [vmem:[#allocation7 + $0x4d0] sm:$0xff]
    %v338 = vld [vmem:[#allocation7 + $0x4d8] sm:$0xff]
    %v339 = vld [vmem:[#allocation7 + $0x4e0] sm:$0xff]
    %v340 = vld [vmem:[#allocation7 + $0x4e8] sm:$0xff]
    %v341 = vld [vmem:[#allocation7 + $0x4f0] sm:$0xff]
    %v342 = vld [vmem:[#allocation7 + $0x4f8] sm:$0xff]
    %v343 = vld [vmem:[#allocation7 + $0x500] sm:$0xff]
    %v344 = vld [vmem:[#allocation7 + $0x508] sm:$0xff]
    %v345 = vld [vmem:[#allocation7 + $0x510] sm:$0xff]
    %v346 = vld [vmem:[#allocation7 + $0x518] sm:$0xff]
    %v347 = vld [vmem:[#allocation7 + $0x520] sm:$0xff]
    %v348 = vld [vmem:[#allocation7 + $0x528] sm:$0xff]
    %v349 = vld [vmem:[#allocation7 + $0x530] sm:$0xff]
    %v350 = vld [vmem:[#allocation7 + $0x538] sm:$0xff]
    %v351 = vld [vmem:[#allocation7 + $0x540] sm:$0xff]
    %v352 = vld [vmem:[#allocation7 + $0x548] sm:$0xff]
    %v353 = vld [vmem:[#allocation7 + $0x550] sm:$0xff]
    %v354 = vld [vmem:[#allocation7 + $0x558] sm:$0xff]
    %v355 = vld [vmem:[#allocation7 + $0x560] sm:$0xff]
    %v356 = vld [vmem:[#allocation7 + $0x568] sm:$0xff]
    %v357 = vld [vmem:[#allocation7 + $0x570] sm:$0xff]
    %v358 = vld [vmem:[#allocation7 + $0x578] sm:$0xff]
    %v359 = vld [vmem:[#allocation7 + $0x580] sm:$0xff]
    %v360 = vld [vmem:[#allocation7 + $0x588] sm:$0xff]
    %v361 = vld [vmem:[#allocation7 + $0x590] sm:$0xff]
    %v362 = vld [vmem:[#allocation7 + $0x598] sm:$0xff]
    %v363 = vld [vmem:[#allocation7 + $0x5a0] sm:$0xff]
    %v364 = vld [vmem:[#allocation7 + $0x5a8] sm:$0xff]
    %v365 = vld [vmem:[#allocation7 + $0x5b0] sm:$0xff]
    %v366 = vld [vmem:[#allocation7 + $0x5b8] sm:$0xff]
    %v367 = vld [vmem:[#allocation7 + $0x5c0] sm:$0xff]
    %v368 = vld [vmem:[#allocation7 + $0x5c8] sm:$0xff]
    %v369 = vld [vmem:[#allocation7 + $0x5d0] sm:$0xff]
    %v370 = vld [vmem:[#allocation7 + $0x5d8] sm:$0xff]
    %v371 = vld [vmem:[#allocation7 + $0x5e0] sm:$0xff]
    %v372 = vld [vmem:[#allocation7 + $0x5e8] sm:$0xff]
    %v373 = vld [vmem:[#allocation7 + $0x5f0] sm:$0xff]
    %v374 = vld [vmem:[#allocation7 + $0x5f8] sm:$0xff]
    %v375 = vld [vmem:[#allocation8] sm:$0xff]
    %v376 = vld [vmem:[#allocation8 + $0x8] sm:$0xff]
    %v377 = vld [vmem:[#allocation8 + $0x10] sm:$0xff]
    %v378 = vld [vmem:[#allocation8 + $0x18] sm:$0xff]
    %v379 = vld [vmem:[#allocation8 + $0x20] sm:$0xff]
    %v380 = vld [vmem:[#allocation8 + $0x28] sm:$0xff]
    %v381 = vld [vmem:[#allocation8 + $0x30] sm:$0xff]
    %v382 = vld [vmem:[#allocation8 + $0x38] sm:$0xff]
    %v383 = vld [vmem:[#allocation8 + $0x40] sm:$0xff]
    %v384 = vld [vmem:[#allocation8 + $0x48] sm:$0xff]
    %v385 = vld [vmem:[#allocation8 + $0x50] sm:$0xff]
    %v386 = vld [vmem:[#allocation8 + $0x58] sm:$0xff]
    %v387 = vld [vmem:[#allocation8 + $0x60] sm:$0xff]
    %v388 = vld [vmem:[#allocation8 + $0x68] sm:$0xff]
    %v389 = vld [vmem:[#allocation8 + $0x70] sm:$0xff]
    %v390 = vld [vmem:[#allocation8 + $0x78] sm:$0xff]
    %v391 = vld [vmem:[#allocation8 + $0x80] sm:$0xff]
    %v392 = vld [vmem:[#allocation8 + $0x88] sm:$0xff]
    %v393 = vld [vmem:[#allocation8 + $0x90] sm:$0xff]
    %v394 = vld [vmem:[#allocation8 + $0x98] sm:$0xff]
    %v395 = vld [vmem:[#allocation8 + $0xa0] sm:$0xff]
    %v396 = vld [vmem:[#allocation8 + $0xa8] sm:$0xff]
    %v397 = vld [vmem:[#allocation8 + $0xb0] sm:$0xff]
    %v398 = vld [vmem:[#allocation8 + $0xb8] sm:$0xff]
    %v399 = vld [vmem:[#allocation8 + $0xc0] sm:$0xff]
    %v400 = vld [vmem:[#allocation8 + $0xc8] sm:$0xff]
    %v401 = vld [vmem:[#allocation8 + $0xd0] sm:$0xff]
    %v402 = vld [vmem:[#allocation8 + $0xd8] sm:$0xff]
    %v403 = vld [vmem:[#allocation8 + $0xe0] sm:$0xff]
    %v404 = vld [vmem:[#allocation8 + $0xe8] sm:$0xff]
    %v405 = vld [vmem:[#allocation8 + $0xf0] sm:$0xff]
    %v406 = vld [vmem:[#allocation8 + $0xf8] sm:$0xff]
    %v407 = vld [vmem:[#allocation8 + $0x100] sm:$0xff]
    %v408 = vld [vmem:[#allocation8 + $0x108] sm:$0xff]
    %v409 = vld [vmem:[#allocation8 + $0x110] sm:$0xff]
    %v410 = vld [vmem:[#allocation8 + $0x118] sm:$0xff]
    %v411 = vld [vmem:[#allocation8 + $0x120] sm:$0xff]
    %v412 = vld [vmem:[#allocation8 + $0x128] sm:$0xff]
    %v413 = vld [vmem:[#allocation8 + $0x130] sm:$0xff]
    %v414 = vld [vmem:[#allocation8 + $0x138] sm:$0xff]
    %v415 = vld [vmem:[#allocation8 + $0x140] sm:$0xff]
    %v416 = vld [vmem:[#allocation8 + $0x148] sm:$0xff]
    %v417 = vld [vmem:[#allocation8 + $0x150] sm:$0xff]
    %v418 = vld [vmem:[#allocation8 + $0x158] sm:$0xff]
    %v419 = vld [vmem:[#allocation8 + $0x160] sm:$0xff]
    %v420 = vld [vmem:[#allocation8 + $0x168] sm:$0xff]
    %v421 = vld [vmem:[#allocation8 + $0x170] sm:$0xff]
    %v422 = vld [vmem:[#allocation8 + $0x178] sm:$0xff]
    %v423 = vld [vmem:[#allocation8 + $0x180] sm:$0xff]
    %v424 = vld [vmem:[#allocation8 + $0x188] sm:$0xff]
    %v425 = vld [vmem:[#allocation8 + $0x190] sm:$0xff]
    %v426 = vld [vmem:[#allocation8 + $0x198] sm:$0xff]
    %v427 = vld [vmem:[#allocation8 + $0x1a0] sm:$0xff]
    %v428 = vld [vmem:[#allocation8 + $0x1a8] sm:$0xff]
    %v429 = vld [vmem:[#allocation8 + $0x1b0] sm:$0xff]
    %v430 = vld [vmem:[#allocation8 + $0x1b8] sm:$0xff]
    %v431 = vld [vmem:[#allocation8 + $0x1c0] sm:$0xff]
    %v432 = vld [vmem:[#allocation8 + $0x1c8] sm:$0xff]
    %v433 = vld [vmem:[#allocation8 + $0x1d0] sm:$0xff]
    %v434 = vld [vmem:[#allocation8 + $0x1d8] sm:$0xff]
    %v435 = vld [vmem:[#allocation8 + $0x1e0] sm:$0xff]
    %v436 = vld [vmem:[#allocation8 + $0x1e8] sm:$0xff]
    %v437 = vld [vmem:[#allocation8 + $0x1f0] sm:$0xff]
    %v438 = vld [vmem:[#allocation8 + $0x1f8] sm:$0xff]
    %v439 = vld [vmem:[%s4] sm:$0x1]
    %v440 = vld [vmem:[%s5] sm:$0x1]
    %v441 = vld [vmem:[%s6] sm:$0x1]
    %v442 = vld [vmem:[#allocation10] sm:$0xff]
    %v443 = vld [vmem:[#allocation10 + $0x8] sm:$0xff]
    %v444 = vld [vmem:[#allocation10 + $0x10] sm:$0xff]
    %v445 = vld [vmem:[#allocation10 + $0x18] sm:$0xff]
    %v446 = vld [vmem:[#allocation10 + $0x20] sm:$0xff]
    %v447 = vld [vmem:[#allocation10 + $0x28] sm:$0xff]
    %v448 = vld [vmem:[#allocation10 + $0x30] sm:$0xff]
    %v449 = vld [vmem:[#allocation10 + $0x38] sm:$0xff]
    %v450 = vld [vmem:[#allocation10 + $0x40] sm:$0xff]
    %v451 = vld [vmem:[#allocation10 + $0x48] sm:$0xff]
    %v452 = vld [vmem:[#allocation10 + $0x50] sm:$0xff]
    %v453 = vld [vmem:[#allocation10 + $0x58] sm:$0xff]
    %v454 = vld [vmem:[#allocation10 + $0x60] sm:$0xff]
    %v455 = vld [vmem:[#allocation10 + $0x68] sm:$0xff]
    %v456 = vld [vmem:[#allocation10 + $0x70] sm:$0xff]
    %v457 = vld [vmem:[#allocation10 + $0x78] sm:$0xff]
    %v458 = vld [vmem:[#allocation10 + $0x80] sm:$0xff]
    %v459 = vld [vmem:[#allocation10 + $0x88] sm:$0xff]
    %v460 = vld [vmem:[#allocation10 + $0x90] sm:$0xff]
    %v461 = vld [vmem:[#allocation10 + $0x98] sm:$0xff]
    %v462 = vld [vmem:[#allocation10 + $0xa0] sm:$0xff]
    %v463 = vld [vmem:[#allocation10 + $0xa8] sm:$0xff]
    %v464 = vld [vmem:[#allocation10 + $0xb0] sm:$0xff]
    %v465 = vld [vmem:[#allocation10 + $0xb8] sm:$0xff]
    %v466 = vld [vmem:[#allocation10 + $0xc0] sm:$0xff]
    %v467 = vld [vmem:[#allocation10 + $0xc8] sm:$0xff]
    %v468 = vld [vmem:[#allocation10 + $0xd0] sm:$0xff]
    %v469 = vld [vmem:[#allocation10 + $0xd8] sm:$0xff]
    %v470 = vld [vmem:[#allocation10 + $0xe0] sm:$0xff]
    %v471 = vld [vmem:[#allocation10 + $0xe8] sm:$0xff]
    %v472 = vld [vmem:[#allocation10 + $0xf0] sm:$0xff]
    %v473 = vld [vmem:[#allocation10 + $0xf8] sm:$0xff]
    %v474 = vld [vmem:[#allocation10 + $0x100] sm:$0xff]
    %v475 = vld [vmem:[#allocation10 + $0x108] sm:$0xff]
    %v476 = vld [vmem:[#allocation10 + $0x110] sm:$0xff]
    %v477 = vld [vmem:[#allocation10 + $0x118] sm:$0xff]
    %v478 = vld [vmem:[#allocation10 + $0x120] sm:$0xff]
    %v479 = vld [vmem:[#allocation10 + $0x128] sm:$0xff]
    %v480 = vld [vmem:[#allocation10 + $0x130] sm:$0xff]
    %v481 = vld [vmem:[#allocation10 + $0x138] sm:$0xff]
    %v482 = vld [vmem:[#allocation10 + $0x140] sm:$0xff]
    %v483 = vld [vmem:[#allocation10 + $0x148] sm:$0xff]
    %v484 = vld [vmem:[#allocation10 + $0x150] sm:$0xff]
    %v485 = vld [vmem:[#allocation10 + $0x158] sm:$0xff]
    %v486 = vld [vmem:[#allocation10 + $0x160] sm:$0xff]
    %v487 = vld [vmem:[#allocation10 + $0x168] sm:$0xff]
    %v488 = vld [vmem:[#allocation10 + $0x170] sm:$0xff]
    %v489 = vld [vmem:[#allocation10 + $0x178] sm:$0xff]
    %v490 = vld [vmem:[#allocation10 + $0x180] sm:$0xff]
    %v491 = vld [vmem:[#allocation10 + $0x188] sm:$0xff]
    %v492 = vld [vmem:[#allocation10 + $0x190] sm:$0xff]
    %v493 = vld [vmem:[#allocation10 + $0x198] sm:$0xff]
    %v494 = vld [vmem:[#allocation10 + $0x1a0] sm:$0xff]
    %v495 = vld [vmem:[#allocation10 + $0x1a8] sm:$0xff]
    %v496 = vld [vmem:[#allocation10 + $0x1b0] sm:$0xff]
    %v497 = vld [vmem:[#allocation10 + $0x1b8] sm:$0xff]
    %v498 = vld [vmem:[#allocation10 + $0x1c0] sm:$0xff]
    %v499 = vld [vmem:[#allocation10 + $0x1c8] sm:$0xff]
    %v500 = vld [vmem:[#allocation10 + $0x1d0] sm:$0xff]
    %v501 = vld [vmem:[#allocation10 + $0x1d8] sm:$0xff]
    %v502 = vld [vmem:[#allocation10 + $0x1e0] sm:$0xff]
    %v503 = vld [vmem:[#allocation10 + $0x1e8] sm:$0xff]
    %v504 = vld [vmem:[#allocation10 + $0x1f0] sm:$0xff]
    %v505 = vld [vmem:[#allocation10 + $0x1f8] sm:$0xff]
    %v506 = vld [vmem:[#allocation11] sm:$0xff]
    %v507 = vld [vmem:[#allocation11 + $0x8] sm:$0xff]
    %v508 = vld [vmem:[#allocation11 + $0x10] sm:$0xff]
    %v509 = vld [vmem:[#allocation11 + $0x18] sm:$0xff]
    %v510 = vld [vmem:[#allocation11 + $0x20] sm:$0xff]
    %v511 = vld [vmem:[#allocation11 + $0x28] sm:$0xff]
    %v512 = vld [vmem:[#allocation11 + $0x30] sm:$0xff]
    %v513 = vld [vmem:[#allocation11 + $0x38] sm:$0xff]
    %v514 = vld [vmem:[#allocation11 + $0x40] sm:$0xff]
    %v515 = vld [vmem:[#allocation11 + $0x48] sm:$0xff]
    %v516 = vld [vmem:[#allocation11 + $0x50] sm:$0xff]
    %v517 = vld [vmem:[#allocation11 + $0x58] sm:$0xff]
    %v518 = vld [vmem:[#allocation11 + $0x60] sm:$0xff]
    %v519 = vld [vmem:[#allocation11 + $0x68] sm:$0xff]
    %v520 = vld [vmem:[#allocation11 + $0x70] sm:$0xff]
    %v521 = vld [vmem:[#allocation11 + $0x78] sm:$0xff]
    %v522 = vld [vmem:[#allocation11 + $0x80] sm:$0xff]
    %v523 = vld [vmem:[#allocation11 + $0x88] sm:$0xff]
    %v524 = vld [vmem:[#allocation11 + $0x90] sm:$0xff]
    %v525 = vld [vmem:[#allocation11 + $0x98] sm:$0xff]
    %v526 = vld [vmem:[#allocation11 + $0xa0] sm:$0xff]
    %v527 = vld [vmem:[#allocation11 + $0xa8] sm:$0xff]
    %v528 = vld [vmem:[#allocation11 + $0xb0] sm:$0xff]
    %v529 = vld [vmem:[#allocation11 + $0xb8] sm:$0xff]
    %v530 = vld [vmem:[#allocation11 + $0xc0] sm:$0xff]
    %v531 = vld [vmem:[#allocation11 + $0xc8] sm:$0xff]
    %v532 = vld [vmem:[#allocation11 + $0xd0] sm:$0xff]
    %v533 = vld [vmem:[#allocation11 + $0xd8] sm:$0xff]
    %v534 = vld [vmem:[#allocation11 + $0xe0] sm:$0xff]
    %v535 = vld [vmem:[#allocation11 + $0xe8] sm:$0xff]
    %v536 = vld [vmem:[#allocation11 + $0xf0] sm:$0xff]
    %v537 = vld [vmem:[#allocation11 + $0xf8] sm:$0xff]
    %v538 = vld [vmem:[#allocation11 + $0x100] sm:$0xff]
    %v539 = vld [vmem:[#allocation11 + $0x108] sm:$0xff]
    %v540 = vld [vmem:[#allocation11 + $0x110] sm:$0xff]
    %v541 = vld [vmem:[#allocation11 + $0x118] sm:$0xff]
    %v542 = vld [vmem:[#allocation11 + $0x120] sm:$0xff]
    %v543 = vld [vmem:[#allocation11 + $0x128] sm:$0xff]
    %v544 = vld [vmem:[#allocation11 + $0x130] sm:$0xff]
    %v545 = vld [vmem:[#allocation11 + $0x138] sm:$0xff]
    %v546 = vld [vmem:[#allocation11 + $0x140] sm:$0xff]
    %v547 = vld [vmem:[#allocation11 + $0x148] sm:$0xff]
    %v548 = vld [vmem:[#allocation11 + $0x150] sm:$0xff]
    %v549 = vld [vmem:[#allocation11 + $0x158] sm:$0xff]
    %v550 = vld [vmem:[#allocation11 + $0x160] sm:$0xff]
    %v551 = vld [vmem:[#allocation11 + $0x168] sm:$0xff]
    %v552 = vld [vmem:[#allocation11 + $0x170] sm:$0xff]
    %v553 = vld [vmem:[#allocation11 + $0x178] sm:$0xff]
    %v554 = vld [vmem:[#allocation11 + $0x180] sm:$0xff]
    %v555 = vld [vmem:[#allocation11 + $0x188] sm:$0xff]
    %v556 = vld [vmem:[#allocation11 + $0x190] sm:$0xff]
    %v557 = vld [vmem:[#allocation11 + $0x198] sm:$0xff]
    %v558 = vld [vmem:[#allocation11 + $0x1a0] sm:$0xff]
    %v559 = vld [vmem:[#allocation11 + $0x1a8] sm:$0xff]
    %v560 = vld [vmem:[#allocation11 + $0x1b0] sm:$0xff]
    %v561 = vld [vmem:[#allocation11 + $0x1b8] sm:$0xff]
    %v562 = vld [vmem:[#allocation11 + $0x1c0] sm:$0xff]
    %v563 = vld [vmem:[#allocation11 + $0x1c8] sm:$0xff]
    %v564 = vld [vmem:[#allocation11 + $0x1d0] sm:$0xff]
    %v565 = vld [vmem:[#allocation11 + $0x1d8] sm:$0xff]
    %v566 = vld [vmem:[#allocation11 + $0x1e0] sm:$0xff]
    %v567 = vld [vmem:[#allocation11 + $0x1e8] sm:$0xff]
    %v568 = vld [vmem:[#allocation11 + $0x1f0] sm:$0xff]
    %v569 = vld [vmem:[#allocation11 + $0x1f8] sm:$0xff]
    %v570 = vld [vmem:[#allocation11 + $0x200] sm:$0xff]
    %v571 = vld [vmem:[#allocation11 + $0x208] sm:$0xff]
    %v572 = vld [vmem:[#allocation11 + $0x210] sm:$0xff]
    %v573 = vld [vmem:[#allocation11 + $0x218] sm:$0xff]
    %v574 = vld [vmem:[#allocation11 + $0x220] sm:$0xff]
    %v575 = vld [vmem:[#allocation11 + $0x228] sm:$0xff]
    %v576 = vld [vmem:[#allocation11 + $0x230] sm:$0xff]
    %v577 = vld [vmem:[#allocation11 + $0x238] sm:$0xff]
    %v578 = vld [vmem:[#allocation11 + $0x240] sm:$0xff]
    %v579 = vld [vmem:[#allocation11 + $0x248] sm:$0xff]
    %v580 = vld [vmem:[#allocation11 + $0x250] sm:$0xff]
    %v581 = vld [vmem:[#allocation11 + $0x258] sm:$0xff]
    %v582 = vld [vmem:[#allocation11 + $0x260] sm:$0xff]
    %v583 = vld [vmem:[#allocation11 + $0x268] sm:$0xff]
    %v584 = vld [vmem:[#allocation11 + $0x270] sm:$0xff]
    %v585 = vld [vmem:[#allocation11 + $0x278] sm:$0xff]
    %v586 = vld [vmem:[#allocation11 + $0x280] sm:$0xff]
    %v587 = vld [vmem:[#allocation11 + $0x288] sm:$0xff]
    %v588 = vld [vmem:[#allocation11 + $0x290] sm:$0xff]
    %v589 = vld [vmem:[#allocation11 + $0x298] sm:$0xff]
    %v590 = vld [vmem:[#allocation11 + $0x2a0] sm:$0xff]
    %v591 = vld [vmem:[#allocation11 + $0x2a8] sm:$0xff]
    %v592 = vld [vmem:[#allocation11 + $0x2b0] sm:$0xff]
    %v593 = vld [vmem:[#allocation11 + $0x2b8] sm:$0xff]
    %v594 = vld [vmem:[#allocation11 + $0x2c0] sm:$0xff]
    %v595 = vld [vmem:[#allocation11 + $0x2c8] sm:$0xff]
    %v596 = vld [vmem:[#allocation11 + $0x2d0] sm:$0xff]
    %v597 = vld [vmem:[#allocation11 + $0x2d8] sm:$0xff]
    %v598 = vld [vmem:[#allocation11 + $0x2e0] sm:$0xff]
    %v599 = vld [vmem:[#allocation11 + $0x2e8] sm:$0xff]
    %v600 = vld [vmem:[#allocation11 + $0x2f0] sm:$0xff]
    %v601 = vld [vmem:[#allocation11 + $0x2f8] sm:$0xff]
    %v602 = vld [vmem:[#allocation11 + $0x300] sm:$0xff]
    %v603 = vld [vmem:[#allocation11 + $0x308] sm:$0xff]
    %v604 = vld [vmem:[#allocation11 + $0x310] sm:$0xff]
    %v605 = vld [vmem:[#allocation11 + $0x318] sm:$0xff]
    %v606 = vld [vmem:[#allocation11 + $0x320] sm:$0xff]
    %v607 = vld [vmem:[#allocation11 + $0x328] sm:$0xff]
    %v608 = vld [vmem:[#allocation11 + $0x330] sm:$0xff]
    %v609 = vld [vmem:[#allocation11 + $0x338] sm:$0xff]
    %v610 = vld [vmem:[#allocation11 + $0x340] sm:$0xff]
    %v611 = vld [vmem:[#allocation11 + $0x348] sm:$0xff]
    %v612 = vld [vmem:[#allocation11 + $0x350] sm:$0xff]
    %v613 = vld [vmem:[#allocation11 + $0x358] sm:$0xff]
    %v614 = vld [vmem:[#allocation11 + $0x360] sm:$0xff]
    %v615 = vld [vmem:[#allocation11 + $0x368] sm:$0xff]
    %v616 = vld [vmem:[#allocation11 + $0x370] sm:$0xff]
    %v617 = vld [vmem:[#allocation11 + $0x378] sm:$0xff]
    %v618 = vld [vmem:[#allocation11 + $0x380] sm:$0xff]
    %v619 = vld [vmem:[#allocation11 + $0x388] sm:$0xff]
    %v620 = vld [vmem:[#allocation11 + $0x390] sm:$0xff]
    %v621 = vld [vmem:[#allocation11 + $0x398] sm:$0xff]
    %v622 = vld [vmem:[#allocation11 + $0x3a0] sm:$0xff]
    %v623 = vld [vmem:[#allocation11 + $0x3a8] sm:$0xff]
    %v624 = vld [vmem:[#allocation11 + $0x3b0] sm:$0xff]
    %v625 = vld [vmem:[#allocation11 + $0x3b8] sm:$0xff]
    %v626 = vld [vmem:[#allocation11 + $0x3c0] sm:$0xff]
    %v627 = vld [vmem:[#allocation11 + $0x3c8] sm:$0xff]
    %v628 = vld [vmem:[#allocation11 + $0x3d0] sm:$0xff]
    %v629 = vld [vmem:[#allocation11 + $0x3d8] sm:$0xff]
    %v630 = vld [vmem:[#allocation11 + $0x3e0] sm:$0xff]
    %v631 = vld [vmem:[#allocation11 + $0x3e8] sm:$0xff]
    %v632 = vld [vmem:[#allocation11 + $0x3f0] sm:$0xff]
    %v633 = vld [vmem:[#allocation11 + $0x3f8] sm:$0xff]
    %v634 = vld [vmem:[#allocation13] sm:$0xff]
    %v635 = vld [vmem:[#allocation13 + $0x8] sm:$0xff]
    %v636 = vld [vmem:[#allocation13 + $0x10] sm:$0xff]
    %v637 = vld [vmem:[#allocation13 + $0x18] sm:$0xff]
    %v638 = vld [vmem:[#allocation13 + $0x20] sm:$0xff]
    %v639 = vld [vmem:[#allocation13 + $0x28] sm:$0xff]
    %v640 = vld [vmem:[#allocation13 + $0x30] sm:$0xff]
    %v641 = vld [vmem:[#allocation13 + $0x38] sm:$0xff]
    %v642 = vld [vmem:[#allocation13 + $0x40] sm:$0xff]
    %v643 = vld [vmem:[#allocation13 + $0x48] sm:$0xff]
    %v644 = vld [vmem:[#allocation13 + $0x50] sm:$0xff]
    %v645 = vld [vmem:[#allocation13 + $0x58] sm:$0xff]
    %v646 = vld [vmem:[#allocation13 + $0x60] sm:$0xff]
    %v647 = vld [vmem:[#allocation13 + $0x68] sm:$0xff]
    %v648 = vld [vmem:[#allocation13 + $0x70] sm:$0xff]
    %v649 = vld [vmem:[#allocation13 + $0x78] sm:$0xff]
    %v650 = vld [vmem:[#allocation13 + $0x80] sm:$0xff]
    %v651 = vld [vmem:[#allocation13 + $0x88] sm:$0xff]
    %v652 = vld [vmem:[#allocation13 + $0x90] sm:$0xff]
    %v653 = vld [vmem:[#allocation13 + $0x98] sm:$0xff]
    %v654 = vld [vmem:[#allocation13 + $0xa0] sm:$0xff]
    %v655 = vld [vmem:[#allocation13 + $0xa8] sm:$0xff]
    %v656 = vld [vmem:[#allocation13 + $0xb0] sm:$0xff]
    %v657 = vld [vmem:[#allocation13 + $0xb8] sm:$0xff]
    %v658 = vld [vmem:[#allocation13 + $0xc0] sm:$0xff]
    %v659 = vld [vmem:[#allocation13 + $0xc8] sm:$0xff]
    %v660 = vld [vmem:[#allocation13 + $0xd0] sm:$0xff]
    %v661 = vld [vmem:[#allocation13 + $0xd8] sm:$0xff]
    %v662 = vld [vmem:[#allocation13 + $0xe0] sm:$0xff]
    %v663 = vld [vmem:[#allocation13 + $0xe8] sm:$0xff]
    %v664 = vld [vmem:[#allocation13 + $0xf0] sm:$0xff]
    %v665 = vld [vmem:[#allocation13 + $0xf8] sm:$0xff]
    %v666 = vld [vmem:[#allocation13 + $0x100] sm:$0xff]
    %v667 = vld [vmem:[#allocation13 + $0x108] sm:$0xff]
    %v668 = vld [vmem:[#allocation13 + $0x110] sm:$0xff]
    %v669 = vld [vmem:[#allocation13 + $0x118] sm:$0xff]
    %v670 = vld [vmem:[#allocation13 + $0x120] sm:$0xff]
    %v671 = vld [vmem:[#allocation13 + $0x128] sm:$0xff]
    %v672 = vld [vmem:[#allocation13 + $0x130] sm:$0xff]
    %v673 = vld [vmem:[#allocation13 + $0x138] sm:$0xff]
    %v674 = vld [vmem:[#allocation13 + $0x140] sm:$0xff]
    %v675 = vld [vmem:[#allocation13 + $0x148] sm:$0xff]
    %v676 = vld [vmem:[#allocation13 + $0x150] sm:$0xff]
    %v677 = vld [vmem:[#allocation13 + $0x158] sm:$0xff]
    %v678 = vld [vmem:[#allocation13 + $0x160] sm:$0xff]
    %v679 = vld [vmem:[#allocation13 + $0x168] sm:$0xff]
    %v680 = vld [vmem:[#allocation13 + $0x170] sm:$0xff]
    %v681 = vld [vmem:[#allocation13 + $0x178] sm:$0xff]
    %v682 = vld [vmem:[#allocation13 + $0x180] sm:$0xff]
    %v683 = vld [vmem:[#allocation13 + $0x188] sm:$0xff]
    %v684 = vld [vmem:[#allocation13 + $0x190] sm:$0xff]
    %v685 = vld [vmem:[#allocation13 + $0x198] sm:$0xff]
    %v686 = vld [vmem:[#allocation13 + $0x1a0] sm:$0xff]
    %v687 = vld [vmem:[#allocation13 + $0x1a8] sm:$0xff]
    %v688 = vld [vmem:[#allocation13 + $0x1b0] sm:$0xff]
    %v689 = vld [vmem:[#allocation13 + $0x1b8] sm:$0xff]
    %v690 = vld [vmem:[#allocation13 + $0x1c0] sm:$0xff]
    %v691 = vld [vmem:[#allocation13 + $0x1c8] sm:$0xff]
    %v692 = vld [vmem:[#allocation13 + $0x1d0] sm:$0xff]
    %v693 = vld [vmem:[#allocation13 + $0x1d8] sm:$0xff]
    %v694 = vld [vmem:[#allocation13 + $0x1e0] sm:$0xff]
    %v695 = vld [vmem:[#allocation13 + $0x1e8] sm:$0xff]
    %v696 = vld [vmem:[#allocation13 + $0x1f0] sm:$0xff]
    %v697 = vld [vmem:[#allocation13 + $0x1f8] sm:$0xff]
    %v698 = vld [vmem:[%s10] sm:$0x1]
    %v699 = vld [vmem:[%s11] sm:$0x1]
    %v700 = vld [vmem:[%s12] sm:$0x1]
    %v701 = vld [vmem:[#allocation14] sm:$0xff]
    %v702 = vld [vmem:[#allocation14 + $0x8] sm:$0xff]
    %v703 = vld [vmem:[#allocation14 + $0x10] sm:$0xff]
    %v704 = vld [vmem:[#allocation14 + $0x18] sm:$0xff]
    %v705 = vld [vmem:[#allocation14 + $0x20] sm:$0xff]
    %v706 = vld [vmem:[#allocation14 + $0x28] sm:$0xff]
    %v707 = vld [vmem:[#allocation14 + $0x30] sm:$0xff]
    %v708 = vld [vmem:[#allocation14 + $0x38] sm:$0xff]
    %v709 = vld [vmem:[#allocation14 + $0x40] sm:$0xff]
    %v710 = vld [vmem:[#allocation14 + $0x48] sm:$0xff]
    %v711 = vld [vmem:[#allocation14 + $0x50] sm:$0xff]
    %v712 = vld [vmem:[#allocation14 + $0x58] sm:$0xff]
    %v713 = vld [vmem:[#allocation14 + $0x60] sm:$0xff]
    %v714 = vld [vmem:[#allocation14 + $0x68] sm:$0xff]
    %v715 = vld [vmem:[#allocation14 + $0x70] sm:$0xff]
    %v716 = vld [vmem:[#allocation14 + $0x78] sm:$0xff]
    %v717 = vld [vmem:[%s14] sm:$0x1]
    %v718 = vld [vmem:[#allocation16] sm:$0xff]
    %v719 = vld [vmem:[#allocation16 + $0x8] sm:$0xff]
    %v720 = vld [vmem:[#allocation16 + $0x10] sm:$0xff]
    %v721 = vld [vmem:[#allocation16 + $0x18] sm:$0xff]
    %v722 = vld [vmem:[#allocation16 + $0x20] sm:$0xff]
    %v723 = vld [vmem:[#allocation16 + $0x28] sm:$0xff]
    %v724 = vld [vmem:[#allocation16 + $0x30] sm:$0xff]
    %v725 = vld [vmem:[#allocation16 + $0x38] sm:$0xff]
    %v726 = vld [vmem:[#allocation16 + $0x40] sm:$0xff]
    %v727 = vld [vmem:[#allocation16 + $0x48] sm:$0xff]
    %v728 = vld [vmem:[#allocation16 + $0x50] sm:$0xff]
    %v729 = vld [vmem:[#allocation16 + $0x58] sm:$0xff]
    %v730 = vld [vmem:[#allocation16 + $0x60] sm:$0xff]
    %v731 = vld [vmem:[#allocation16 + $0x68] sm:$0xff]
    %v732 = vld [vmem:[#allocation16 + $0x70] sm:$0xff]
    %v733 = vld [vmem:[#allocation16 + $0x78] sm:$0xff]
    %v734 = vld [vmem:[%s16] sm:$0x1]
    %v735 = vld [vmem:[%s17] sm:$0x1]
    %v736 = vld [vmem:[%s18] sm:$0x1]
    %v737 = vld [vmem:[#allocation2] sm:$0xff]
    %v738 = vld [vmem:[#allocation5] sm:$0xff]
    %v739 = vld [vmem:[#allocation5 + $0x8] sm:$0xff]
    %740 = vmatprep.subr.mxu0 %v184
    %741 = vmatpush1.msra.mxu0 %v183
    %742 = vmatprep.subr.mxu0 %v187
    %743 = vmatpush1.msra.mxu0 %v186
    %744 = vmatprep.subr.mxu0 %v190
    %745 = vmatpush1.msra.mxu0 %v189
    %746 = vmatprep.subr.mxu0 %v193
    %747 = vmatpush1.msra.mxu0 %v192
    %748 = vmatprep.subr.mxu0 %v196
    %749 = vmatpush1.msra.mxu0 %v195
    %750 = vmatprep.subr.mxu0 %v199
    %751 = vmatpush1.msra.mxu0 %v198
    %752 = vmatprep.subr.mxu0 %v202
    %753 = vmatpush1.msra.mxu0 %v201
    %754 = vmatprep.subr.mxu0 %v205
    %755 = vmatpush1.msra.mxu0 %v204
    %756 = vmatprep.subr.mxu0 %v208
    %757 = vmatpush1.msra.mxu0 %v207
    %758 = vmatprep.subr.mxu0 %v211
    %759 = vmatpush1.msra.mxu0 %v210
    %760 = vmatprep.subr.mxu0 %v214
    %761 = vmatpush1.msra.mxu0 %v213
    %762 = vmatprep.subr.mxu0 %v217
    %763 = vmatpush1.msra.mxu0 %v216
    %764 = vmatprep.subr.mxu0 %v220
    %765 = vmatpush1.msra.mxu0 %v219
    %766 = vmatprep.subr.mxu0 %v223
    %767 = vmatpush1.msra.mxu0 %v222
    %768 = vmatprep.subr.mxu0 %v226
    %769 = vmatpush1.msra.mxu0 %v225
    %770 = vmatprep.subr.mxu0 %v229
    %771 = vmatpush1.msra.mxu0 %v228
    %772 = vmatprep.subr.mxu0 0.0
    %773 = vmatpush1.msra.mxu0 0.0
    %774 = vmatprep.subr.mxu0 0.0
    %775 = vmatpush1.msra.mxu0 0.0
    %776 = vmatprep.subr.mxu0 0.0
    %777 = vmatpush1.msra.mxu0 0.0
    %778 = vmatprep.subr.mxu0 0.0
    %779 = vmatpush1.msra.mxu0 0.0
    %780 = vmatprep.subr.mxu0 0.0
    %781 = vmatpush1.msra.mxu0 0.0
    %782 = vmatprep.subr.mxu0 0.0
    %783 = vmatpush1.msra.mxu0 0.0
    %784 = vmatprep.subr.mxu0 0.0
    %785 = vmatpush1.msra.mxu0 0.0
    %786 = vmatprep.subr.mxu0 0.0
    %787 = vmatpush1.msra.mxu0 0.0
    %788 = vmatprep.subr.mxu0 0.0
    %789 = vmatpush1.msra.mxu0 0.0
    %790 = vmatprep.subr.mxu0 0.0
    %791 = vmatpush1.msra.mxu0 0.0
    %792 = vmatprep.subr.mxu0 0.0
    %793 = vmatpush1.msra.mxu0 0.0
    %794 = vmatprep.subr.mxu0 0.0
    %795 = vmatpush1.msra.mxu0 0.0
    %796 = vmatprep.subr.mxu0 0.0
    %797 = vmatpush1.msra.mxu0 0.0
    %798 = vmatprep.subr.mxu0 0.0
    %799 = vmatpush1.msra.mxu0 0.0
    %800 = vmatprep.subr.mxu0 0.0
    %801 = vmatpush1.msra.mxu0 0.0
    %802 = vmatprep.subr.mxu0 0.0
    %803 = vmatpush1.msra.mxu0 0.0
    %804 = vmatprep.mubr.f32.mxu0 0.0
    %805 = vmatmul.mubr.f32.gmra.mrb[0].mxu0 %v737
    %v806 = vpop.f32.mrb[0].mxu0
    %v807 = vadd.f32 0.0, %v806
    %v808 = vpop.f32.mrb[0].mxu0
    %v809 = vadd.f32 0.0, %v808
    %810 = vdwg.mxu0
    %811 = vmatprep.subr.mxu0 0.0
    %812 = vmatpush1.msra.mxu0 %v185
    %813 = vmatprep.subr.mxu0 0.0
    %814 = vmatpush1.msra.mxu0 %v188
    %815 = vmatprep.subr.mxu0 0.0
    %816 = vmatpush1.msra.mxu0 %v191
    %817 = vmatprep.subr.mxu0 0.0
    %818 = vmatpush1.msra.mxu0 %v194
    %819 = vmatprep.subr.mxu0 0.0
    %820 = vmatpush1.msra.mxu0 %v197
    %821 = vmatprep.subr.mxu0 0.0
    %822 = vmatpush1.msra.mxu0 %v200
    %823 = vmatprep.subr.mxu0 0.0
    %824 = vmatpush1.msra.mxu0 %v203
    %825 = vmatprep.subr.mxu0 0.0
    %826 = vmatpush1.msra.mxu0 %v206
    %827 = vmatprep.subr.mxu0 0.0
    %828 = vmatpush1.msra.mxu0 %v209
    %829 = vmatprep.subr.mxu0 0.0
    %830 = vmatpush1.msra.mxu0 %v212
    %831 = vmatprep.subr.mxu0 0.0
    %832 = vmatpush1.msra.mxu0 %v215
    %833 = vmatprep.subr.mxu0 0.0
    %834 = vmatpush1.msra.mxu0 %v218
    %835 = vmatprep.subr.mxu0 0.0
    %836 = vmatpush1.msra.mxu0 %v221
    %837 = vmatprep.subr.mxu0 0.0
    %838 = vmatpush1.msra.mxu0 %v224
    %839 = vmatprep.subr.mxu0 0.0
    %840 = vmatpush1.msra.mxu0 %v227
    %841 = vmatprep.subr.mxu0 0.0
    %842 = vmatpush1.msra.mxu0 %v230
    %843 = vmatprep.subr.mxu0 0.0
    %844 = vmatpush1.msra.mxu0 0.0
    %845 = vmatprep.subr.mxu0 0.0
    %846 = vmatpush1.msra.mxu0 0.0
    %847 = vmatprep.subr.mxu0 0.0
    %848 = vmatpush1.msra.mxu0 0.0
    %849 = vmatprep.subr.mxu0 0.0
    %850 = vmatpush1.msra.mxu0 0.0
    %851 = vmatprep.subr.mxu0 0.0
    %852 = vmatpush1.msra.mxu0 0.0
    %853 = vmatprep.subr.mxu0 0.0
    %854 = vmatpush1.msra.mxu0 0.0
    %855 = vmatprep.subr.mxu0 0.0
    %856 = vmatpush1.msra.mxu0 0.0
    %857 = vmatprep.subr.mxu0 0.0
    %858 = vmatpush1.msra.mxu0 0.0
    %859 = vmatprep.subr.mxu0 0.0
    %860 = vmatpush1.msra.mxu0 0.0
    %861 = vmatprep.subr.mxu0 0.0
    %862 = vmatpush1.msra.mxu0 0.0
    %863 = vmatprep.subr.mxu0 0.0
    %864 = vmatpush1.msra.mxu0 0.0
    %865 = vmatprep.subr.mxu0 0.0
    %866 = vmatpush1.msra.mxu0 0.0
    %867 = vmatprep.subr.mxu0 0.0
    %868 = vmatpush1.msra.mxu0 0.0
    %869 = vmatprep.subr.mxu0 0.0
    %870 = vmatpush1.msra.mxu0 0.0
    %871 = vmatprep.subr.mxu0 0.0
    %872 = vmatpush1.msra.mxu0 0.0
    %873 = vmatprep.subr.mxu0 0.0
    %874 = vmatpush1.msra.mxu0 0.0
    %875 = vmatprep.mubr.f32.mxu0 0.0
    %876 = vmatmul.mubr.f32.gmra.mrb[0].mxu0 %v737
    %v877 = vpop.f32.mrb[0].mxu0
    %v878 = vadd.f32 0.0, %v877
    %v879 = vpop.f32.mrb[0].mxu0
    %880 = vdwg.mxu0
    %881 = vmatprep.subr.mxu0 %v232
    %882 = vmatpush1.msra.mxu0 %v231
    %883 = vmatprep.subr.mxu0 %v235
    %884 = vmatpush1.msra.mxu0 %v234
    %885 = vmatprep.subr.mxu0 %v238
    %886 = vmatpush1.msra.mxu0 %v237
    %887 = vmatprep.subr.mxu0 %v241
    %888 = vmatpush1.msra.mxu0 %v240
    %889 = vmatprep.subr.mxu0 %v244
    %890 = vmatpush1.msra.mxu0 %v243
    %891 = vmatprep.subr.mxu0 %v247
    %892 = vmatpush1.msra.mxu0 %v246
    %893 = vmatprep.subr.mxu0 %v250
    %894 = vmatpush1.msra.mxu0 %v249
    %895 = vmatprep.subr.mxu0 %v253
    %896 = vmatpush1.msra.mxu0 %v252
    %897 = vmatprep.subr.mxu0 %v256
    %898 = vmatpush1.msra.mxu0 %v255
    %899 = vmatprep.subr.mxu0 %v259
    %900 = vmatpush1.msra.mxu0 %v258
    %901 = vmatprep.subr.mxu0 %v262
    %902 = vmatpush1.msra.mxu0 %v261
    %903 = vmatprep.subr.mxu0 %v265
    %904 = vmatpush1.msra.mxu0 %v264
    %905 = vmatprep.subr.mxu0 %v268
    %906 = vmatpush1.msra.mxu0 %v267
    %907 = vmatprep.subr.mxu0 %v271
    %908 = vmatpush1.msra.mxu0 %v270
    %909 = vmatprep.subr.mxu0 %v274
    %910 = vmatpush1.msra.mxu0 %v273
    %911 = vmatprep.subr.mxu0 %v277
    %912 = vmatpush1.msra.mxu0 %v276
    %913 = vmatprep.subr.mxu0 0.0
    %914 = vmatpush1.msra.mxu0 0.0
    %915 = vmatprep.subr.mxu0 0.0
    %916 = vmatpush1.msra.mxu0 0.0
    %917 = vmatprep.subr.mxu0 0.0
    %918 = vmatpush1.msra.mxu0 0.0
    %919 = vmatprep.subr.mxu0 0.0
    %920 = vmatpush1.msra.mxu0 0.0
    %921 = vmatprep.subr.mxu0 0.0
    %922 = vmatpush1.msra.mxu0 0.0
    %923 = vmatprep.subr.mxu0 0.0
    %924 = vmatpush1.msra.mxu0 0.0
    %925 = vmatprep.subr.mxu0 0.0
    %926 = vmatpush1.msra.mxu0 0.0
    %927 = vmatprep.subr.mxu0 0.0
    %928 = vmatpush1.msra.mxu0 0.0
    %929 = vmatprep.subr.mxu0 0.0
    %930 = vmatpush1.msra.mxu0 0.0
    %931 = vmatprep.subr.mxu0 0.0
    %932 = vmatpush1.msra.mxu0 0.0
    %933 = vmatprep.subr.mxu0 0.0
    %934 = vmatpush1.msra.mxu0 0.0
    %935 = vmatprep.subr.mxu0 0.0
    %936 = vmatpush1.msra.mxu0 0.0
    %937 = vmatprep.subr.mxu0 0.0
    %938 = vmatpush1.msra.mxu0 0.0
    %939 = vmatprep.subr.mxu0 0.0
    %940 = vmatpush1.msra.mxu0 0.0
    %941 = vmatprep.subr.mxu0 0.0
    %942 = vmatpush1.msra.mxu0 0.0
    %943 = vmatprep.subr.mxu0 0.0
    %944 = vmatpush1.msra.mxu0 0.0
    %945 = vmatprep.mubr.f32.mxu0 0.0
    %946 = vmatmul.mubr.f32.gmra.mrb[0].mxu0 %v737
    %v947 = vpop.f32.mrb[0].mxu0
    %v948 = vadd.f32 0.0, %v947
    %v949 = vpop.f32.mrb[0].mxu0
    %v950 = vadd.f32 0.0, %v949
    %951 = vdwg.mxu0
    %952 = vmatprep.subr.mxu0 0.0
    %953 = vmatpush1.msra.mxu0 %v233
    %954 = vmatprep.subr.mxu0 0.0
    %955 = vmatpush1.msra.mxu0 %v236
    %956 = vmatprep.subr.mxu0 0.0
    %957 = vmatpush1.msra.mxu0 %v239
    %958 = vmatprep.subr.mxu0 0.0
    %959 = vmatpush1.msra.mxu0 %v242
    %960 = vmatprep.subr.mxu0 0.0
    %961 = vmatpush1.msra.mxu0 %v245
    %962 = vmatprep.subr.mxu0 0.0
    %963 = vmatpush1.msra.mxu0 %v248
    %964 = vmatprep.subr.mxu0 0.0
    %965 = vmatpush1.msra.mxu0 %v251
    %966 = vmatprep.subr.mxu0 0.0
    %967 = vmatpush1.msra.mxu0 %v254
    %968 = vmatprep.subr.mxu0 0.0
    %969 = vmatpush1.msra.mxu0 %v257
    %970 = vmatprep.subr.mxu0 0.0
    %971 = vmatpush1.msra.mxu0 %v260
    %972 = vmatprep.subr.mxu0 0.0
    %973 = vmatpush1.msra.mxu0 %v263
    %974 = vmatprep.subr.mxu0 0.0
    %975 = vmatpush1.msra.mxu0 %v266
    %976 = vmatprep.subr.mxu0 0.0
    %977 = vmatpush1.msra.mxu0 %v269
    %978 = vmatprep.subr.mxu0 0.0
    %979 = vmatpush1.msra.mxu0 %v272
    %980 = vmatprep.subr.mxu0 0.0
    %981 = vmatpush1.msra.mxu0 %v275
    %982 = vmatprep.subr.mxu0 0.0
    %983 = vmatpush1.msra.mxu0 %v278
    %984 = vmatprep.subr.mxu0 0.0
    %985 = vmatpush1.msra.mxu0 0.0
    %986 = vmatprep.subr.mxu0 0.0
    %987 = vmatpush1.msra.mxu0 0.0
    %988 = vmatprep.subr.mxu0 0.0
    %989 = vmatpush1.msra.mxu0 0.0
    %990 = vmatprep.subr.mxu0 0.0
    %991 = vmatpush1.msra.mxu0 0.0
    %992 = vmatprep.subr.mxu0 0.0
    %993 = vmatpush1.msra.mxu0 0.0
    %994 = vmatprep.subr.mxu0 0.0
    %995 = vmatpush1.msra.mxu0 0.0
    %996 = vmatprep.subr.mxu0 0.0
    %997 = vmatpush1.msra.mxu0 0.0
    %998 = vmatprep.subr.mxu0 0.0
    %999 = vmatpush1.msra.mxu0 0.0
    %1000 = vmatprep.subr.mxu0 0.0
    %1001 = vmatpush1.msra.mxu0 0.0
    %1002 = vmatprep.subr.mxu0 0.0
    %1003 = vmatpush1.msra.mxu0 0.0
    %1004 = vmatprep.subr.mxu0 0.0
    %1005 = vmatpush1.msra.mxu0 0.0
    %1006 = vmatprep.subr.mxu0 0.0
    %1007 = vmatpush1.msra.mxu0 0.0
    %1008 = vmatprep.subr.mxu0 0.0
    %1009 = vmatpush1.msra.mxu0 0.0
    %1010 = vmatprep.subr.mxu0 0.0
    %1011 = vmatpush1.msra.mxu0 0.0
    %1012 = vmatprep.subr.mxu0 0.0
    %1013 = vmatpush1.msra.mxu0 0.0
    %1014 = vmatprep.subr.mxu0 0.0
    %1015 = vmatpush1.msra.mxu0 0.0
    %1016 = vmatprep.mubr.f32.mxu0 0.0
    %1017 = vmatmul.mubr.f32.gmra.mrb[0].mxu0 %v737
    %v1018 = vpop.f32.mrb[0].mxu0
    %v1019 = vadd.f32 0.0, %v1018
    %v1020 = vpop.f32.mrb[0].mxu0
    %1021 = vdwg.mxu0
    %1022 = vmatprep.subr.mxu0 %v280
    %1023 = vmatpush1.msra.mxu0 %v279
    %1024 = vmatprep.subr.mxu0 %v283
    %1025 = vmatpush1.msra.mxu0 %v282
    %1026 = vmatprep.subr.mxu0 %v286
    %1027 = vmatpush1.msra.mxu0 %v285
    %1028 = vmatprep.subr.mxu0 %v289
    %1029 = vmatpush1.msra.mxu0 %v288
    %1030 = vmatprep.subr.mxu0 %v292
    %1031 = vmatpush1.msra.mxu0 %v291
    %1032 = vmatprep.subr.mxu0 %v295
    %1033 = vmatpush1.msra.mxu0 %v294
    %1034 = vmatprep.subr.mxu0 %v298
    %1035 = vmatpush1.msra.mxu0 %v297
    %1036 = vmatprep.subr.mxu0 %v301
    %1037 = vmatpush1.msra.mxu0 %v300
    %1038 = vmatprep.subr.mxu0 %v304
    %1039 = vmatpush1.msra.mxu0 %v303
    %1040 = vmatprep.subr.mxu0 %v307
    %1041 = vmatpush1.msra.mxu0 %v306
    %1042 = vmatprep.subr.mxu0 %v310
    %1043 = vmatpush1.msra.mxu0 %v309
    %1044 = vmatprep.subr.mxu0 %v313
    %1045 = vmatpush1.msra.mxu0 %v312
    %1046 = vmatprep.subr.mxu0 %v316
    %1047 = vmatpush1.msra.mxu0 %v315
    %1048 = vmatprep.subr.mxu0 %v319
    %1049 = vmatpush1.msra.mxu0 %v318
    %1050 = vmatprep.subr.mxu0 %v322
    %1051 = vmatpush1.msra.mxu0 %v321
    %1052 = vmatprep.subr.mxu0 %v325
    %1053 = vmatpush1.msra.mxu0 %v324
    %1054 = vmatprep.subr.mxu0 0.0
    %1055 = vmatpush1.msra.mxu0 0.0
    %1056 = vmatprep.subr.mxu0 0.0
    %1057 = vmatpush1.msra.mxu0 0.0
    %1058 = vmatprep.subr.mxu0 0.0
    %1059 = vmatpush1.msra.mxu0 0.0
    %1060 = vmatprep.subr.mxu0 0.0
    %1061 = vmatpush1.msra.mxu0 0.0
    %1062 = vmatprep.subr.mxu0 0.0
    %1063 = vmatpush1.msra.mxu0 0.0
    %1064 = vmatprep.subr.mxu0 0.0
    %1065 = vmatpush1.msra.mxu0 0.0
    %1066 = vmatprep.subr.mxu0 0.0
    %1067 = vmatpush1.msra.mxu0 0.0
    %1068 = vmatprep.subr.mxu0 0.0
    %1069 = vmatpush1.msra.mxu0 0.0
    %1070 = vmatprep.subr.mxu0 0.0
    %1071 = vmatpush1.msra.mxu0 0.0
    %1072 = vmatprep.subr.mxu0 0.0
    %1073 = vmatpush1.msra.mxu0 0.0
    %1074 = vmatprep.subr.mxu0 0.0
    %1075 = vmatpush1.msra.mxu0 0.0
    %1076 = vmatprep.subr.mxu0 0.0
    %1077 = vmatpush1.msra.mxu0 0.0
    %1078 = vmatprep.subr.mxu0 0.0
    %1079 = vmatpush1.msra.mxu0 0.0
    %1080 = vmatprep.subr.mxu0 0.0
    %1081 = vmatpush1.msra.mxu0 0.0
    %1082 = vmatprep.subr.mxu0 0.0
    %1083 = vmatpush1.msra.mxu0 0.0
    %1084 = vmatprep.subr.mxu0 0.0
    %1085 = vmatpush1.msra.mxu0 0.0
    %1086 = vmatprep.mubr.f32.mxu0 0.0
    %1087 = vmatmul.mubr.f32.gmra.mrb[0].mxu0 %v737
    %v1088 = vpop.f32.mrb[0].mxu0
    %v1089 = vadd.f32 0.0, %v1088
    %v1090 = vpop.f32.mrb[0].mxu0
    %v1091 = vadd.f32 0.0, %v1090
    %1092 = vdwg.mxu0
    %1093 = vmatprep.subr.mxu0 0.0
    %1094 = vmatpush1.msra.mxu0 %v281
    %1095 = vmatprep.subr.mxu0 0.0
    %1096 = vmatpush1.msra.mxu0 %v284
    %1097 = vmatprep.subr.mxu0 0.0
    %1098 = vmatpush1.msra.mxu0 %v287
    %1099 = vmatprep.subr.mxu0 0.0
    %1100 = vmatpush1.msra.mxu0 %v290
    %1101 = vmatprep.subr.mxu0 0.0
    %1102 = vmatpush1.msra.mxu0 %v293
    %1103 = vmatprep.subr.mxu0 0.0
    %1104 = vmatpush1.msra.mxu0 %v296
    %1105 = vmatprep.subr.mxu0 0.0
    %1106 = vmatpush1.msra.mxu0 %v299
    %1107 = vmatprep.subr.mxu0 0.0
    %1108 = vmatpush1.msra.mxu0 %v302
    %1109 = vmatprep.subr.mxu0 0.0
    %1110 = vmatpush1.msra.mxu0 %v305
    %1111 = vmatprep.subr.mxu0 0.0
    %1112 = vmatpush1.msra.mxu0 %v308
    %1113 = vmatprep.subr.mxu0 0.0
    %1114 = vmatpush1.msra.mxu0 %v311
    %1115 = vmatprep.subr.mxu0 0.0
    %1116 = vmatpush1.msra.mxu0 %v314
    %1117 = vmatprep.subr.mxu0 0.0
    %1118 = vmatpush1.msra.mxu0 %v317
    %1119 = vmatprep.subr.mxu0 0.0
    %1120 = vmatpush1.msra.mxu0 %v320
    %1121 = vmatprep.subr.mxu0 0.0
    %1122 = vmatpush1.msra.mxu0 %v323
    %1123 = vmatprep.subr.mxu0 0.0
    %1124 = vmatpush1.msra.mxu0 %v326
    %1125 = vmatprep.subr.mxu0 0.0
    %1126 = vmatpush1.msra.mxu0 0.0
    %1127 = vmatprep.subr.mxu0 0.0
    %1128 = vmatpush1.msra.mxu0 0.0
    %1129 = vmatprep.subr.mxu0 0.0
    %1130 = vmatpush1.msra.mxu0 0.0
    %1131 = vmatprep.subr.mxu0 0.0
    %1132 = vmatpush1.msra.mxu0 0.0
    %1133 = vmatprep.subr.mxu0 0.0
    %1134 = vmatpush1.msra.mxu0 0.0
    %1135 = vmatprep.subr.mxu0 0.0
    %1136 = vmatpush1.msra.mxu0 0.0
    %1137 = vmatprep.subr.mxu0 0.0
    %1138 = vmatpush1.msra.mxu0 0.0
    %1139 = vmatprep.subr.mxu0 0.0
    %1140 = vmatpush1.msra.mxu0 0.0
    %1141 = vmatprep.subr.mxu0 0.0
    %1142 = vmatpush1.msra.mxu0 0.0
    %1143 = vmatprep.subr.mxu0 0.0
    %1144 = vmatpush1.msra.mxu0 0.0
    %1145 = vmatprep.subr.mxu0 0.0
    %1146 = vmatpush1.msra.mxu0 0.0
    %1147 = vmatprep.subr.mxu0 0.0
    %1148 = vmatpush1.msra.mxu0 0.0
    %1149 = vmatprep.subr.mxu0 0.0
    %1150 = vmatpush1.msra.mxu0 0.0
    %1151 = vmatprep.subr.mxu0 0.0
    %1152 = vmatpush1.msra.mxu0 0.0
    %1153 = vmatprep.subr.mxu0 0.0
    %1154 = vmatpush1.msra.mxu0 0.0
    %1155 = vmatprep.subr.mxu0 0.0
    %1156 = vmatpush1.msra.mxu0 0.0
    %1157 = vmatprep.mubr.f32.mxu0 0.0
    %1158 = vmatmul.mubr.f32.gmra.mrb[0].mxu0 %v737
    %v1159 = vpop.f32.mrb[0].mxu0
    %v1160 = vadd.f32 0.0, %v1159
    %v1161 = vpop.f32.mrb[0].mxu0
    %1162 = vdwg.mxu0
    %1163 = vmatprep.subr.mxu0 %v328
    %1164 = vmatpush1.msra.mxu0 %v327
    %1165 = vmatprep.subr.mxu0 %v331
    %1166 = vmatpush1.msra.mxu0 %v330
    %1167 = vmatprep.subr.mxu0 %v334
    %1168 = vmatpush1.msra.mxu0 %v333
    %1169 = vmatprep.subr.mxu0 %v337
    %1170 = vmatpush1.msra.mxu0 %v336
    %1171 = vmatprep.subr.mxu0 %v340
    %1172 = vmatpush1.msra.mxu0 %v339
    %1173 = vmatprep.subr.mxu0 %v343
    %1174 = vmatpush1.msra.mxu0 %v342
    %1175 = vmatprep.subr.mxu0 %v346
    %1176 = vmatpush1.msra.mxu0 %v345
    %1177 = vmatprep.subr.mxu0 %v349
    %1178 = vmatpush1.msra.mxu0 %v348
    %1179 = vmatprep.subr.mxu0 %v352
    %1180 = vmatpush1.msra.mxu0 %v351
    %1181 = vmatprep.subr.mxu0 %v355
    %1182 = vmatpush1.msra.mxu0 %v354
    %1183 = vmatprep.subr.mxu0 %v358
    %1184 = vmatpush1.msra.mxu0 %v357
    %1185 = vmatprep.subr.mxu0 %v361
    %1186 = vmatpush1.msra.mxu0 %v360
    %1187 = vmatprep.subr.mxu0 %v364
    %1188 = vmatpush1.msra.mxu0 %v363
    %1189 = vmatprep.subr.mxu0 %v367
    %1190 = vmatpush1.msra.mxu0 %v366
    %1191 = vmatprep.subr.mxu0 %v370
    %1192 = vmatpush1.msra.mxu0 %v369
    %1193 = vmatprep.subr.mxu0 %v373
    %1194 = vmatpush1.msra.mxu0 %v372
    %1195 = vmatprep.subr.mxu0 0.0
    %1196 = vmatpush1.msra.mxu0 0.0
    %1197 = vmatprep.subr.mxu0 0.0
    %1198 = vmatpush1.msra.mxu0 0.0
    %1199 = vmatprep.subr.mxu0 0.0
    %1200 = vmatpush1.msra.mxu0 0.0
    %1201 = vmatprep.subr.mxu0 0.0
    %1202 = vmatpush1.msra.mxu0 0.0
    %1203 = vmatprep.subr.mxu0 0.0
    %1204 = vmatpush1.msra.mxu0 0.0
    %1205 = vmatprep.subr.mxu0 0.0
    %1206 = vmatpush1.msra.mxu0 0.0
    %1207 = vmatprep.subr.mxu0 0.0
    %1208 = vmatpush1.msra.mxu0 0.0
    %1209 = vmatprep.subr.mxu0 0.0
    %1210 = vmatpush1.msra.mxu0 0.0
    %1211 = vmatprep.subr.mxu0 0.0
    %1212 = vmatpush1.msra.mxu0 0.0
    %1213 = vmatprep.subr.mxu0 0.0
    %1214 = vmatpush1.msra.mxu0 0.0
    %1215 = vmatprep.subr.mxu0 0.0
    %1216 = vmatpush1.msra.mxu0 0.0
    %1217 = vmatprep.subr.mxu0 0.0
    %1218 = vmatpush1.msra.mxu0 0.0
    %1219 = vmatprep.subr.mxu0 0.0
    %1220 = vmatpush1.msra.mxu0 0.0
    %1221 = vmatprep.subr.mxu0 0.0
    %1222 = vmatpush1.msra.mxu0 0.0
    %1223 = vmatprep.subr.mxu0 0.0
    %1224 = vmatpush1.msra.mxu0 0.0
    %1225 = vmatprep.subr.mxu0 0.0
    %1226 = vmatpush1.msra.mxu0 0.0
    %1227 = vmatprep.mubr.f32.mxu0 0.0
    %1228 = vmatmul.mubr.f32.gmra.mrb[0].mxu0 %v737
    %v1229 = vpop.f32.mrb[0].mxu0
    %v1230 = vadd.f32 0.0, %v1229
    %v1231 = vpop.f32.mrb[0].mxu0
    %v1232 = vadd.f32 0.0, %v1231
    %1233 = vdwg.mxu0
    %1234 = vmatprep.subr.mxu0 0.0
    %1235 = vmatpush1.msra.mxu0 %v329
    %1236 = vmatprep.subr.mxu0 0.0
    %1237 = vmatpush1.msra.mxu0 %v332
    %1238 = vmatprep.subr.mxu0 0.0
    %1239 = vmatpush1.msra.mxu0 %v335
    %1240 = vmatprep.subr.mxu0 0.0
    %1241 = vmatpush1.msra.mxu0 %v338
    %1242 = vmatprep.subr.mxu0 0.0
    %1243 = vmatpush1.msra.mxu0 %v341
    %1244 = vmatprep.subr.mxu0 0.0
    %1245 = vmatpush1.msra.mxu0 %v344
    %1246 = vmatprep.subr.mxu0 0.0
    %1247 = vmatpush1.msra.mxu0 %v347
    %1248 = vmatprep.subr.mxu0 0.0
    %1249 = vmatpush1.msra.mxu0 %v350
    %1250 = vmatprep.subr.mxu0 0.0
    %1251 = vmatpush1.msra.mxu0 %v353
    %1252 = vmatprep.subr.mxu0 0.0
    %1253 = vmatpush1.msra.mxu0 %v356
    %1254 = vmatprep.subr.mxu0 0.0
    %1255 = vmatpush1.msra.mxu0 %v359
    %1256 = vmatprep.subr.mxu0 0.0
    %1257 = vmatpush1.msra.mxu0 %v362
    %1258 = vmatprep.subr.mxu0 0.0
    %1259 = vmatpush1.msra.mxu0 %v365
    %1260 = vmatprep.subr.mxu0 0.0
    %1261 = vmatpush1.msra.mxu0 %v368
    %1262 = vmatprep.subr.mxu0 0.0
    %1263 = vmatpush1.msra.mxu0 %v371
    %1264 = vmatprep.subr.mxu0 0.0
    %1265 = vmatpush1.msra.mxu0 %v374
    %1266 = vmatprep.subr.mxu0 0.0
    %1267 = vmatpush1.msra.mxu0 0.0
    %1268 = vmatprep.subr.mxu0 0.0
    %1269 = vmatpush1.msra.mxu0 0.0
    %1270 = vmatprep.subr.mxu0 0.0
    %1271 = vmatpush1.msra.mxu0 0.0
    %1272 = vmatprep.subr.mxu0 0.0
    %1273 = vmatpush1.msra.mxu0 0.0
    %1274 = vmatprep.subr.mxu0 0.0
    %1275 = vmatpush1.msra.mxu0 0.0
    %1276 = vmatprep.subr.mxu0 0.0
    %1277 = vmatpush1.msra.mxu0 0.0
    %1278 = vmatprep.subr.mxu0 0.0
    %1279 = vmatpush1.msra.mxu0 0.0
    %1280 = vmatprep.subr.mxu0 0.0
    %1281 = vmatpush1.msra.mxu0 0.0
    %1282 = vmatprep.subr.mxu0 0.0
    %1283 = vmatpush1.msra.mxu0 0.0
    %1284 = vmatprep.subr.mxu0 0.0
    %1285 = vmatpush1.msra.mxu0 0.0
    %1286 = vmatprep.subr.mxu0 0.0
    %1287 = vmatpush1.msra.mxu0 0.0
    %1288 = vmatprep.subr.mxu0 0.0
    %1289 = vmatpush1.msra.mxu0 0.0
    %1290 = vmatprep.subr.mxu0 0.0
    %1291 = vmatpush1.msra.mxu0 0.0
    %1292 = vmatprep.subr.mxu0 0.0
    %1293 = vmatpush1.msra.mxu0 0.0
    %1294 = vmatprep.subr.mxu0 0.0
    %1295 = vmatpush1.msra.mxu0 0.0
    %1296 = vmatprep.subr.mxu0 0.0
    %1297 = vmatpush1.msra.mxu0 0.0
    %1298 = vmatprep.mubr.f32.mxu0 0.0
    %1299 = vmatmul.mubr.f32.gmra.mrb[0].mxu0 %v737
    %v1300 = vpop.f32.mrb[0].mxu0
    %v1301 = vadd.f32 0.0, %v1300
    %v1302 = vpop.f32.mrb[0].mxu0
    %1303 = vdwg.mxu0
    %1304 = vmatprep.subr.mxu0 0.0
    %1305 = vmatpush1.xpose.msra.mxu0 %v809
    %1306 = vmatprep.subr.mxu0 0.0
    %1307 = vmatpush1.xpose.msra.mxu0 0.0
    %1308 = vmatprep.subr.mxu0 0.0
    %1309 = vmatpush1.xpose.msra.mxu0 0.0
    %1310 = vmatprep.subr.mxu0 0.0
    %1311 = vmatpush1.xpose.msra.mxu0 0.0
    %1312 = vmatprep.subr.mxu0 0.0
    %1313 = vmatpush1.xpose.msra.mxu0 0.0
    %1314 = vmatprep.subr.mxu0 0.0
    %1315 = vmatpush1.xpose.msra.mxu0 0.0
    %1316 = vmatprep.subr.mxu0 0.0
    %1317 = vmatpush1.xpose.msra.mxu0 0.0
    %1318 = vmatprep.subr.mxu0 0.0
    %1319 = vmatpush1.xpose.msra.mxu0 0.0
    %1320 = vmatprep.subr.mxu0 0.0
    %1321 = vmatpush1.xpose.msra.mxu0 0.0
    %1322 = vmatprep.subr.mxu0 0.0
    %1323 = vmatpush1.xpose.msra.mxu0 0.0
    %1324 = vmatprep.subr.mxu0 0.0
    %1325 = vmatpush1.xpose.msra.mxu0 0.0
    %1326 = vmatprep.subr.mxu0 0.0
    %1327 = vmatpush1.xpose.msra.mxu0 0.0
    %1328 = vmatprep.subr.mxu0 0.0
    %1329 = vmatpush1.xpose.msra.mxu0 0.0
    %1330 = vmatprep.subr.mxu0 0.0
    %1331 = vmatpush1.xpose.msra.mxu0 0.0
    %1332 = vmatprep.subr.mxu0 0.0
    %1333 = vmatpush1.xpose.msra.mxu0 0.0
    %1334 = vmatprep.subr.mxu0 0.0
    %1335 = vmatpush1.xpose.msra.mxu0 0.0
    %1336 = vmatprep.subr.mxu0 0.0
    %1337 = vmatpush1.xpose.msra.mxu0 0.0
    %1338 = vmatprep.subr.mxu0 0.0
    %1339 = vmatpush1.xpose.msra.mxu0 0.0
    %1340 = vmatprep.subr.mxu0 0.0
    %1341 = vmatpush1.xpose.msra.mxu0 0.0
    %1342 = vmatprep.subr.mxu0 0.0
    %1343 = vmatpush1.xpose.msra.mxu0 0.0
    %1344 = vmatprep.subr.mxu0 0.0
    %1345 = vmatpush1.xpose.msra.mxu0 0.0
    %1346 = vmatprep.subr.mxu0 0.0
    %1347 = vmatpush1.xpose.msra.mxu0 0.0
    %1348 = vmatprep.subr.mxu0 0.0
    %1349 = vmatpush1.xpose.msra.mxu0 0.0
    %1350 = vmatprep.subr.mxu0 0.0
    %1351 = vmatpush1.xpose.msra.mxu0 0.0
    %1352 = vmatprep.subr.mxu0 0.0
    %1353 = vmatpush1.xpose.msra.mxu0 0.0
    %1354 = vmatprep.subr.mxu0 0.0
    %1355 = vmatpush1.xpose.msra.mxu0 0.0
    %1356 = vmatprep.subr.mxu0 0.0
    %1357 = vmatpush1.xpose.msra.mxu0 0.0
    %1358 = vmatprep.subr.mxu0 0.0
    %1359 = vmatpush1.xpose.msra.mxu0 0.0
    %1360 = vmatprep.subr.mxu0 0.0
    %1361 = vmatpush1.xpose.msra.mxu0 0.0
    %1362 = vmatprep.subr.mxu0 0.0
    %1363 = vmatpush1.xpose.msra.mxu0 0.0
    %1364 = vmatprep.subr.mxu0 0.0
    %1365 = vmatpush1.xpose.msra.mxu0 0.0
    %1366 = vmatprep.subr.mxu0 0.0
    %1367 = vmatpush1.xpose.msra.mxu0 0.0
    %1368 = vmatprep.mubr.f32.mxu0 0.0
    %1369 = vmatmul.mubr.f32.gmra.mrb[0].mxu0 %v807
    %v1370 = vpop.f32.mrb[0].mxu0
    %v1371 = vadd.f32 0.0, %v1370
    %v1372 = vpop.f32.mrb[0].mxu0
    %1373 = vdwg.mxu0
    %1374 = vmatprep.subr.mxu0 0.0
    %1375 = vmatpush1.xpose.msra.mxu0 %v950
    %1376 = vmatprep.subr.mxu0 0.0
    %1377 = vmatpush1.xpose.msra.mxu0 0.0
    %1378 = vmatprep.subr.mxu0 0.0
    %1379 = vmatpush1.xpose.msra.mxu0 0.0
    %1380 = vmatprep.subr.mxu0 0.0
    %1381 = vmatpush1.xpose.msra.mxu0 0.0
    %1382 = vmatprep.subr.mxu0 0.0
    %1383 = vmatpush1.xpose.msra.mxu0 0.0
    %1384 = vmatprep.subr.mxu0 0.0
    %1385 = vmatpush1.xpose.msra.mxu0 0.0
    %1386 = vmatprep.subr.mxu0 0.0
    %1387 = vmatpush1.xpose.msra.mxu0 0.0
    %1388 = vmatprep.subr.mxu0 0.0
    %1389 = vmatpush1.xpose.msra.mxu0 0.0
    %1390 = vmatprep.subr.mxu0 0.0
    %1391 = vmatpush1.xpose.msra.mxu0 0.0
    %1392 = vmatprep.subr.mxu0 0.0
    %1393 = vmatpush1.xpose.msra.mxu0 0.0
    %1394 = vmatprep.subr.mxu0 0.0
    %1395 = vmatpush1.xpose.msra.mxu0 0.0
    %1396 = vmatprep.subr.mxu0 0.0
    %1397 = vmatpush1.xpose.msra.mxu0 0.0
    %1398 = vmatprep.subr.mxu0 0.0
    %1399 = vmatpush1.xpose.msra.mxu0 0.0
    %1400 = vmatprep.subr.mxu0 0.0
    %1401 = vmatpush1.xpose.msra.mxu0 0.0
    %1402 = vmatprep.subr.mxu0 0.0
    %1403 = vmatpush1.xpose.msra.mxu0 0.0
    %1404 = vmatprep.subr.mxu0 0.0
    %1405 = vmatpush1.xpose.msra.mxu0 0.0
    %1406 = vmatprep.subr.mxu0 0.0
    %1407 = vmatpush1.xpose.msra.mxu0 0.0
    %1408 = vmatprep.subr.mxu0 0.0
    %1409 = vmatpush1.xpose.msra.mxu0 0.0
    %1410 = vmatprep.subr.mxu0 0.0
    %1411 = vmatpush1.xpose.msra.mxu0 0.0
    %1412 = vmatprep.subr.mxu0 0.0
    %1413 = vmatpush1.xpose.msra.mxu0 0.0
    %1414 = vmatprep.subr.mxu0 0.0
    %1415 = vmatpush1.xpose.msra.mxu0 0.0
    %1416 = vmatprep.subr.mxu0 0.0
    %1417 = vmatpush1.xpose.msra.mxu0 0.0
    %1418 = vmatprep.subr.mxu0 0.0
    %1419 = vmatpush1.xpose.msra.mxu0 0.0
    %1420 = vmatprep.subr.mxu0 0.0
    %1421 = vmatpush1.xpose.msra.mxu0 0.0
    %1422 = vmatprep.subr.mxu0 0.0
    %1423 = vmatpush1.xpose.msra.mxu0 0.0
    %1424 = vmatprep.subr.mxu0 0.0
    %1425 = vmatpush1.xpose.msra.mxu0 0.0
    %1426 = vmatprep.subr.mxu0 0.0
    %1427 = vmatpush1.xpose.msra.mxu0 0.0
    %1428 = vmatprep.subr.mxu0 0.0
    %1429 = vmatpush1.xpose.msra.mxu0 0.0
    %1430 = vmatprep.subr.mxu0 0.0
    %1431 = vmatpush1.xpose.msra.mxu0 0.0
    %1432 = vmatprep.subr.mxu0 0.0
    %1433 = vmatpush1.xpose.msra.mxu0 0.0
    %1434 = vmatprep.subr.mxu0 0.0
    %1435 = vmatpush1.xpose.msra.mxu0 0.0
    %1436 = vmatprep.subr.mxu0 0.0
    %1437 = vmatpush1.xpose.msra.mxu0 0.0
    %1438 = vmatprep.mubr.f32.mxu0 0.0
    %1439 = vmatmul.mubr.f32.gmra.mrb[0].mxu0 %v948
    %v1440 = vpop.f32.mrb[0].mxu0
    %v1441 = vadd.f32 0.0, %v1440
    %v1442 = vpop.f32.mrb[0].mxu0
    %1443 = vdwg.mxu0
    %1444 = vmatprep.subr.mxu0 0.0
    %1445 = vmatpush1.xpose.msra.mxu0 %v1091
    %1446 = vmatprep.subr.mxu0 0.0
    %1447 = vmatpush1.xpose.msra.mxu0 0.0
    %1448 = vmatprep.subr.mxu0 0.0
    %1449 = vmatpush1.xpose.msra.mxu0 0.0
    %1450 = vmatprep.subr.mxu0 0.0
    %1451 = vmatpush1.xpose.msra.mxu0 0.0
    %1452 = vmatprep.subr.mxu0 0.0
    %1453 = vmatpush1.xpose.msra.mxu0 0.0
    %1454 = vmatprep.subr.mxu0 0.0
    %1455 = vmatpush1.xpose.msra.mxu0 0.0
    %1456 = vmatprep.subr.mxu0 0.0
    %1457 = vmatpush1.xpose.msra.mxu0 0.0
    %1458 = vmatprep.subr.mxu0 0.0
    %1459 = vmatpush1.xpose.msra.mxu0 0.0
    %1460 = vmatprep.subr.mxu0 0.0
    %1461 = vmatpush1.xpose.msra.mxu0 0.0
    %1462 = vmatprep.subr.mxu0 0.0
    %1463 = vmatpush1.xpose.msra.mxu0 0.0
    %1464 = vmatprep.subr.mxu0 0.0
    %1465 = vmatpush1.xpose.msra.mxu0 0.0
    %1466 = vmatprep.subr.mxu0 0.0
    %1467 = vmatpush1.xpose.msra.mxu0 0.0
    %1468 = vmatprep.subr.mxu0 0.0
    %1469 = vmatpush1.xpose.msra.mxu0 0.0
    %1470 = vmatprep.subr.mxu0 0.0
    %1471 = vmatpush1.xpose.msra.mxu0 0.0
    %1472 = vmatprep.subr.mxu0 0.0
    %1473 = vmatpush1.xpose.msra.mxu0 0.0
    %1474 = vmatprep.subr.mxu0 0.0
    %1475 = vmatpush1.xpose.msra.mxu0 0.0
    %1476 = vmatprep.subr.mxu0 0.0
    %1477 = vmatpush1.xpose.msra.mxu0 0.0
    %1478 = vmatprep.subr.mxu0 0.0
    %1479 = vmatpush1.xpose.msra.mxu0 0.0
    %1480 = vmatprep.subr.mxu0 0.0
    %1481 = vmatpush1.xpose.msra.mxu0 0.0
    %1482 = vmatprep.subr.mxu0 0.0
    %1483 = vmatpush1.xpose.msra.mxu0 0.0
    %1484 = vmatprep.subr.mxu0 0.0
    %1485 = vmatpush1.xpose.msra.mxu0 0.0
    %1486 = vmatprep.subr.mxu0 0.0
    %1487 = vmatpush1.xpose.msra.mxu0 0.0
    %1488 = vmatprep.subr.mxu0 0.0
    %1489 = vmatpush1.xpose.msra.mxu0 0.0
    %1490 = vmatprep.subr.mxu0 0.0
    %1491 = vmatpush1.xpose.msra.mxu0 0.0
    %1492 = vmatprep.subr.mxu0 0.0
    %1493 = vmatpush1.xpose.msra.mxu0 0.0
    %1494 = vmatprep.subr.mxu0 0.0
    %1495 = vmatpush1.xpose.msra.mxu0 0.0
    %1496 = vmatprep.subr.mxu0 0.0
    %1497 = vmatpush1.xpose.msra.mxu0 0.0
    %1498 = vmatprep.subr.mxu0 0.0
    %1499 = vmatpush1.xpose.msra.mxu0 0.0
    %1500 = vmatprep.subr.mxu0 0.0
    %1501 = vmatpush1.xpose.msra.mxu0 0.0
    %1502 = vmatprep.subr.mxu0 0.0
    %1503 = vmatpush1.xpose.msra.mxu0 0.0
    %1504 = vmatprep.subr.mxu0 0.0
    %1505 = vmatpush1.xpose.msra.mxu0 0.0
    %1506 = vmatprep.subr.mxu0 0.0
    %1507 = vmatpush1.xpose.msra.mxu0 0.0
    %1508 = vmatprep.mubr.f32.mxu0 0.0
    %1509 = vmatmul.mubr.f32.gmra.mrb[0].mxu0 %v1089
    %v1510 = vpop.f32.mrb[0].mxu0
    %v1511 = vadd.f32 0.0, %v1510
    %v1512 = vpop.f32.mrb[0].mxu0
    %1513 = vdwg.mxu0
    %1514 = vmatprep.subr.mxu0 0.0
    %1515 = vmatpush1.xpose.msra.mxu0 %v1232
    %1516 = vmatprep.subr.mxu0 0.0
    %1517 = vmatpush1.xpose.msra.mxu0 0.0
    %1518 = vmatprep.subr.mxu0 0.0
    %1519 = vmatpush1.xpose.msra.mxu0 0.0
    %1520 = vmatprep.subr.mxu0 0.0
    %1521 = vmatpush1.xpose.msra.mxu0 0.0
    %1522 = vmatprep.subr.mxu0 0.0
    %1523 = vmatpush1.xpose.msra.mxu0 0.0
    %1524 = vmatprep.subr.mxu0 0.0
    %1525 = vmatpush1.xpose.msra.mxu0 0.0
    %1526 = vmatprep.subr.mxu0 0.0
    %1527 = vmatpush1.xpose.msra.mxu0 0.0
    %1528 = vmatprep.subr.mxu0 0.0
    %1529 = vmatpush1.xpose.msra.mxu0 0.0
    %1530 = vmatprep.subr.mxu0 0.0
    %1531 = vmatpush1.xpose.msra.mxu0 0.0
    %1532 = vmatprep.subr.mxu0 0.0
    %1533 = vmatpush1.xpose.msra.mxu0 0.0
    %1534 = vmatprep.subr.mxu0 0.0
    %1535 = vmatpush1.xpose.msra.mxu0 0.0
    %1536 = vmatprep.subr.mxu0 0.0
    %1537 = vmatpush1.xpose.msra.mxu0 0.0
    %1538 = vmatprep.subr.mxu0 0.0
    %1539 = vmatpush1.xpose.msra.mxu0 0.0
    %1540 = vmatprep.subr.mxu0 0.0
    %1541 = vmatpush1.xpose.msra.mxu0 0.0
    %1542 = vmatprep.subr.mxu0 0.0
    %1543 = vmatpush1.xpose.msra.mxu0 0.0
    %1544 = vmatprep.subr.mxu0 0.0
    %1545 = vmatpush1.xpose.msra.mxu0 0.0
    %1546 = vmatprep.subr.mxu0 0.0
    %1547 = vmatpush1.xpose.msra.mxu0 0.0
    %1548 = vmatprep.subr.mxu0 0.0
    %1549 = vmatpush1.xpose.msra.mxu0 0.0
    %1550 = vmatprep.subr.mxu0 0.0
    %1551 = vmatpush1.xpose.msra.mxu0 0.0
    %1552 = vmatprep.subr.mxu0 0.0
    %1553 = vmatpush1.xpose.msra.mxu0 0.0
    %1554 = vmatprep.subr.mxu0 0.0
    %1555 = vmatpush1.xpose.msra.mxu0 0.0
    %1556 = vmatprep.subr.mxu0 0.0
    %1557 = vmatpush1.xpose.msra.mxu0 0.0
    %1558 = vmatprep.subr.mxu0 0.0
    %1559 = vmatpush1.xpose.msra.mxu0 0.0
    %1560 = vmatprep.subr.mxu0 0.0
    %1561 = vmatpush1.xpose.msra.mxu0 0.0
    %1562 = vmatprep.subr.mxu0 0.0
    %1563 = vmatpush1.xpose.msra.mxu0 0.0
    %1564 = vmatprep.subr.mxu0 0.0
    %1565 = vmatpush1.xpose.msra.mxu0 0.0
    %1566 = vmatprep.subr.mxu0 0.0
    %1567 = vmatpush1.xpose.msra.mxu0 0.0
    %1568 = vmatprep.subr.mxu0 0.0
    %1569 = vmatpush1.xpose.msra.mxu0 0.0
    %1570 = vmatprep.subr.mxu0 0.0
    %1571 = vmatpush1.xpose.msra.mxu0 0.0
    %1572 = vmatprep.subr.mxu0 0.0
    %1573 = vmatpush1.xpose.msra.mxu0 0.0
    %1574 = vmatprep.subr.mxu0 0.0
    %1575 = vmatpush1.xpose.msra.mxu0 0.0
    %1576 = vmatprep.subr.mxu0 0.0
    %1577 = vmatpush1.xpose.msra.mxu0 0.0
    %1578 = vmatprep.mubr.f32.mxu0 0.0
    %1579 = vmatmul.mubr.f32.gmra.mrb[0].mxu0 %v1230
    %v1580 = vpop.f32.mrb[0].mxu0
    %v1581 = vadd.f32 0.0, %v1580
    %v1582 = vpop.f32.mrb[0].mxu0
    %1583 = vdwg.mxu0
    %v1584 = vlaneseq
    %v1585 = vshrl.u32 %v1584, 7
    %v1586 = vlaneseq
    %v1587 = vand.u32 %v1586, 127
    %vm1588 = vcmp.gt.s32.totalorder %v1587, %v1585
    %v1589 = vsel %vm1588, -inf, %v1371
    %v1590 = vsel %vm1588, -inf, %v1441
    %v1591 = vsel %vm1588, -inf, %v1511
    %v1592 = vsel %vm1588, -inf, %v1581
    %vm1593 = vcmask 64512
    %v1594 = vsel %vm1593, %v1589, -inf
    %v1595 = vrot.slane %v1594, 4
    %v1596 = vmax.f32 %v1594, %v1595
    %v1597 = vrot.slane %v1596, 2
    %v1598 = vmax.f32 %v1596, %v1597
    %v1599 = vrot.slane %v1598, 1
    %v1600 = vmax.f32 %v1598, %v1599
    %v1601 = vsel %vm1593, %v1590, -inf
    %v1602 = vrot.slane %v1601, 4
    %v1603 = vmax.f32 %v1601, %v1602
    %v1604 = vrot.slane %v1603, 2
    %v1605 = vmax.f32 %v1603, %v1604
    %v1606 = vrot.slane %v1605, 1
    %v1607 = vmax.f32 %v1605, %v1606
    %v1608 = vsel %vm1593, %v1591, -inf
    %v1609 = vrot.slane %v1608, 4
    %v1610 = vmax.f32 %v1608, %v1609
    %v1611 = vrot.slane %v1610, 2
    %v1612 = vmax.f32 %v1610, %v1611
    %v1613 = vrot.slane %v1612, 1
    %v1614 = vmax.f32 %v1612, %v1613
    %v1615 = vsel %vm1593, %v1592, -inf
    %v1616 = vrot.slane %v1615, 4
    %v1617 = vmax.f32 %v1615, %v1616
    %v1618 = vrot.slane %v1617, 2
    %v1619 = vmax.f32 %v1617, %v1618
    %v1620 = vrot.slane %v1619, 1
    %v1621 = vmax.f32 %v1619, %v1620
    %v1622 = vsub.f32 %v1589, %v1600
    %v1623 = vsub.f32 %v1590, %v1607
    %v1624 = vsub.f32 %v1591, %v1614
    %v1625 = vsub.f32 %v1592, %v1621
    %v1626 = vmul.f32 %v1622, 1.442695
    %v1627 = vpow.pop %v1626
    %v1628 = vmul.f32 %v1623, 1.442695
    %v1629 = vpow.pop %v1628
    %v1630 = vmul.f32 %v1624, 1.442695
    %v1631 = vpow.pop %v1630
    %v1632 = vmul.f32 %v1625, 1.442695
    %v1633 = vpow.pop %v1632
    %v1634 = vsel %vm1593, %v1627, 0.0
    %v1635 = vrot.slane %v1634, 4
    %v1636 = vadd.f32 %v1634, %v1635
    %v1637 = vrot.slane %v1636, 2
    %v1638 = vadd.f32 %v1636, %v1637
    %v1639 = vrot.slane %v1638, 1
    %v1640 = vadd.f32 %v1638, %v1639
    %v1641 = vsel %vm1593, %v1629, 0.0
    %v1642 = vrot.slane %v1641, 4
    %v1643 = vadd.f32 %v1641, %v1642
    %v1644 = vrot.slane %v1643, 2
    %v1645 = vadd.f32 %v1643, %v1644
    %v1646 = vrot.slane %v1645, 1
    %v1647 = vadd.f32 %v1645, %v1646
    %v1648 = vsel %vm1593, %v1631, 0.0
    %v1649 = vrot.slane %v1648, 4
    %v1650 = vadd.f32 %v1648, %v1649
    %v1651 = vrot.slane %v1650, 2
    %v1652 = vadd.f32 %v1650, %v1651
    %v1653 = vrot.slane %v1652, 1
    %v1654 = vadd.f32 %v1652, %v1653
    %v1655 = vsel %vm1593, %v1633, 0.0
    %v1656 = vrot.slane %v1655, 4
    %v1657 = vadd.f32 %v1655, %v1656
    %v1658 = vrot.slane %v1657, 2
    %v1659 = vadd.f32 %v1657, %v1658
    %v1660 = vrot.slane %v1659, 1
    %v1661 = vadd.f32 %v1659, %v1660
    %v1662 = vrcp.pop %v1640
    %v1663 = vrcp.pop %v1647
    %v1664 = vrcp.pop %v1654
    %v1665 = vrcp.pop %v1661
    %v1666 = vmul.f32 %v1627, %v1662
    %v1667 = vmul.f32 %v1629, %v1663
    %v1668 = vmul.f32 %v1631, %v1664
    %v1669 = vmul.f32 %v1633, %v1665
    %v1671 = vsel %vm1593, %v1666, 0
    %1673 = vmatprep.subr.mxu0 0.0
    %1674 = vmatpush1.msra.mxu0 %v878
    %1675 = vmatprep.subr.mxu0 0.0
    %1676 = vmatpush1.msra.mxu0 0.0
    %1677 = vmatprep.subr.mxu0 0.0
    %1678 = vmatpush1.msra.mxu0 0.0
    %1679 = vmatprep.subr.mxu0 0.0
    %1680 = vmatpush1.msra.mxu0 0.0
    %1681 = vmatprep.subr.mxu0 0.0
    %1682 = vmatpush1.msra.mxu0 0.0
    %1683 = vmatprep.subr.mxu0 0.0
    %1684 = vmatpush1.msra.mxu0 0.0
    %1685 = vmatprep.subr.mxu0 0.0
    %1686 = vmatpush1.msra.mxu0 0.0
    %1687 = vmatprep.subr.mxu0 0.0
    %1688 = vmatpush1.msra.mxu0 0.0
    %1689 = vmatprep.subr.mxu0 0.0
    %1690 = vmatpush1.msra.mxu0 0.0
    %1691 = vmatprep.subr.mxu0 0.0
    %1692 = vmatpush1.msra.mxu0 0.0
    %1693 = vmatprep.subr.mxu0 0.0
    %1694 = vmatpush1.msra.mxu0 0.0
    %1695 = vmatprep.subr.mxu0 0.0
    %1696 = vmatpush1.msra.mxu0 0.0
    %1697 = vmatprep.subr.mxu0 0.0
    %1698 = vmatpush1.msra.mxu0 0.0
    %1699 = vmatprep.subr.mxu0 0.0
    %1700 = vmatpush1.msra.mxu0 0.0
    %1701 = vmatprep.subr.mxu0 0.0
    %1702 = vmatpush1.msra.mxu0 0.0
    %1703 = vmatprep.subr.mxu0 0.0
    %1704 = vmatpush1.msra.mxu0 0.0
    %1705 = vmatprep.subr.mxu0 0.0
    %1706 = vmatpush1.msra.mxu0 0.0
    %1707 = vmatprep.subr.mxu0 0.0
    %1708 = vmatpush1.msra.mxu0 0.0
    %1709 = vmatprep.subr.mxu0 0.0
    %1710 = vmatpush1.msra.mxu0 0.0
    %1711 = vmatprep.subr.mxu0 0.0
    %1712 = vmatpush1.msra.mxu0 0.0
    %1713 = vmatprep.subr.mxu0 0.0
    %1714 = vmatpush1.msra.mxu0 0.0
    %1715 = vmatprep.subr.mxu0 0.0
    %1716 = vmatpush1.msra.mxu0 0.0
    %1717 = vmatprep.subr.mxu0 0.0
    %1718 = vmatpush1.msra.mxu0 0.0
    %1719 = vmatprep.subr.mxu0 0.0
    %1720 = vmatpush1.msra.mxu0 0.0
    %1721 = vmatprep.subr.mxu0 0.0
    %1722 = vmatpush1.msra.mxu0 0.0
    %1723 = vmatprep.subr.mxu0 0.0
    %1724 = vmatpush1.msra.mxu0 0.0
    %1725 = vmatprep.subr.mxu0 0.0
    %1726 = vmatpush1.msra.mxu0 0.0
    %1727 = vmatprep.subr.mxu0 0.0
    %1728 = vmatpush1.msra.mxu0 0.0
    %1729 = vmatprep.subr.mxu0 0.0
    %1730 = vmatpush1.msra.mxu0 0.0
    %1731 = vmatprep.subr.mxu0 0.0
    %1732 = vmatpush1.msra.mxu0 0.0
    %1733 = vmatprep.subr.mxu0 0.0
    %1734 = vmatpush1.msra.mxu0 0.0
    %1735 = vmatprep.subr.mxu0 0.0
    %1736 = vmatpush1.msra.mxu0 0.0
    %1737 = vmatprep.mubr.f32.mxu0 0.0
    %1738 = vmatmul.mubr.f32.gmra.mrb[0].mxu0 %v1671
    %v1739 = vpop.f32.mrb[0].mxu0
    %v1740 = vadd.f32 0.0, %v1739
    %v1741 = vpop.f32.mrb[0].mxu0
    %1742 = vdwg.mxu0
    %v1744 = vsel %vm1593, %v1667, 0
    %1746 = vmatprep.subr.mxu0 0.0
    %1747 = vmatpush1.msra.mxu0 %v1019
    %1748 = vmatprep.subr.mxu0 0.0
    %1749 = vmatpush1.msra.mxu0 0.0
    %1750 = vmatprep.subr.mxu0 0.0
    %1751 = vmatpush1.msra.mxu0 0.0
    %1752 = vmatprep.subr.mxu0 0.0
    %1753 = vmatpush1.msra.mxu0 0.0
    %1754 = vmatprep.subr.mxu0 0.0
    %1755 = vmatpush1.msra.mxu0 0.0
    %1756 = vmatprep.subr.mxu0 0.0
    %1757 = vmatpush1.msra.mxu0 0.0
    %1758 = vmatprep.subr.mxu0 0.0
    %1759 = vmatpush1.msra.mxu0 0.0
    %1760 = vmatprep.subr.mxu0 0.0
    %1761 = vmatpush1.msra.mxu0 0.0
    %1762 = vmatprep.subr.mxu0 0.0
    %1763 = vmatpush1.msra.mxu0 0.0
    %1764 = vmatprep.subr.mxu0 0.0
    %1765 = vmatpush1.msra.mxu0 0.0
    %1766 = vmatprep.subr.mxu0 0.0
    %1767 = vmatpush1.msra.mxu0 0.0
    %1768 = vmatprep.subr.mxu0 0.0
    %1769 = vmatpush1.msra.mxu0 0.0
    %1770 = vmatprep.subr.mxu0 0.0
    %1771 = vmatpush1.msra.mxu0 0.0
    %1772 = vmatprep.subr.mxu0 0.0
    %1773 = vmatpush1.msra.mxu0 0.0
    %1774 = vmatprep.subr.mxu0 0.0
    %1775 = vmatpush1.msra.mxu0 0.0
    %1776 = vmatprep.subr.mxu0 0.0
    %1777 = vmatpush1.msra.mxu0 0.0
    %1778 = vmatprep.subr.mxu0 0.0
    %1779 = vmatpush1.msra.mxu0 0.0
    %1780 = vmatprep.subr.mxu0 0.0
    %1781 = vmatpush1.msra.mxu0 0.0
    %1782 = vmatprep.subr.mxu0 0.0
    %1783 = vmatpush1.msra.mxu0 0.0
    %1784 = vmatprep.subr.mxu0 0.0
    %1785 = vmatpush1.msra.mxu0 0.0
    %1786 = vmatprep.subr.mxu0 0.0
    %1787 = vmatpush1.msra.mxu0 0.0
    %1788 = vmatprep.subr.mxu0 0.0
    %1789 = vmatpush1.msra.mxu0 0.0
    %1790 = vmatprep.subr.mxu0 0.0
    %1791 = vmatpush1.msra.mxu0 0.0
    %1792 = vmatprep.subr.mxu0 0.0
    %1793 = vmatpush1.msra.mxu0 0.0
    %1794 = vmatprep.subr.mxu0 0.0
    %1795 = vmatpush1.msra.mxu0 0.0
    %1796 = vmatprep.subr.mxu0 0.0
    %1797 = vmatpush1.msra.mxu0 0.0
    %1798 = vmatprep.subr.mxu0 0.0
    %1799 = vmatpush1.msra.mxu0 0.0
    %1800 = vmatprep.subr.mxu0 0.0
    %1801 = vmatpush1.msra.mxu0 0.0
    %1802 = vmatprep.subr.mxu0 0.0
    %1803 = vmatpush1.msra.mxu0 0.0
    %1804 = vmatprep.subr.mxu0 0.0
    %1805 = vmatpush1.msra.mxu0 0.0
    %1806 = vmatprep.subr.mxu0 0.0
    %1807 = vmatpush1.msra.mxu0 0.0
    %1808 = vmatprep.subr.mxu0 0.0
    %1809 = vmatpush1.msra.mxu0 0.0
    %1810 = vmatprep.mubr.f32.mxu0 0.0
    %1811 = vmatmul.mubr.f32.gmra.mrb[0].mxu0 %v1744
    %v1812 = vpop.f32.mrb[0].mxu0
    %v1813 = vadd.f32 0.0, %v1812
    %v1814 = vpop.f32.mrb[0].mxu0
    %1815 = vdwg.mxu0
    %v1817 = vsel %vm1593, %v1668, 0
    %1819 = vmatprep.subr.mxu0 0.0
    %1820 = vmatpush1.msra.mxu0 %v1160
    %1821 = vmatprep.subr.mxu0 0.0
    %1822 = vmatpush1.msra.mxu0 0.0
    %1823 = vmatprep.subr.mxu0 0.0
    %1824 = vmatpush1.msra.mxu0 0.0
    %1825 = vmatprep.subr.mxu0 0.0
    %1826 = vmatpush1.msra.mxu0 0.0
    %1827 = vmatprep.subr.mxu0 0.0
    %1828 = vmatpush1.msra.mxu0 0.0
    %1829 = vmatprep.subr.mxu0 0.0
    %1830 = vmatpush1.msra.mxu0 0.0
    %1831 = vmatprep.subr.mxu0 0.0
    %1832 = vmatpush1.msra.mxu0 0.0
    %1833 = vmatprep.subr.mxu0 0.0
    %1834 = vmatpush1.msra.mxu0 0.0
    %1835 = vmatprep.subr.mxu0 0.0
    %1836 = vmatpush1.msra.mxu0 0.0
    %1837 = vmatprep.subr.mxu0 0.0
    %1838 = vmatpush1.msra.mxu0 0.0
    %1839 = vmatprep.subr.mxu0 0.0
    %1840 = vmatpush1.msra.mxu0 0.0
    %1841 = vmatprep.subr.mxu0 0.0
    %1842 = vmatpush1.msra.mxu0 0.0
    %1843 = vmatprep.subr.mxu0 0.0
    %1844 = vmatpush1.msra.mxu0 0.0
    %1845 = vmatprep.subr.mxu0 0.0
    %1846 = vmatpush1.msra.mxu0 0.0
    %1847 = vmatprep.subr.mxu0 0.0
    %1848 = vmatpush1.msra.mxu0 0.0
    %1849 = vmatprep.subr.mxu0 0.0
    %1850 = vmatpush1.msra.mxu0 0.0
    %1851 = vmatprep.subr.mxu0 0.0
    %1852 = vmatpush1.msra.mxu0 0.0
    %1853 = vmatprep.subr.mxu0 0.0
    %1854 = vmatpush1.msra.mxu0 0.0
    %1855 = vmatprep.subr.mxu0 0.0
    %1856 = vmatpush1.msra.mxu0 0.0
    %1857 = vmatprep.subr.mxu0 0.0
    %1858 = vmatpush1.msra.mxu0 0.0
    %1859 = vmatprep.subr.mxu0 0.0
    %1860 = vmatpush1.msra.mxu0 0.0
    %1861 = vmatprep.subr.mxu0 0.0
    %1862 = vmatpush1.msra.mxu0 0.0
    %1863 = vmatprep.subr.mxu0 0.0
    %1864 = vmatpush1.msra.mxu0 0.0
    %1865 = vmatprep.subr.mxu0 0.0
    %1866 = vmatpush1.msra.mxu0 0.0
    %1867 = vmatprep.subr.mxu0 0.0
    %1868 = vmatpush1.msra.mxu0 0.0
    %1869 = vmatprep.subr.mxu0 0.0
    %1870 = vmatpush1.msra.mxu0 0.0
    %1871 = vmatprep.subr.mxu0 0.0
    %1872 = vmatpush1.msra.mxu0 0.0
    %1873 = vmatprep.subr.mxu0 0.0
    %1874 = vmatpush1.msra.mxu0 0.0
    %1875 = vmatprep.subr.mxu0 0.0
    %1876 = vmatpush1.msra.mxu0 0.0
    %1877 = vmatprep.subr.mxu0 0.0
    %1878 = vmatpush1.msra.mxu0 0.0
    %1879 = vmatprep.subr.mxu0 0.0
    %1880 = vmatpush1.msra.mxu0 0.0
    %1881 = vmatprep.subr.mxu0 0.0
    %1882 = vmatpush1.msra.mxu0 0.0
    %1883 = vmatprep.mubr.f32.mxu0 0.0
    %1884 = vmatmul.mubr.f32.gmra.mrb[0].mxu0 %v1817
    %v1885 = vpop.f32.mrb[0].mxu0
    %v1886 = vadd.f32 0.0, %v1885
    %v1887 = vpop.f32.mrb[0].mxu0
    %1888 = vdwg.mxu0
    %v1890 = vsel %vm1593, %v1669, 0
    %1892 = vmatprep.subr.mxu0 0.0
    %1893 = vmatpush1.msra.mxu0 %v1301
    %1894 = vmatprep.subr.mxu0 0.0
    %1895 = vmatpush1.msra.mxu0 0.0
    %1896 = vmatprep.subr.mxu0 0.0
    %1897 = vmatpush1.msra.mxu0 0.0
    %1898 = vmatprep.subr.mxu0 0.0
    %1899 = vmatpush1.msra.mxu0 0.0
    %1900 = vmatprep.subr.mxu0 0.0
    %1901 = vmatpush1.msra.mxu0 0.0
    %1902 = vmatprep.subr.mxu0 0.0
    %1903 = vmatpush1.msra.mxu0 0.0
    %1904 = vmatprep.subr.mxu0 0.0
    %1905 = vmatpush1.msra.mxu0 0.0
    %1906 = vmatprep.subr.mxu0 0.0
    %1907 = vmatpush1.msra.mxu0 0.0
    %1908 = vmatprep.subr.mxu0 0.0
    %1909 = vmatpush1.msra.mxu0 0.0
    %1910 = vmatprep.subr.mxu0 0.0
    %1911 = vmatpush1.msra.mxu0 0.0
    %1912 = vmatprep.subr.mxu0 0.0
    %1913 = vmatpush1.msra.mxu0 0.0
    %1914 = vmatprep.subr.mxu0 0.0
    %1915 = vmatpush1.msra.mxu0 0.0
    %1916 = vmatprep.subr.mxu0 0.0
    %1917 = vmatpush1.msra.mxu0 0.0
    %1918 = vmatprep.subr.mxu0 0.0
    %1919 = vmatpush1.msra.mxu0 0.0
    %1920 = vmatprep.subr.mxu0 0.0
    %1921 = vmatpush1.msra.mxu0 0.0
    %1922 = vmatprep.subr.mxu0 0.0
    %1923 = vmatpush1.msra.mxu0 0.0
    %1924 = vmatprep.subr.mxu0 0.0
    %1925 = vmatpush1.msra.mxu0 0.0
    %1926 = vmatprep.subr.mxu0 0.0
    %1927 = vmatpush1.msra.mxu0 0.0
    %1928 = vmatprep.subr.mxu0 0.0
    %1929 = vmatpush1.msra.mxu0 0.0
    %1930 = vmatprep.subr.mxu0 0.0
    %1931 = vmatpush1.msra.mxu0 0.0
    %1932 = vmatprep.subr.mxu0 0.0
    %1933 = vmatpush1.msra.mxu0 0.0
    %1934 = vmatprep.subr.mxu0 0.0
    %1935 = vmatpush1.msra.mxu0 0.0
    %1936 = vmatprep.subr.mxu0 0.0
    %1937 = vmatpush1.msra.mxu0 0.0
    %1938 = vmatprep.subr.mxu0 0.0
    %1939 = vmatpush1.msra.mxu0 0.0
    %1940 = vmatprep.subr.mxu0 0.0
    %1941 = vmatpush1.msra.mxu0 0.0
    %1942 = vmatprep.subr.mxu0 0.0
    %1943 = vmatpush1.msra.mxu0 0.0
    %1944 = vmatprep.subr.mxu0 0.0
    %1945 = vmatpush1.msra.mxu0 0.0
    %1946 = vmatprep.subr.mxu0 0.0
    %1947 = vmatpush1.msra.mxu0 0.0
    %1948 = vmatprep.subr.mxu0 0.0
    %1949 = vmatpush1.msra.mxu0 0.0
    %1950 = vmatprep.subr.mxu0 0.0
    %1951 = vmatpush1.msra.mxu0 0.0
    %1952 = vmatprep.subr.mxu0 0.0
    %1953 = vmatpush1.msra.mxu0 0.0
    %1954 = vmatprep.subr.mxu0 0.0
    %1955 = vmatpush1.msra.mxu0 0.0
    %1956 = vmatprep.mubr.f32.mxu0 0.0
    %1957 = vmatmul.mubr.f32.gmra.mrb[0].mxu0 %v1890
    %v1958 = vpop.f32.mrb[0].mxu0
    %v1959 = vadd.f32 0.0, %v1958
    %v1960 = vpop.f32.mrb[0].mxu0
    %1961 = vdwg.mxu0
    %1962 = vmatprep.subr.mxu0 0.0
    %1963 = vmatpush1.msra.mxu0 %v375
    %1964 = vmatprep.subr.mxu0 0.0
    %1965 = vmatpush1.msra.mxu0 %v376
    %1966 = vmatprep.subr.mxu0 0.0
    %1967 = vmatpush1.msra.mxu0 %v377
    %1968 = vmatprep.subr.mxu0 0.0
    %1969 = vmatpush1.msra.mxu0 %v378
    %1970 = vmatprep.subr.mxu0 0.0
    %1971 = vmatpush1.msra.mxu0 %v379
    %1972 = vmatprep.subr.mxu0 0.0
    %1973 = vmatpush1.msra.mxu0 %v380
    %1974 = vmatprep.subr.mxu0 0.0
    %1975 = vmatpush1.msra.mxu0 %v381
    %1976 = vmatprep.subr.mxu0 0.0
    %1977 = vmatpush1.msra.mxu0 %v382
    %1978 = vmatprep.subr.mxu0 0.0
    %1979 = vmatpush1.msra.mxu0 %v383
    %1980 = vmatprep.subr.mxu0 0.0
    %1981 = vmatpush1.msra.mxu0 %v384
    %1982 = vmatprep.subr.mxu0 0.0
    %1983 = vmatpush1.msra.mxu0 %v385
    %1984 = vmatprep.subr.mxu0 0.0
    %1985 = vmatpush1.msra.mxu0 %v386
    %1986 = vmatprep.subr.mxu0 0.0
    %1987 = vmatpush1.msra.mxu0 %v387
    %1988 = vmatprep.subr.mxu0 0.0
    %1989 = vmatpush1.msra.mxu0 %v388
    %1990 = vmatprep.subr.mxu0 0.0
    %1991 = vmatpush1.msra.mxu0 %v389
    %1992 = vmatprep.subr.mxu0 0.0
    %1993 = vmatpush1.msra.mxu0 %v390
    %1994 = vmatprep.subr.mxu0 0.0
    %1995 = vmatpush1.msra.mxu0 0.0
    %1996 = vmatprep.subr.mxu0 0.0
    %1997 = vmatpush1.msra.mxu0 0.0
    %1998 = vmatprep.subr.mxu0 0.0
    %1999 = vmatpush1.msra.mxu0 0.0
    %2000 = vmatprep.subr.mxu0 0.0
    %2001 = vmatpush1.msra.mxu0 0.0
    %2002 = vmatprep.subr.mxu0 0.0
    %2003 = vmatpush1.msra.mxu0 0.0
    %2004 = vmatprep.subr.mxu0 0.0
    %2005 = vmatpush1.msra.mxu0 0.0
    %2006 = vmatprep.subr.mxu0 0.0
    %2007 = vmatpush1.msra.mxu0 0.0
    %2008 = vmatprep.subr.mxu0 0.0
    %2009 = vmatpush1.msra.mxu0 0.0
    %2010 = vmatprep.subr.mxu0 0.0
    %2011 = vmatpush1.msra.mxu0 0.0
    %2012 = vmatprep.subr.mxu0 0.0
    %2013 = vmatpush1.msra.mxu0 0.0
    %2014 = vmatprep.subr.mxu0 0.0
    %2015 = vmatpush1.msra.mxu0 0.0
    %2016 = vmatprep.subr.mxu0 0.0
    %2017 = vmatpush1.msra.mxu0 0.0
    %2018 = vmatprep.subr.mxu0 0.0
    %2019 = vmatpush1.msra.mxu0 0.0
    %2020 = vmatprep.subr.mxu0 0.0
    %2021 = vmatpush1.msra.mxu0 0.0
    %2022 = vmatprep.subr.mxu0 0.0
    %2023 = vmatpush1.msra.mxu0 0.0
    %2024 = vmatprep.subr.mxu0 0.0
    %2025 = vmatpush1.msra.mxu0 0.0
    %2026 = vmatprep.mubr.f32.mxu0 0.0
    %2027 = vmatmul.mubr.f32.gmra.mrb[0].mxu0 %v1740
    %v2028 = vpop.f32.mrb[0].mxu0
    %v2029 = vadd.f32 0.0, %v2028
    %v2030 = vpop.f32.mrb[0].mxu0
    %2031 = vdwg.mxu0
    %2032 = vmatprep.subr.mxu0 0.0
    %2033 = vmatpush1.msra.mxu0 %v391
    %2034 = vmatprep.subr.mxu0 0.0
    %2035 = vmatpush1.msra.mxu0 %v392
    %2036 = vmatprep.subr.mxu0 0.0
    %2037 = vmatpush1.msra.mxu0 %v393
    %2038 = vmatprep.subr.mxu0 0.0
    %2039 = vmatpush1.msra.mxu0 %v394
    %2040 = vmatprep.subr.mxu0 0.0
    %2041 = vmatpush1.msra.mxu0 %v395
    %2042 = vmatprep.subr.mxu0 0.0
    %2043 = vmatpush1.msra.mxu0 %v396
    %2044 = vmatprep.subr.mxu0 0.0
    %2045 = vmatpush1.msra.mxu0 %v397
    %2046 = vmatprep.subr.mxu0 0.0
    %2047 = vmatpush1.msra.mxu0 %v398
    %2048 = vmatprep.subr.mxu0 0.0
    %2049 = vmatpush1.msra.mxu0 %v399
    %2050 = vmatprep.subr.mxu0 0.0
    %2051 = vmatpush1.msra.mxu0 %v400
    %2052 = vmatprep.subr.mxu0 0.0
    %2053 = vmatpush1.msra.mxu0 %v401
    %2054 = vmatprep.subr.mxu0 0.0
    %2055 = vmatpush1.msra.mxu0 %v402
    %2056 = vmatprep.subr.mxu0 0.0
    %2057 = vmatpush1.msra.mxu0 %v403
    %2058 = vmatprep.subr.mxu0 0.0
    %2059 = vmatpush1.msra.mxu0 %v404
    %2060 = vmatprep.subr.mxu0 0.0
    %2061 = vmatpush1.msra.mxu0 %v405
    %2062 = vmatprep.subr.mxu0 0.0
    %2063 = vmatpush1.msra.mxu0 %v406
    %2064 = vmatprep.subr.mxu0 0.0
    %2065 = vmatpush1.msra.mxu0 0.0
    %2066 = vmatprep.subr.mxu0 0.0
    %2067 = vmatpush1.msra.mxu0 0.0
    %2068 = vmatprep.subr.mxu0 0.0
    %2069 = vmatpush1.msra.mxu0 0.0
    %2070 = vmatprep.subr.mxu0 0.0
    %2071 = vmatpush1.msra.mxu0 0.0
    %2072 = vmatprep.subr.mxu0 0.0
    %2073 = vmatpush1.msra.mxu0 0.0
    %2074 = vmatprep.subr.mxu0 0.0
    %2075 = vmatpush1.msra.mxu0 0.0
    %2076 = vmatprep.subr.mxu0 0.0
    %2077 = vmatpush1.msra.mxu0 0.0
    %2078 = vmatprep.subr.mxu0 0.0
    %2079 = vmatpush1.msra.mxu0 0.0
    %2080 = vmatprep.subr.mxu0 0.0
    %2081 = vmatpush1.msra.mxu0 0.0
    %2082 = vmatprep.subr.mxu0 0.0
    %2083 = vmatpush1.msra.mxu0 0.0
    %2084 = vmatprep.subr.mxu0 0.0
    %2085 = vmatpush1.msra.mxu0 0.0
    %2086 = vmatprep.subr.mxu0 0.0
    %2087 = vmatpush1.msra.mxu0 0.0
    %2088 = vmatprep.subr.mxu0 0.0
    %2089 = vmatpush1.msra.mxu0 0.0
    %2090 = vmatprep.subr.mxu0 0.0
    %2091 = vmatpush1.msra.mxu0 0.0
    %2092 = vmatprep.subr.mxu0 0.0
    %2093 = vmatpush1.msra.mxu0 0.0
    %2094 = vmatprep.subr.mxu0 0.0
    %2095 = vmatpush1.msra.mxu0 0.0
    %2096 = vmatprep.mubr.f32.mxu0 0.0
    %2097 = vmatmul.mubr.f32.gmra.mrb[0].mxu0 %v1813
    %v2098 = vpop.f32.mrb[0].mxu0
    %v2099 = vadd.f32 0.0, %v2098
    %v2100 = vpop.f32.mrb[0].mxu0
    %2101 = vdwg.mxu0
    %2102 = vmatprep.subr.mxu0 0.0
    %2103 = vmatpush1.msra.mxu0 %v407
    %2104 = vmatprep.subr.mxu0 0.0
    %2105 = vmatpush1.msra.mxu0 %v408
    %2106 = vmatprep.subr.mxu0 0.0
    %2107 = vmatpush1.msra.mxu0 %v409
    %2108 = vmatprep.subr.mxu0 0.0
    %2109 = vmatpush1.msra.mxu0 %v410
    %2110 = vmatprep.subr.mxu0 0.0
    %2111 = vmatpush1.msra.mxu0 %v411
    %2112 = vmatprep.subr.mxu0 0.0
    %2113 = vmatpush1.msra.mxu0 %v412
    %2114 = vmatprep.subr.mxu0 0.0
    %2115 = vmatpush1.msra.mxu0 %v413
    %2116 = vmatprep.subr.mxu0 0.0
    %2117 = vmatpush1.msra.mxu0 %v414
    %2118 = vmatprep.subr.mxu0 0.0
    %2119 = vmatpush1.msra.mxu0 %v415
    %2120 = vmatprep.subr.mxu0 0.0
    %2121 = vmatpush1.msra.mxu0 %v416
    %2122 = vmatprep.subr.mxu0 0.0
    %2123 = vmatpush1.msra.mxu0 %v417
    %2124 = vmatprep.subr.mxu0 0.0
    %2125 = vmatpush1.msra.mxu0 %v418
    %2126 = vmatprep.subr.mxu0 0.0
    %2127 = vmatpush1.msra.mxu0 %v419
    %2128 = vmatprep.subr.mxu0 0.0
    %2129 = vmatpush1.msra.mxu0 %v420
    %2130 = vmatprep.subr.mxu0 0.0
    %2131 = vmatpush1.msra.mxu0 %v421
    %2132 = vmatprep.subr.mxu0 0.0
    %2133 = vmatpush1.msra.mxu0 %v422
    %2134 = vmatprep.subr.mxu0 0.0
    %2135 = vmatpush1.msra.mxu0 0.0
    %2136 = vmatprep.subr.mxu0 0.0
    %2137 = vmatpush1.msra.mxu0 0.0
    %2138 = vmatprep.subr.mxu0 0.0
    %2139 = vmatpush1.msra.mxu0 0.0
    %2140 = vmatprep.subr.mxu0 0.0
    %2141 = vmatpush1.msra.mxu0 0.0
    %2142 = vmatprep.subr.mxu0 0.0
    %2143 = vmatpush1.msra.mxu0 0.0
    %2144 = vmatprep.subr.mxu0 0.0
    %2145 = vmatpush1.msra.mxu0 0.0
    %2146 = vmatprep.subr.mxu0 0.0
    %2147 = vmatpush1.msra.mxu0 0.0
    %2148 = vmatprep.subr.mxu0 0.0
    %2149 = vmatpush1.msra.mxu0 0.0
    %2150 = vmatprep.subr.mxu0 0.0
    %2151 = vmatpush1.msra.mxu0 0.0
    %2152 = vmatprep.subr.mxu0 0.0
    %2153 = vmatpush1.msra.mxu0 0.0
    %2154 = vmatprep.subr.mxu0 0.0
    %2155 = vmatpush1.msra.mxu0 0.0
    %2156 = vmatprep.subr.mxu0 0.0
    %2157 = vmatpush1.msra.mxu0 0.0
    %2158 = vmatprep.subr.mxu0 0.0
    %2159 = vmatpush1.msra.mxu0 0.0
    %2160 = vmatprep.subr.mxu0 0.0
    %2161 = vmatpush1.msra.mxu0 0.0
    %2162 = vmatprep.subr.mxu0 0.0
    %2163 = vmatpush1.msra.mxu0 0.0
    %2164 = vmatprep.subr.mxu0 0.0
    %2165 = vmatpush1.msra.mxu0 0.0
    %2166 = vmatprep.mubr.f32.mxu0 0.0
    %2167 = vmatmul.mubr.f32.gmra.mrb[0].mxu0 %v1886
    %v2168 = vpop.f32.mrb[0].mxu0
    %v2169 = vadd.f32 0.0, %v2168
    %v2170 = vpop.f32.mrb[0].mxu0
    %2171 = vdwg.mxu0
    %2172 = vmatprep.subr.mxu0 0.0
    %2173 = vmatpush1.msra.mxu0 %v423
    %2174 = vmatprep.subr.mxu0 0.0
    %2175 = vmatpush1.msra.mxu0 %v424
    %2176 = vmatprep.subr.mxu0 0.0
    %2177 = vmatpush1.msra.mxu0 %v425
    %2178 = vmatprep.subr.mxu0 0.0
    %2179 = vmatpush1.msra.mxu0 %v426
    %2180 = vmatprep.subr.mxu0 0.0
    %2181 = vmatpush1.msra.mxu0 %v427
    %2182 = vmatprep.subr.mxu0 0.0
    %2183 = vmatpush1.msra.mxu0 %v428
    %2184 = vmatprep.subr.mxu0 0.0
    %2185 = vmatpush1.msra.mxu0 %v429
    %2186 = vmatprep.subr.mxu0 0.0
    %2187 = vmatpush1.msra.mxu0 %v430
    %2188 = vmatprep.subr.mxu0 0.0
    %2189 = vmatpush1.msra.mxu0 %v431
    %2190 = vmatprep.subr.mxu0 0.0
    %2191 = vmatpush1.msra.mxu0 %v432
    %2192 = vmatprep.subr.mxu0 0.0
    %2193 = vmatpush1.msra.mxu0 %v433
    %2194 = vmatprep.subr.mxu0 0.0
    %2195 = vmatpush1.msra.mxu0 %v434
    %2196 = vmatprep.subr.mxu0 0.0
    %2197 = vmatpush1.msra.mxu0 %v435
    %2198 = vmatprep.subr.mxu0 0.0
    %2199 = vmatpush1.msra.mxu0 %v436
    %2200 = vmatprep.subr.mxu0 0.0
    %2201 = vmatpush1.msra.mxu0 %v437
    %2202 = vmatprep.subr.mxu0 0.0
    %2203 = vmatpush1.msra.mxu0 %v438
    %2204 = vmatprep.subr.mxu0 0.0
    %2205 = vmatpush1.msra.mxu0 0.0
    %2206 = vmatprep.subr.mxu0 0.0
    %2207 = vmatpush1.msra.mxu0 0.0
    %2208 = vmatprep.subr.mxu0 0.0
    %2209 = vmatpush1.msra.mxu0 0.0
    %2210 = vmatprep.subr.mxu0 0.0
    %2211 = vmatpush1.msra.mxu0 0.0
    %2212 = vmatprep.subr.mxu0 0.0
    %2213 = vmatpush1.msra.mxu0 0.0
    %2214 = vmatprep.subr.mxu0 0.0
    %2215 = vmatpush1.msra.mxu0 0.0
    %2216 = vmatprep.subr.mxu0 0.0
    %2217 = vmatpush1.msra.mxu0 0.0
    %2218 = vmatprep.subr.mxu0 0.0
    %2219 = vmatpush1.msra.mxu0 0.0
    %2220 = vmatprep.subr.mxu0 0.0
    %2221 = vmatpush1.msra.mxu0 0.0
    %2222 = vmatprep.subr.mxu0 0.0
    %2223 = vmatpush1.msra.mxu0 0.0
    %2224 = vmatprep.subr.mxu0 0.0
    %2225 = vmatpush1.msra.mxu0 0.0
    %2226 = vmatprep.subr.mxu0 0.0
    %2227 = vmatpush1.msra.mxu0 0.0
    %2228 = vmatprep.subr.mxu0 0.0
    %2229 = vmatpush1.msra.mxu0 0.0
    %2230 = vmatprep.subr.mxu0 0.0
    %2231 = vmatpush1.msra.mxu0 0.0
    %2232 = vmatprep.subr.mxu0 0.0
    %2233 = vmatpush1.msra.mxu0 0.0
    %2234 = vmatprep.subr.mxu0 0.0
    %2235 = vmatpush1.msra.mxu0 0.0
    %2236 = vmatprep.mubr.f32.mxu0 0.0
    %2237 = vmatmul.mubr.f32.gmra.mrb[0].mxu0 %v1959
    %v2238 = vpop.f32.mrb[0].mxu0
    %v2239 = vadd.f32 0.0, %v2238
    %v2240 = vpop.f32.mrb[0].mxu0
    %2241 = vdwg.mxu0
    %v2242 = vadd.f32 %v2029, %v2099
    %v2243 = vadd.f32 %v2242, %v2169
    %v2244 = vadd.f32 %v2243, %v2239
    %v2246 = vlaneseq
    %v2247 = vshrl.u32 %v2246, 7
    %v2248 = vsub.s32 0, %v2247
    %v2249 = vrot.slane %v439, %v2248
    %v2251 = vadd.f32 %v2244, %v2249
    %v2252 = vadd.f32 %v737, %v2251
    %vm2253 = vcmp.lt.s32.totalorder %v1587, 32
    %v2254 = vsel %vm2253, %v2252, 0.0
    %2255 = vadd.xlane.f32.xlu0 %v2254
    %v2256 = vpop.xlane.xlu0 %2255
    %v2257 = vrcp.pop 32.0
    %v2258 = vmul.f32 %v2256, %v2257
    %v2259 = vsub.f32 %v2252, %v2258
    %v2260 = vsel %vm2253, %v2259, 0.0
    %v2261 = vmul.f32 %v2260, %v2260
    %2262 = vadd.xlane.f32.xlu0 %v2261
    %v2263 = vpop.xlane.xlu0 %2262
    %v2264 = vrcp.pop 31.0
    %v2265 = vmul.f32 %v2263, %v2264
    %v2267 = vlaneseq
    %v2268 = vshrl.u32 %v2267, 7
    %v2269 = vsub.s32 0, %v2268
    %v2270 = vrot.slane %v440, %v2269
    %v2272 = vmul.f32 %v2260, %v2270
    %v2273 = vadd.f32 %v2265, 1e-12
    %v2274 = vrsqrt.pop %v2273
    %v2275 = vmul.f32 %v2272, %v2274
    %v2277 = vlaneseq
    %v2278 = vshrl.u32 %v2277, 7
    %v2279 = vsub.s32 0, %v2278
    %v2280 = vrot.slane %v441, %v2279
    %v2282 = vadd.f32 %v2275, %v2280
    %2283 = vmatprep.subr.mxu0 0.0
    %2284 = vmatpush1.msra.mxu0 %v442
    %2285 = vmatprep.subr.mxu0 0.0
    %2286 = vmatpush1.msra.mxu0 %v443
    %2287 = vmatprep.subr.mxu0 0.0
    %2288 = vmatpush1.msra.mxu0 %v444
    %2289 = vmatprep.subr.mxu0 0.0
    %2290 = vmatpush1.msra.mxu0 %v445
    %2291 = vmatprep.subr.mxu0 0.0
    %2292 = vmatpush1.msra.mxu0 %v446
    %2293 = vmatprep.subr.mxu0 0.0
    %2294 = vmatpush1.msra.mxu0 %v447
    %2295 = vmatprep.subr.mxu0 0.0
    %2296 = vmatpush1.msra.mxu0 %v448
    %2297 = vmatprep.subr.mxu0 0.0
    %2298 = vmatpush1.msra.mxu0 %v449
    %2299 = vmatprep.subr.mxu0 0.0
    %2300 = vmatpush1.msra.mxu0 %v450
    %2301 = vmatprep.subr.mxu0 0.0
    %2302 = vmatpush1.msra.mxu0 %v451
    %2303 = vmatprep.subr.mxu0 0.0
    %2304 = vmatpush1.msra.mxu0 %v452
    %2305 = vmatprep.subr.mxu0 0.0
    %2306 = vmatpush1.msra.mxu0 %v453
    %2307 = vmatprep.subr.mxu0 0.0
    %2308 = vmatpush1.msra.mxu0 %v454
    %2309 = vmatprep.subr.mxu0 0.0
    %2310 = vmatpush1.msra.mxu0 %v455
    %2311 = vmatprep.subr.mxu0 0.0
    %2312 = vmatpush1.msra.mxu0 %v456
    %2313 = vmatprep.subr.mxu0 0.0
    %2314 = vmatpush1.msra.mxu0 %v457
    %2315 = vmatprep.subr.mxu0 0.0
    %2316 = vmatpush1.msra.mxu0 0.0
    %2317 = vmatprep.subr.mxu0 0.0
    %2318 = vmatpush1.msra.mxu0 0.0
    %2319 = vmatprep.subr.mxu0 0.0
    %2320 = vmatpush1.msra.mxu0 0.0
    %2321 = vmatprep.subr.mxu0 0.0
    %2322 = vmatpush1.msra.mxu0 0.0
    %2323 = vmatprep.subr.mxu0 0.0
    %2324 = vmatpush1.msra.mxu0 0.0
    %2325 = vmatprep.subr.mxu0 0.0
    %2326 = vmatpush1.msra.mxu0 0.0
    %2327 = vmatprep.subr.mxu0 0.0
    %2328 = vmatpush1.msra.mxu0 0.0
    %2329 = vmatprep.subr.mxu0 0.0
    %2330 = vmatpush1.msra.mxu0 0.0
    %2331 = vmatprep.subr.mxu0 0.0
    %2332 = vmatpush1.msra.mxu0 0.0
    %2333 = vmatprep.subr.mxu0 0.0
    %2334 = vmatpush1.msra.mxu0 0.0
    %2335 = vmatprep.subr.mxu0 0.0
    %2336 = vmatpush1.msra.mxu0 0.0
    %2337 = vmatprep.subr.mxu0 0.0
    %2338 = vmatpush1.msra.mxu0 0.0
    %2339 = vmatprep.subr.mxu0 0.0
    %2340 = vmatpush1.msra.mxu0 0.0
    %2341 = vmatprep.subr.mxu0 0.0
    %2342 = vmatpush1.msra.mxu0 0.0
    %2343 = vmatprep.subr.mxu0 0.0
    %2344 = vmatpush1.msra.mxu0 0.0
    %2345 = vmatprep.subr.mxu0 0.0
    %2346 = vmatpush1.msra.mxu0 0.0
    %2347 = vmatprep.mubr.f32.mxu0 0.0
    %2348 = vmatmul.mubr.f32.gmra.mrb[0].mxu0 %v2282
    %v2349 = vpop.f32.mrb[0].mxu0
    %v2350 = vadd.f32 0.0, %v2349
    %v2351 = vpop.f32.mrb[0].mxu0
    %2352 = vdwg.mxu0
    %2353 = vmatprep.subr.mxu0 0.0
    %2354 = vmatpush1.msra.mxu0 %v458
    %2355 = vmatprep.subr.mxu0 0.0
    %2356 = vmatpush1.msra.mxu0 %v459
    %2357 = vmatprep.subr.mxu0 0.0
    %2358 = vmatpush1.msra.mxu0 %v460
    %2359 = vmatprep.subr.mxu0 0.0
    %2360 = vmatpush1.msra.mxu0 %v461
    %2361 = vmatprep.subr.mxu0 0.0
    %2362 = vmatpush1.msra.mxu0 %v462
    %2363 = vmatprep.subr.mxu0 0.0
    %2364 = vmatpush1.msra.mxu0 %v463
    %2365 = vmatprep.subr.mxu0 0.0
    %2366 = vmatpush1.msra.mxu0 %v464
    %2367 = vmatprep.subr.mxu0 0.0
    %2368 = vmatpush1.msra.mxu0 %v465
    %2369 = vmatprep.subr.mxu0 0.0
    %2370 = vmatpush1.msra.mxu0 %v466
    %2371 = vmatprep.subr.mxu0 0.0
    %2372 = vmatpush1.msra.mxu0 %v467
    %2373 = vmatprep.subr.mxu0 0.0
    %2374 = vmatpush1.msra.mxu0 %v468
    %2375 = vmatprep.subr.mxu0 0.0
    %2376 = vmatpush1.msra.mxu0 %v469
    %2377 = vmatprep.subr.mxu0 0.0
    %2378 = vmatpush1.msra.mxu0 %v470
    %2379 = vmatprep.subr.mxu0 0.0
    %2380 = vmatpush1.msra.mxu0 %v471
    %2381 = vmatprep.subr.mxu0 0.0
    %2382 = vmatpush1.msra.mxu0 %v472
    %2383 = vmatprep.subr.mxu0 0.0
    %2384 = vmatpush1.msra.mxu0 %v473
    %2385 = vmatprep.subr.mxu0 0.0
    %2386 = vmatpush1.msra.mxu0 0.0
    %2387 = vmatprep.subr.mxu0 0.0
    %2388 = vmatpush1.msra.mxu0 0.0
    %2389 = vmatprep.subr.mxu0 0.0
    %2390 = vmatpush1.msra.mxu0 0.0
    %2391 = vmatprep.subr.mxu0 0.0
    %2392 = vmatpush1.msra.mxu0 0.0
    %2393 = vmatprep.subr.mxu0 0.0
    %2394 = vmatpush1.msra.mxu0 0.0
    %2395 = vmatprep.subr.mxu0 0.0
    %2396 = vmatpush1.msra.mxu0 0.0
    %2397 = vmatprep.subr.mxu0 0.0
    %2398 = vmatpush1.msra.mxu0 0.0
    %2399 = vmatprep.subr.mxu0 0.0
    %2400 = vmatpush1.msra.mxu0 0.0
    %2401 = vmatprep.subr.mxu0 0.0
    %2402 = vmatpush1.msra.mxu0 0.0
    %2403 = vmatprep.subr.mxu0 0.0
    %2404 = vmatpush1.msra.mxu0 0.0
    %2405 = vmatprep.subr.mxu0 0.0
    %2406 = vmatpush1.msra.mxu0 0.0
    %2407 = vmatprep.subr.mxu0 0.0
    %2408 = vmatpush1.msra.mxu0 0.0
    %2409 = vmatprep.subr.mxu0 0.0
    %2410 = vmatpush1.msra.mxu0 0.0
    %2411 = vmatprep.subr.mxu0 0.0
    %2412 = vmatpush1.msra.mxu0 0.0
    %2413 = vmatprep.subr.mxu0 0.0
    %2414 = vmatpush1.msra.mxu0 0.0
    %2415 = vmatprep.subr.mxu0 0.0
    %2416 = vmatpush1.msra.mxu0 0.0
    %2417 = vmatprep.mubr.f32.mxu0 0.0
    %2418 = vmatmul.mubr.f32.gmra.mrb[0].mxu0 %v2282
    %v2419 = vpop.f32.mrb[0].mxu0
    %v2420 = vadd.f32 0.0, %v2419
    %v2421 = vpop.f32.mrb[0].mxu0
    %2422 = vdwg.mxu0
    %2423 = vmatprep.subr.mxu0 0.0
    %2424 = vmatpush1.msra.mxu0 %v474
    %2425 = vmatprep.subr.mxu0 0.0
    %2426 = vmatpush1.msra.mxu0 %v475
    %2427 = vmatprep.subr.mxu0 0.0
    %2428 = vmatpush1.msra.mxu0 %v476
    %2429 = vmatprep.subr.mxu0 0.0
    %2430 = vmatpush1.msra.mxu0 %v477
    %2431 = vmatprep.subr.mxu0 0.0
    %2432 = vmatpush1.msra.mxu0 %v478
    %2433 = vmatprep.subr.mxu0 0.0
    %2434 = vmatpush1.msra.mxu0 %v479
    %2435 = vmatprep.subr.mxu0 0.0
    %2436 = vmatpush1.msra.mxu0 %v480
    %2437 = vmatprep.subr.mxu0 0.0
    %2438 = vmatpush1.msra.mxu0 %v481
    %2439 = vmatprep.subr.mxu0 0.0
    %2440 = vmatpush1.msra.mxu0 %v482
    %2441 = vmatprep.subr.mxu0 0.0
    %2442 = vmatpush1.msra.mxu0 %v483
    %2443 = vmatprep.subr.mxu0 0.0
    %2444 = vmatpush1.msra.mxu0 %v484
    %2445 = vmatprep.subr.mxu0 0.0
    %2446 = vmatpush1.msra.mxu0 %v485
    %2447 = vmatprep.subr.mxu0 0.0
    %2448 = vmatpush1.msra.mxu0 %v486
    %2449 = vmatprep.subr.mxu0 0.0
    %2450 = vmatpush1.msra.mxu0 %v487
    %2451 = vmatprep.subr.mxu0 0.0
    %2452 = vmatpush1.msra.mxu0 %v488
    %2453 = vmatprep.subr.mxu0 0.0
    %2454 = vmatpush1.msra.mxu0 %v489
    %2455 = vmatprep.subr.mxu0 0.0
    %2456 = vmatpush1.msra.mxu0 0.0
    %2457 = vmatprep.subr.mxu0 0.0
    %2458 = vmatpush1.msra.mxu0 0.0
    %2459 = vmatprep.subr.mxu0 0.0
    %2460 = vmatpush1.msra.mxu0 0.0
    %2461 = vmatprep.subr.mxu0 0.0
    %2462 = vmatpush1.msra.mxu0 0.0
    %2463 = vmatprep.subr.mxu0 0.0
    %2464 = vmatpush1.msra.mxu0 0.0
    %2465 = vmatprep.subr.mxu0 0.0
    %2466 = vmatpush1.msra.mxu0 0.0
    %2467 = vmatprep.subr.mxu0 0.0
    %2468 = vmatpush1.msra.mxu0 0.0
    %2469 = vmatprep.subr.mxu0 0.0
    %2470 = vmatpush1.msra.mxu0 0.0
    %2471 = vmatprep.subr.mxu0 0.0
    %2472 = vmatpush1.msra.mxu0 0.0
    %2473 = vmatprep.subr.mxu0 0.0
    %2474 = vmatpush1.msra.mxu0 0.0
    %2475 = vmatprep.subr.mxu0 0.0
    %2476 = vmatpush1.msra.mxu0 0.0
    %2477 = vmatprep.subr.mxu0 0.0
    %2478 = vmatpush1.msra.mxu0 0.0
    %2479 = vmatprep.subr.mxu0 0.0
    %2480 = vmatpush1.msra.mxu0 0.0
    %2481 = vmatprep.subr.mxu0 0.0
    %2482 = vmatpush1.msra.mxu0 0.0
    %2483 = vmatprep.subr.mxu0 0.0
    %2484 = vmatpush1.msra.mxu0 0.0
    %2485 = vmatprep.subr.mxu0 0.0
    %2486 = vmatpush1.msra.mxu0 0.0
    %2487 = vmatprep.mubr.f32.mxu0 0.0
    %2488 = vmatmul.mubr.f32.gmra.mrb[0].mxu0 %v2282
    %v2489 = vpop.f32.mrb[0].mxu0
    %v2490 = vadd.f32 0.0, %v2489
    %v2491 = vpop.f32.mrb[0].mxu0
    %2492 = vdwg.mxu0
    %2493 = vmatprep.subr.mxu0 0.0
    %2494 = vmatpush1.msra.mxu0 %v490
    %2495 = vmatprep.subr.mxu0 0.0
    %2496 = vmatpush1.msra.mxu0 %v491
    %2497 = vmatprep.subr.mxu0 0.0
    %2498 = vmatpush1.msra.mxu0 %v492
    %2499 = vmatprep.subr.mxu0 0.0
    %2500 = vmatpush1.msra.mxu0 %v493
    %2501 = vmatprep.subr.mxu0 0.0
    %2502 = vmatpush1.msra.mxu0 %v494
    %2503 = vmatprep.subr.mxu0 0.0
    %2504 = vmatpush1.msra.mxu0 %v495
    %2505 = vmatprep.subr.mxu0 0.0
    %2506 = vmatpush1.msra.mxu0 %v496
    %2507 = vmatprep.subr.mxu0 0.0
    %2508 = vmatpush1.msra.mxu0 %v497
    %2509 = vmatprep.subr.mxu0 0.0
    %2510 = vmatpush1.msra.mxu0 %v498
    %2511 = vmatprep.subr.mxu0 0.0
    %2512 = vmatpush1.msra.mxu0 %v499
    %2513 = vmatprep.subr.mxu0 0.0
    %2514 = vmatpush1.msra.mxu0 %v500
    %2515 = vmatprep.subr.mxu0 0.0
    %2516 = vmatpush1.msra.mxu0 %v501
    %2517 = vmatprep.subr.mxu0 0.0
    %2518 = vmatpush1.msra.mxu0 %v502
    %2519 = vmatprep.subr.mxu0 0.0
    %2520 = vmatpush1.msra.mxu0 %v503
    %2521 = vmatprep.subr.mxu0 0.0
    %2522 = vmatpush1.msra.mxu0 %v504
    %2523 = vmatprep.subr.mxu0 0.0
    %2524 = vmatpush1.msra.mxu0 %v505
    %2525 = vmatprep.subr.mxu0 0.0
    %2526 = vmatpush1.msra.mxu0 0.0
    %2527 = vmatprep.subr.mxu0 0.0
    %2528 = vmatpush1.msra.mxu0 0.0
    %2529 = vmatprep.subr.mxu0 0.0
    %2530 = vmatpush1.msra.mxu0 0.0
    %2531 = vmatprep.subr.mxu0 0.0
    %2532 = vmatpush1.msra.mxu0 0.0
    %2533 = vmatprep.subr.mxu0 0.0
    %2534 = vmatpush1.msra.mxu0 0.0
    %2535 = vmatprep.subr.mxu0 0.0
    %2536 = vmatpush1.msra.mxu0 0.0
    %2537 = vmatprep.subr.mxu0 0.0
    %2538 = vmatpush1.msra.mxu0 0.0
    %2539 = vmatprep.subr.mxu0 0.0
    %2540 = vmatpush1.msra.mxu0 0.0
    %2541 = vmatprep.subr.mxu0 0.0
    %2542 = vmatpush1.msra.mxu0 0.0
    %2543 = vmatprep.subr.mxu0 0.0
    %2544 = vmatpush1.msra.mxu0 0.0
    %2545 = vmatprep.subr.mxu0 0.0
    %2546 = vmatpush1.msra.mxu0 0.0
    %2547 = vmatprep.subr.mxu0 0.0
    %2548 = vmatpush1.msra.mxu0 0.0
    %2549 = vmatprep.subr.mxu0 0.0
    %2550 = vmatpush1.msra.mxu0 0.0
    %2551 = vmatprep.subr.mxu0 0.0
    %2552 = vmatpush1.msra.mxu0 0.0
    %2553 = vmatprep.subr.mxu0 0.0
    %2554 = vmatpush1.msra.mxu0 0.0
    %2555 = vmatprep.subr.mxu0 0.0
    %2556 = vmatpush1.msra.mxu0 0.0
    %2557 = vmatprep.mubr.f32.mxu0 0.0
    %2558 = vmatmul.mubr.f32.gmra.mrb[0].mxu0 %v2282
    %v2559 = vpop.f32.mrb[0].mxu0
    %v2560 = vadd.f32 0.0, %v2559
    %v2561 = vpop.f32.mrb[0].mxu0
    %2562 = vdwg.mxu0
    %2563 = vmatprep.subr.mxu0 %v507
    %2564 = vmatpush1.msra.mxu0 %v506
    %2565 = vmatprep.subr.mxu0 %v509
    %2566 = vmatpush1.msra.mxu0 %v508
    %2567 = vmatprep.subr.mxu0 %v511
    %2568 = vmatpush1.msra.mxu0 %v510
    %2569 = vmatprep.subr.mxu0 %v513
    %2570 = vmatpush1.msra.mxu0 %v512
    %2571 = vmatprep.subr.mxu0 %v515
    %2572 = vmatpush1.msra.mxu0 %v514
    %2573 = vmatprep.subr.mxu0 %v517
    %2574 = vmatpush1.msra.mxu0 %v516
    %2575 = vmatprep.subr.mxu0 %v519
    %2576 = vmatpush1.msra.mxu0 %v518
    %2577 = vmatprep.subr.mxu0 %v521
    %2578 = vmatpush1.msra.mxu0 %v520
    %2579 = vmatprep.subr.mxu0 %v523
    %2580 = vmatpush1.msra.mxu0 %v522
    %2581 = vmatprep.subr.mxu0 %v525
    %2582 = vmatpush1.msra.mxu0 %v524
    %2583 = vmatprep.subr.mxu0 %v527
    %2584 = vmatpush1.msra.mxu0 %v526
    %2585 = vmatprep.subr.mxu0 %v529
    %2586 = vmatpush1.msra.mxu0 %v528
    %2587 = vmatprep.subr.mxu0 %v531
    %2588 = vmatpush1.msra.mxu0 %v530
    %2589 = vmatprep.subr.mxu0 %v533
    %2590 = vmatpush1.msra.mxu0 %v532
    %2591 = vmatprep.subr.mxu0 %v535
    %2592 = vmatpush1.msra.mxu0 %v534
    %2593 = vmatprep.subr.mxu0 %v537
    %2594 = vmatpush1.msra.mxu0 %v536
    %2595 = vmatprep.subr.mxu0 0.0
    %2596 = vmatpush1.msra.mxu0 0.0
    %2597 = vmatprep.subr.mxu0 0.0
    %2598 = vmatpush1.msra.mxu0 0.0
    %2599 = vmatprep.subr.mxu0 0.0
    %2600 = vmatpush1.msra.mxu0 0.0
    %2601 = vmatprep.subr.mxu0 0.0
    %2602 = vmatpush1.msra.mxu0 0.0
    %2603 = vmatprep.subr.mxu0 0.0
    %2604 = vmatpush1.msra.mxu0 0.0
    %2605 = vmatprep.subr.mxu0 0.0
    %2606 = vmatpush1.msra.mxu0 0.0
    %2607 = vmatprep.subr.mxu0 0.0
    %2608 = vmatpush1.msra.mxu0 0.0
    %2609 = vmatprep.subr.mxu0 0.0
    %2610 = vmatpush1.msra.mxu0 0.0
    %2611 = vmatprep.subr.mxu0 0.0
    %2612 = vmatpush1.msra.mxu0 0.0
    %2613 = vmatprep.subr.mxu0 0.0
    %2614 = vmatpush1.msra.mxu0 0.0
    %2615 = vmatprep.subr.mxu0 0.0
    %2616 = vmatpush1.msra.mxu0 0.0
    %2617 = vmatprep.subr.mxu0 0.0
    %2618 = vmatpush1.msra.mxu0 0.0
    %2619 = vmatprep.subr.mxu0 0.0
    %2620 = vmatpush1.msra.mxu0 0.0
    %2621 = vmatprep.subr.mxu0 0.0
    %2622 = vmatpush1.msra.mxu0 0.0
    %2623 = vmatprep.subr.mxu0 0.0
    %2624 = vmatpush1.msra.mxu0 0.0
    %2625 = vmatprep.subr.mxu0 0.0
    %2626 = vmatpush1.msra.mxu0 0.0
    %2627 = vmatprep.mubr.f32.mxu0 0.0
    %2628 = vmatmul.mubr.f32.gmra.mrb[0].mxu0 %v738
    %v2629 = vpop.f32.mrb[0].mxu0
    %v2630 = vadd.f32 0.0, %v2629
    %v2631 = vpop.f32.mrb[0].mxu0
    %v2632 = vadd.f32 0.0, %v2631
    %2633 = vmatprep.mubr.f32.mxu0 0.0
    %2634 = vmatmul.mubr.f32.gmra.mrb[0].mxu0 %v739
    %v2635 = vpop.f32.mrb[0].mxu0
    %v2636 = vadd.f32 0.0, %v2635
    %v2637 = vpop.f32.mrb[0].mxu0
    %v2638 = vadd.f32 0.0, %v2637
    %2639 = vdwg.mxu0
    %2640 = vmatprep.subr.mxu0 %v539
    %2641 = vmatpush1.msra.mxu0 %v538
    %2642 = vmatprep.subr.mxu0 %v541
    %2643 = vmatpush1.msra.mxu0 %v540
    %2644 = vmatprep.subr.mxu0 %v543
    %2645 = vmatpush1.msra.mxu0 %v542
    %2646 = vmatprep.subr.mxu0 %v545
    %2647 = vmatpush1.msra.mxu0 %v544
    %2648 = vmatprep.subr.mxu0 %v547
    %2649 = vmatpush1.msra.mxu0 %v546
    %2650 = vmatprep.subr.mxu0 %v549
    %2651 = vmatpush1.msra.mxu0 %v548
    %2652 = vmatprep.subr.mxu0 %v551
    %2653 = vmatpush1.msra.mxu0 %v550
    %2654 = vmatprep.subr.mxu0 %v553
    %2655 = vmatpush1.msra.mxu0 %v552
    %2656 = vmatprep.subr.mxu0 %v555
    %2657 = vmatpush1.msra.mxu0 %v554
    %2658 = vmatprep.subr.mxu0 %v557
    %2659 = vmatpush1.msra.mxu0 %v556
    %2660 = vmatprep.subr.mxu0 %v559
    %2661 = vmatpush1.msra.mxu0 %v558
    %2662 = vmatprep.subr.mxu0 %v561
    %2663 = vmatpush1.msra.mxu0 %v560
    %2664 = vmatprep.subr.mxu0 %v563
    %2665 = vmatpush1.msra.mxu0 %v562
    %2666 = vmatprep.subr.mxu0 %v565
    %2667 = vmatpush1.msra.mxu0 %v564
    %2668 = vmatprep.subr.mxu0 %v567
    %2669 = vmatpush1.msra.mxu0 %v566
    %2670 = vmatprep.subr.mxu0 %v569
    %2671 = vmatpush1.msra.mxu0 %v568
    %2672 = vmatprep.subr.mxu0 0.0
    %2673 = vmatpush1.msra.mxu0 0.0
    %2674 = vmatprep.subr.mxu0 0.0
    %2675 = vmatpush1.msra.mxu0 0.0
    %2676 = vmatprep.subr.mxu0 0.0
    %2677 = vmatpush1.msra.mxu0 0.0
    %2678 = vmatprep.subr.mxu0 0.0
    %2679 = vmatpush1.msra.mxu0 0.0
    %2680 = vmatprep.subr.mxu0 0.0
    %2681 = vmatpush1.msra.mxu0 0.0
    %2682 = vmatprep.subr.mxu0 0.0
    %2683 = vmatpush1.msra.mxu0 0.0
    %2684 = vmatprep.subr.mxu0 0.0
    %2685 = vmatpush1.msra.mxu0 0.0
    %2686 = vmatprep.subr.mxu0 0.0
    %2687 = vmatpush1.msra.mxu0 0.0
    %2688 = vmatprep.subr.mxu0 0.0
    %2689 = vmatpush1.msra.mxu0 0.0
    %2690 = vmatprep.subr.mxu0 0.0
    %2691 = vmatpush1.msra.mxu0 0.0
    %2692 = vmatprep.subr.mxu0 0.0
    %2693 = vmatpush1.msra.mxu0 0.0
    %2694 = vmatprep.subr.mxu0 0.0
    %2695 = vmatpush1.msra.mxu0 0.0
    %2696 = vmatprep.subr.mxu0 0.0
    %2697 = vmatpush1.msra.mxu0 0.0
    %2698 = vmatprep.subr.mxu0 0.0
    %2699 = vmatpush1.msra.mxu0 0.0
    %2700 = vmatprep.subr.mxu0 0.0
    %2701 = vmatpush1.msra.mxu0 0.0
    %2702 = vmatprep.subr.mxu0 0.0
    %2703 = vmatpush1.msra.mxu0 0.0
    %2704 = vmatprep.mubr.f32.mxu0 0.0
    %2705 = vmatmul.mubr.f32.gmra.mrb[0].mxu0 %v738
    %v2706 = vpop.f32.mrb[0].mxu0
    %v2707 = vadd.f32 0.0, %v2706
    %v2708 = vpop.f32.mrb[0].mxu0
    %v2709 = vadd.f32 0.0, %v2708
    %2710 = vmatprep.mubr.f32.mxu0 0.0
    %2711 = vmatmul.mubr.f32.gmra.mrb[0].mxu0 %v739
    %v2712 = vpop.f32.mrb[0].mxu0
    %v2713 = vadd.f32 0.0, %v2712
    %v2714 = vpop.f32.mrb[0].mxu0
    %v2715 = vadd.f32 0.0, %v2714
    %2716 = vdwg.mxu0
    %2717 = vmatprep.subr.mxu0 %v571
    %2718 = vmatpush1.msra.mxu0 %v570
    %2719 = vmatprep.subr.mxu0 %v573
    %2720 = vmatpush1.msra.mxu0 %v572
    %2721 = vmatprep.subr.mxu0 %v575
    %2722 = vmatpush1.msra.mxu0 %v574
    %2723 = vmatprep.subr.mxu0 %v577
    %2724 = vmatpush1.msra.mxu0 %v576
    %2725 = vmatprep.subr.mxu0 %v579
    %2726 = vmatpush1.msra.mxu0 %v578
    %2727 = vmatprep.subr.mxu0 %v581
    %2728 = vmatpush1.msra.mxu0 %v580
    %2729 = vmatprep.subr.mxu0 %v583
    %2730 = vmatpush1.msra.mxu0 %v582
    %2731 = vmatprep.subr.mxu0 %v585
    %2732 = vmatpush1.msra.mxu0 %v584
    %2733 = vmatprep.subr.mxu0 %v587
    %2734 = vmatpush1.msra.mxu0 %v586
    %2735 = vmatprep.subr.mxu0 %v589
    %2736 = vmatpush1.msra.mxu0 %v588
    %2737 = vmatprep.subr.mxu0 %v591
    %2738 = vmatpush1.msra.mxu0 %v590
    %2739 = vmatprep.subr.mxu0 %v593
    %2740 = vmatpush1.msra.mxu0 %v592
    %2741 = vmatprep.subr.mxu0 %v595
    %2742 = vmatpush1.msra.mxu0 %v594
    %2743 = vmatprep.subr.mxu0 %v597
    %2744 = vmatpush1.msra.mxu0 %v596
    %2745 = vmatprep.subr.mxu0 %v599
    %2746 = vmatpush1.msra.mxu0 %v598
    %2747 = vmatprep.subr.mxu0 %v601
    %2748 = vmatpush1.msra.mxu0 %v600
    %2749 = vmatprep.subr.mxu0 0.0
    %2750 = vmatpush1.msra.mxu0 0.0
    %2751 = vmatprep.subr.mxu0 0.0
    %2752 = vmatpush1.msra.mxu0 0.0
    %2753 = vmatprep.subr.mxu0 0.0
    %2754 = vmatpush1.msra.mxu0 0.0
    %2755 = vmatprep.subr.mxu0 0.0
    %2756 = vmatpush1.msra.mxu0 0.0
    %2757 = vmatprep.subr.mxu0 0.0
    %2758 = vmatpush1.msra.mxu0 0.0
    %2759 = vmatprep.subr.mxu0 0.0
    %2760 = vmatpush1.msra.mxu0 0.0
    %2761 = vmatprep.subr.mxu0 0.0
    %2762 = vmatpush1.msra.mxu0 0.0
    %2763 = vmatprep.subr.mxu0 0.0
    %2764 = vmatpush1.msra.mxu0 0.0
    %2765 = vmatprep.subr.mxu0 0.0
    %2766 = vmatpush1.msra.mxu0 0.0
    %2767 = vmatprep.subr.mxu0 0.0
    %2768 = vmatpush1.msra.mxu0 0.0
    %2769 = vmatprep.subr.mxu0 0.0
    %2770 = vmatpush1.msra.mxu0 0.0
    %2771 = vmatprep.subr.mxu0 0.0
    %2772 = vmatpush1.msra.mxu0 0.0
    %2773 = vmatprep.subr.mxu0 0.0
    %2774 = vmatpush1.msra.mxu0 0.0
    %2775 = vmatprep.subr.mxu0 0.0
    %2776 = vmatpush1.msra.mxu0 0.0
    %2777 = vmatprep.subr.mxu0 0.0
    %2778 = vmatpush1.msra.mxu0 0.0
    %2779 = vmatprep.subr.mxu0 0.0
    %2780 = vmatpush1.msra.mxu0 0.0
    %2781 = vmatprep.mubr.f32.mxu0 0.0
    %2782 = vmatmul.mubr.f32.gmra.mrb[0].mxu0 %v738
    %v2783 = vpop.f32.mrb[0].mxu0
    %v2784 = vadd.f32 0.0, %v2783
    %v2785 = vpop.f32.mrb[0].mxu0
    %v2786 = vadd.f32 0.0, %v2785
    %2787 = vmatprep.mubr.f32.mxu0 0.0
    %2788 = vmatmul.mubr.f32.gmra.mrb[0].mxu0 %v739
    %v2789 = vpop.f32.mrb[0].mxu0
    %v2790 = vadd.f32 0.0, %v2789
    %v2791 = vpop.f32.mrb[0].mxu0
    %v2792 = vadd.f32 0.0, %v2791
    %2793 = vdwg.mxu0
    %2794 = vmatprep.subr.mxu0 %v603
    %2795 = vmatpush1.msra.mxu0 %v602
    %2796 = vmatprep.subr.mxu0 %v605
    %2797 = vmatpush1.msra.mxu0 %v604
    %2798 = vmatprep.subr.mxu0 %v607
    %2799 = vmatpush1.msra.mxu0 %v606
    %2800 = vmatprep.subr.mxu0 %v609
    %2801 = vmatpush1.msra.mxu0 %v608
    %2802 = vmatprep.subr.mxu0 %v611
    %2803 = vmatpush1.msra.mxu0 %v610
    %2804 = vmatprep.subr.mxu0 %v613
    %2805 = vmatpush1.msra.mxu0 %v612
    %2806 = vmatprep.subr.mxu0 %v615
    %2807 = vmatpush1.msra.mxu0 %v614
    %2808 = vmatprep.subr.mxu0 %v617
    %2809 = vmatpush1.msra.mxu0 %v616
    %2810 = vmatprep.subr.mxu0 %v619
    %2811 = vmatpush1.msra.mxu0 %v618
    %2812 = vmatprep.subr.mxu0 %v621
    %2813 = vmatpush1.msra.mxu0 %v620
    %2814 = vmatprep.subr.mxu0 %v623
    %2815 = vmatpush1.msra.mxu0 %v622
    %2816 = vmatprep.subr.mxu0 %v625
    %2817 = vmatpush1.msra.mxu0 %v624
    %2818 = vmatprep.subr.mxu0 %v627
    %2819 = vmatpush1.msra.mxu0 %v626
    %2820 = vmatprep.subr.mxu0 %v629
    %2821 = vmatpush1.msra.mxu0 %v628
    %2822 = vmatprep.subr.mxu0 %v631
    %2823 = vmatpush1.msra.mxu0 %v630
    %2824 = vmatprep.subr.mxu0 %v633
    %2825 = vmatpush1.msra.mxu0 %v632
    %2826 = vmatprep.subr.mxu0 0.0
    %2827 = vmatpush1.msra.mxu0 0.0
    %2828 = vmatprep.subr.mxu0 0.0
    %2829 = vmatpush1.msra.mxu0 0.0
    %2830 = vmatprep.subr.mxu0 0.0
    %2831 = vmatpush1.msra.mxu0 0.0
    %2832 = vmatprep.subr.mxu0 0.0
    %2833 = vmatpush1.msra.mxu0 0.0
    %2834 = vmatprep.subr.mxu0 0.0
    %2835 = vmatpush1.msra.mxu0 0.0
    %2836 = vmatprep.subr.mxu0 0.0
    %2837 = vmatpush1.msra.mxu0 0.0
    %2838 = vmatprep.subr.mxu0 0.0
    %2839 = vmatpush1.msra.mxu0 0.0
    %2840 = vmatprep.subr.mxu0 0.0
    %2841 = vmatpush1.msra.mxu0 0.0
    %2842 = vmatprep.subr.mxu0 0.0
    %2843 = vmatpush1.msra.mxu0 0.0
    %2844 = vmatprep.subr.mxu0 0.0
    %2845 = vmatpush1.msra.mxu0 0.0
    %2846 = vmatprep.subr.mxu0 0.0
    %2847 = vmatpush1.msra.mxu0 0.0
    %2848 = vmatprep.subr.mxu0 0.0
    %2849 = vmatpush1.msra.mxu0 0.0
    %2850 = vmatprep.subr.mxu0 0.0
    %2851 = vmatpush1.msra.mxu0 0.0
    %2852 = vmatprep.subr.mxu0 0.0
    %2853 = vmatpush1.msra.mxu0 0.0
    %2854 = vmatprep.subr.mxu0 0.0
    %2855 = vmatpush1.msra.mxu0 0.0
    %2856 = vmatprep.subr.mxu0 0.0
    %2857 = vmatpush1.msra.mxu0 0.0
    %2858 = vmatprep.mubr.f32.mxu0 0.0
    %2859 = vmatmul.mubr.f32.gmra.mrb[0].mxu0 %v738
    %v2860 = vpop.f32.mrb[0].mxu0
    %v2861 = vadd.f32 0.0, %v2860
    %v2862 = vpop.f32.mrb[0].mxu0
    %v2863 = vadd.f32 0.0, %v2862
    %2864 = vmatprep.mubr.f32.mxu0 0.0
    %2865 = vmatmul.mubr.f32.gmra.mrb[0].mxu0 %v739
    %v2866 = vpop.f32.mrb[0].mxu0
    %v2867 = vadd.f32 0.0, %v2866
    %v2868 = vpop.f32.mrb[0].mxu0
    %v2869 = vadd.f32 0.0, %v2868
    %2870 = vdwg.mxu0
    %2871 = vmatprep.subr.mxu0 0.0
    %2872 = vmatpush1.xpose.msra.mxu0 %v2630
    %2873 = vmatprep.subr.mxu0 0.0
    %2874 = vmatpush1.xpose.msra.mxu0 %v2636
    %2875 = vmatprep.subr.mxu0 0.0
    %2876 = vmatpush1.xpose.msra.mxu0 0.0
    %2877 = vmatprep.subr.mxu0 0.0
    %2878 = vmatpush1.xpose.msra.mxu0 0.0
    %2879 = vmatprep.subr.mxu0 0.0
    %2880 = vmatpush1.xpose.msra.mxu0 0.0
    %2881 = vmatprep.subr.mxu0 0.0
    %2882 = vmatpush1.xpose.msra.mxu0 0.0
    %2883 = vmatprep.subr.mxu0 0.0
    %2884 = vmatpush1.xpose.msra.mxu0 0.0
    %2885 = vmatprep.subr.mxu0 0.0
    %2886 = vmatpush1.xpose.msra.mxu0 0.0
    %2887 = vmatprep.subr.mxu0 0.0
    %2888 = vmatpush1.xpose.msra.mxu0 0.0
    %2889 = vmatprep.subr.mxu0 0.0
    %2890 = vmatpush1.xpose.msra.mxu0 0.0
    %2891 = vmatprep.subr.mxu0 0.0
    %2892 = vmatpush1.xpose.msra.mxu0 0.0
    %2893 = vmatprep.subr.mxu0 0.0
    %2894 = vmatpush1.xpose.msra.mxu0 0.0
    %2895 = vmatprep.subr.mxu0 0.0
    %2896 = vmatpush1.xpose.msra.mxu0 0.0
    %2897 = vmatprep.subr.mxu0 0.0
    %2898 = vmatpush1.xpose.msra.mxu0 0.0
    %2899 = vmatprep.subr.mxu0 0.0
    %2900 = vmatpush1.xpose.msra.mxu0 0.0
    %2901 = vmatprep.subr.mxu0 0.0
    %2902 = vmatpush1.xpose.msra.mxu0 0.0
    %2903 = vmatprep.subr.mxu0 0.0
    %2904 = vmatpush1.xpose.msra.mxu0 0.0
    %2905 = vmatprep.subr.mxu0 0.0
    %2906 = vmatpush1.xpose.msra.mxu0 0.0
    %2907 = vmatprep.subr.mxu0 0.0
    %2908 = vmatpush1.xpose.msra.mxu0 0.0
    %2909 = vmatprep.subr.mxu0 0.0
    %2910 = vmatpush1.xpose.msra.mxu0 0.0
    %2911 = vmatprep.subr.mxu0 0.0
    %2912 = vmatpush1.xpose.msra.mxu0 0.0
    %2913 = vmatprep.subr.mxu0 0.0
    %2914 = vmatpush1.xpose.msra.mxu0 0.0
    %2915 = vmatprep.subr.mxu0 0.0
    %2916 = vmatpush1.xpose.msra.mxu0 0.0
    %2917 = vmatprep.subr.mxu0 0.0
    %2918 = vmatpush1.xpose.msra.mxu0 0.0
    %2919 = vmatprep.subr.mxu0 0.0
    %2920 = vmatpush1.xpose.msra.mxu0 0.0
    %2921 = vmatprep.subr.mxu0 0.0
    %2922 = vmatpush1.xpose.msra.mxu0 0.0
    %2923 = vmatprep.subr.mxu0 0.0
    %2924 = vmatpush1.xpose.msra.mxu0 0.0
    %2925 = vmatprep.subr.mxu0 0.0
    %2926 = vmatpush1.xpose.msra.mxu0 0.0
    %2927 = vmatprep.subr.mxu0 0.0
    %2928 = vmatpush1.xpose.msra.mxu0 0.0
    %2929 = vmatprep.subr.mxu0 0.0
    %2930 = vmatpush1.xpose.msra.mxu0 0.0
    %2931 = vmatprep.subr.mxu0 0.0
    %2932 = vmatpush1.xpose.msra.mxu0 0.0
    %2933 = vmatprep.subr.mxu0 0.0
    %2934 = vmatpush1.xpose.msra.mxu0 0.0
    %2935 = vmatprep.mubr.f32.mxu0 0.0
    %2936 = vmatmul.mubr.f32.gmra.mrb[0].mxu0 %v2350
    %v2937 = vpop.f32.mrb[0].mxu0
    %v2938 = vadd.f32 0.0, %v2937
    %v2939 = vpop.f32.mrb[0].mxu0
    %2940 = vdwg.mxu0
    %2941 = vmatprep.subr.mxu0 0.0
    %2942 = vmatpush1.xpose.msra.mxu0 %v2707
    %2943 = vmatprep.subr.mxu0 0.0
    %2944 = vmatpush1.xpose.msra.mxu0 %v2713
    %2945 = vmatprep.subr.mxu0 0.0
    %2946 = vmatpush1.xpose.msra.mxu0 0.0
    %2947 = vmatprep.subr.mxu0 0.0
    %2948 = vmatpush1.xpose.msra.mxu0 0.0
    %2949 = vmatprep.subr.mxu0 0.0
    %2950 = vmatpush1.xpose.msra.mxu0 0.0
    %2951 = vmatprep.subr.mxu0 0.0
    %2952 = vmatpush1.xpose.msra.mxu0 0.0
    %2953 = vmatprep.subr.mxu0 0.0
    %2954 = vmatpush1.xpose.msra.mxu0 0.0
    %2955 = vmatprep.subr.mxu0 0.0
    %2956 = vmatpush1.xpose.msra.mxu0 0.0
    %2957 = vmatprep.subr.mxu0 0.0
    %2958 = vmatpush1.xpose.msra.mxu0 0.0
    %2959 = vmatprep.subr.mxu0 0.0
    %2960 = vmatpush1.xpose.msra.mxu0 0.0
    %2961 = vmatprep.subr.mxu0 0.0
    %2962 = vmatpush1.xpose.msra.mxu0 0.0
    %2963 = vmatprep.subr.mxu0 0.0
    %2964 = vmatpush1.xpose.msra.mxu0 0.0
    %2965 = vmatprep.subr.mxu0 0.0
    %2966 = vmatpush1.xpose.msra.mxu0 0.0
    %2967 = vmatprep.subr.mxu0 0.0
    %2968 = vmatpush1.xpose.msra.mxu0 0.0
    %2969 = vmatprep.subr.mxu0 0.0
    %2970 = vmatpush1.xpose.msra.mxu0 0.0
    %2971 = vmatprep.subr.mxu0 0.0
    %2972 = vmatpush1.xpose.msra.mxu0 0.0
    %2973 = vmatprep.subr.mxu0 0.0
    %2974 = vmatpush1.xpose.msra.mxu0 0.0
    %2975 = vmatprep.subr.mxu0 0.0
    %2976 = vmatpush1.xpose.msra.mxu0 0.0
    %2977 = vmatprep.subr.mxu0 0.0
    %2978 = vmatpush1.xpose.msra.mxu0 0.0
    %2979 = vmatprep.subr.mxu0 0.0
    %2980 = vmatpush1.xpose.msra.mxu0 0.0
    %2981 = vmatprep.subr.mxu0 0.0
    %2982 = vmatpush1.xpose.msra.mxu0 0.0
    %2983 = vmatprep.subr.mxu0 0.0
    %2984 = vmatpush1.xpose.msra.mxu0 0.0
    %2985 = vmatprep.subr.mxu0 0.0
    %2986 = vmatpush1.xpose.msra.mxu0 0.0
    %2987 = vmatprep.subr.mxu0 0.0
    %2988 = vmatpush1.xpose.msra.mxu0 0.0
    %2989 = vmatprep.subr.mxu0 0.0
    %2990 = vmatpush1.xpose.msra.mxu0 0.0
    %2991 = vmatprep.subr.mxu0 0.0
    %2992 = vmatpush1.xpose.msra.mxu0 0.0
    %2993 = vmatprep.subr.mxu0 0.0
    %2994 = vmatpush1.xpose.msra.mxu0 0.0
    %2995 = vmatprep.subr.mxu0 0.0
    %2996 = vmatpush1.xpose.msra.mxu0 0.0
    %2997 = vmatprep.subr.mxu0 0.0
    %2998 = vmatpush1.xpose.msra.mxu0 0.0
    %2999 = vmatprep.subr.mxu0 0.0
    %3000 = vmatpush1.xpose.msra.mxu0 0.0
    %3001 = vmatprep.subr.mxu0 0.0
    %3002 = vmatpush1.xpose.msra.mxu0 0.0
    %3003 = vmatprep.subr.mxu0 0.0
    %3004 = vmatpush1.xpose.msra.mxu0 0.0
    %3005 = vmatprep.mubr.f32.mxu0 0.0
    %3006 = vmatmul.mubr.f32.gmra.mrb[0].mxu0 %v2420
    %v3007 = vpop.f32.mrb[0].mxu0
    %v3008 = vadd.f32 0.0, %v3007
    %v3009 = vpop.f32.mrb[0].mxu0
    %3010 = vdwg.mxu0
    %3011 = vmatprep.subr.mxu0 0.0
    %3012 = vmatpush1.xpose.msra.mxu0 %v2784
    %3013 = vmatprep.subr.mxu0 0.0
    %3014 = vmatpush1.xpose.msra.mxu0 %v2790
    %3015 = vmatprep.subr.mxu0 0.0
    %3016 = vmatpush1.xpose.msra.mxu0 0.0
    %3017 = vmatprep.subr.mxu0 0.0
    %3018 = vmatpush1.xpose.msra.mxu0 0.0
    %3019 = vmatprep.subr.mxu0 0.0
    %3020 = vmatpush1.xpose.msra.mxu0 0.0
    %3021 = vmatprep.subr.mxu0 0.0
    %3022 = vmatpush1.xpose.msra.mxu0 0.0
    %3023 = vmatprep.subr.mxu0 0.0
    %3024 = vmatpush1.xpose.msra.mxu0 0.0
    %3025 = vmatprep.subr.mxu0 0.0
    %3026 = vmatpush1.xpose.msra.mxu0 0.0
    %3027 = vmatprep.subr.mxu0 0.0
    %3028 = vmatpush1.xpose.msra.mxu0 0.0
    %3029 = vmatprep.subr.mxu0 0.0
    %3030 = vmatpush1.xpose.msra.mxu0 0.0
    %3031 = vmatprep.subr.mxu0 0.0
    %3032 = vmatpush1.xpose.msra.mxu0 0.0
    %3033 = vmatprep.subr.mxu0 0.0
    %3034 = vmatpush1.xpose.msra.mxu0 0.0
    %3035 = vmatprep.subr.mxu0 0.0
    %3036 = vmatpush1.xpose.msra.mxu0 0.0
    %3037 = vmatprep.subr.mxu0 0.0
    %3038 = vmatpush1.xpose.msra.mxu0 0.0
    %3039 = vmatprep.subr.mxu0 0.0
    %3040 = vmatpush1.xpose.msra.mxu0 0.0
    %3041 = vmatprep.subr.mxu0 0.0
    %3042 = vmatpush1.xpose.msra.mxu0 0.0
    %3043 = vmatprep.subr.mxu0 0.0
    %3044 = vmatpush1.xpose.msra.mxu0 0.0
    %3045 = vmatprep.subr.mxu0 0.0
    %3046 = vmatpush1.xpose.msra.mxu0 0.0
    %3047 = vmatprep.subr.mxu0 0.0
    %3048 = vmatpush1.xpose.msra.mxu0 0.0
    %3049 = vmatprep.subr.mxu0 0.0
    %3050 = vmatpush1.xpose.msra.mxu0 0.0
    %3051 = vmatprep.subr.mxu0 0.0
    %3052 = vmatpush1.xpose.msra.mxu0 0.0
    %3053 = vmatprep.subr.mxu0 0.0
    %3054 = vmatpush1.xpose.msra.mxu0 0.0
    %3055 = vmatprep.subr.mxu0 0.0
    %3056 = vmatpush1.xpose.msra.mxu0 0.0
    %3057 = vmatprep.subr.mxu0 0.0
    %3058 = vmatpush1.xpose.msra.mxu0 0.0
    %3059 = vmatprep.subr.mxu0 0.0
    %3060 = vmatpush1.xpose.msra.mxu0 0.0
    %3061 = vmatprep.subr.mxu0 0.0
    %3062 = vmatpush1.xpose.msra.mxu0 0.0
    %3063 = vmatprep.subr.mxu0 0.0
    %3064 = vmatpush1.xpose.msra.mxu0 0.0
    %3065 = vmatprep.subr.mxu0 0.0
    %3066 = vmatpush1.xpose.msra.mxu0 0.0
    %3067 = vmatprep.subr.mxu0 0.0
    %3068 = vmatpush1.xpose.msra.mxu0 0.0
    %3069 = vmatprep.subr.mxu0 0.0
    %3070 = vmatpush1.xpose.msra.mxu0 0.0
    %3071 = vmatprep.subr.mxu0 0.0
    %3072 = vmatpush1.xpose.msra.mxu0 0.0
    %3073 = vmatprep.subr.mxu0 0.0
    %3074 = vmatpush1.xpose.msra.mxu0 0.0
    %3075 = vmatprep.mubr.f32.mxu0 0.0
    %3076 = vmatmul.mubr.f32.gmra.mrb[0].mxu0 %v2490
    %v3077 = vpop.f32.mrb[0].mxu0
    %v3078 = vadd.f32 0.0, %v3077
    %v3079 = vpop.f32.mrb[0].mxu0
    %3080 = vdwg.mxu0
    %3081 = vmatprep.subr.mxu0 0.0
    %3082 = vmatpush1.xpose.msra.mxu0 %v2861
    %3083 = vmatprep.subr.mxu0 0.0
    %3084 = vmatpush1.xpose.msra.mxu0 %v2867
    %3085 = vmatprep.subr.mxu0 0.0
    %3086 = vmatpush1.xpose.msra.mxu0 0.0
    %3087 = vmatprep.subr.mxu0 0.0
    %3088 = vmatpush1.xpose.msra.mxu0 0.0
    %3089 = vmatprep.subr.mxu0 0.0
    %3090 = vmatpush1.xpose.msra.mxu0 0.0
    %3091 = vmatprep.subr.mxu0 0.0
    %3092 = vmatpush1.xpose.msra.mxu0 0.0
    %3093 = vmatprep.subr.mxu0 0.0
    %3094 = vmatpush1.xpose.msra.mxu0 0.0
    %3095 = vmatprep.subr.mxu0 0.0
    %3096 = vmatpush1.xpose.msra.mxu0 0.0
    %3097 = vmatprep.subr.mxu0 0.0
    %3098 = vmatpush1.xpose.msra.mxu0 0.0
    %3099 = vmatprep.subr.mxu0 0.0
    %3100 = vmatpush1.xpose.msra.mxu0 0.0
    %3101 = vmatprep.subr.mxu0 0.0
    %3102 = vmatpush1.xpose.msra.mxu0 0.0
    %3103 = vmatprep.subr.mxu0 0.0
    %3104 = vmatpush1.xpose.msra.mxu0 0.0
    %3105 = vmatprep.subr.mxu0 0.0
    %3106 = vmatpush1.xpose.msra.mxu0 0.0
    %3107 = vmatprep.subr.mxu0 0.0
    %3108 = vmatpush1.xpose.msra.mxu0 0.0
    %3109 = vmatprep.subr.mxu0 0.0
    %3110 = vmatpush1.xpose.msra.mxu0 0.0
    %3111 = vmatprep.subr.mxu0 0.0
    %3112 = vmatpush1.xpose.msra.mxu0 0.0
    %3113 = vmatprep.subr.mxu0 0.0
    %3114 = vmatpush1.xpose.msra.mxu0 0.0
    %3115 = vmatprep.subr.mxu0 0.0
    %3116 = vmatpush1.xpose.msra.mxu0 0.0
    %3117 = vmatprep.subr.mxu0 0.0
    %3118 = vmatpush1.xpose.msra.mxu0 0.0
    %3119 = vmatprep.subr.mxu0 0.0
    %3120 = vmatpush1.xpose.msra.mxu0 0.0
    %3121 = vmatprep.subr.mxu0 0.0
    %3122 = vmatpush1.xpose.msra.mxu0 0.0
    %3123 = vmatprep.subr.mxu0 0.0
    %3124 = vmatpush1.xpose.msra.mxu0 0.0
    %3125 = vmatprep.subr.mxu0 0.0
    %3126 = vmatpush1.xpose.msra.mxu0 0.0
    %3127 = vmatprep.subr.mxu0 0.0
    %3128 = vmatpush1.xpose.msra.mxu0 0.0
    %3129 = vmatprep.subr.mxu0 0.0
    %3130 = vmatpush1.xpose.msra.mxu0 0.0
    %3131 = vmatprep.subr.mxu0 0.0
    %3132 = vmatpush1.xpose.msra.mxu0 0.0
    %3133 = vmatprep.subr.mxu0 0.0
    %3134 = vmatpush1.xpose.msra.mxu0 0.0
    %3135 = vmatprep.subr.mxu0 0.0
    %3136 = vmatpush1.xpose.msra.mxu0 0.0
    %3137 = vmatprep.subr.mxu0 0.0
    %3138 = vmatpush1.xpose.msra.mxu0 0.0
    %3139 = vmatprep.subr.mxu0 0.0
    %3140 = vmatpush1.xpose.msra.mxu0 0.0
    %3141 = vmatprep.subr.mxu0 0.0
    %3142 = vmatpush1.xpose.msra.mxu0 0.0
    %3143 = vmatprep.subr.mxu0 0.0
    %3144 = vmatpush1.xpose.msra.mxu0 0.0
    %3145 = vmatprep.mubr.f32.mxu0 0.0
    %3146 = vmatmul.mubr.f32.gmra.mrb[0].mxu0 %v2560
    %v3147 = vpop.f32.mrb[0].mxu0
    %v3148 = vadd.f32 0.0, %v3147
    %v3149 = vpop.f32.mrb[0].mxu0
    %3150 = vdwg.mxu0
    %vm3151 = vcmask 130048
    %v3152 = vsel %vm3151, %v2938, -inf
    %v3153 = vrot.slane %v3152, 4
    %v3154 = vmax.f32 %v3152, %v3153
    %v3155 = vrot.slane %v3154, 2
    %v3156 = vmax.f32 %v3154, %v3155
    %v3157 = vrot.slane %v3156, 1
    %v3158 = vmax.f32 %v3156, %v3157
    %v3159 = vsel %vm3151, %v3008, -inf
    %v3160 = vrot.slane %v3159, 4
    %v3161 = vmax.f32 %v3159, %v3160
    %v3162 = vrot.slane %v3161, 2
    %v3163 = vmax.f32 %v3161, %v3162
    %v3164 = vrot.slane %v3163, 1
    %v3165 = vmax.f32 %v3163, %v3164
    %v3166 = vsel %vm3151, %v3078, -inf
    %v3167 = vrot.slane %v3166, 4
    %v3168 = vmax.f32 %v3166, %v3167
    %v3169 = vrot.slane %v3168, 2
    %v3170 = vmax.f32 %v3168, %v3169
    %v3171 = vrot.slane %v3170, 1
    %v3172 = vmax.f32 %v3170, %v3171
    %v3173 = vsel %vm3151, %v3148, -inf
    %v3174 = vrot.slane %v3173, 4
    %v3175 = vmax.f32 %v3173, %v3174
    %v3176 = vrot.slane %v3175, 2
    %v3177 = vmax.f32 %v3175, %v3176
    %v3178 = vrot.slane %v3177, 1
    %v3179 = vmax.f32 %v3177, %v3178
    %v3180 = vsub.f32 %v2938, %v3158
    %v3181 = vsub.f32 %v3008, %v3165
    %v3182 = vsub.f32 %v3078, %v3172
    %v3183 = vsub.f32 %v3148, %v3179
    %v3184 = vmul.f32 %v3180, 1.442695
    %v3185 = vpow.pop %v3184
    %v3186 = vmul.f32 %v3181, 1.442695
    %v3187 = vpow.pop %v3186
    %v3188 = vmul.f32 %v3182, 1.442695
    %v3189 = vpow.pop %v3188
    %v3190 = vmul.f32 %v3183, 1.442695
    %v3191 = vpow.pop %v3190
    %v3192 = vsel %vm3151, %v3185, 0.0
    %v3193 = vrot.slane %v3192, 4
    %v3194 = vadd.f32 %v3192, %v3193
    %v3195 = vrot.slane %v3194, 2
    %v3196 = vadd.f32 %v3194, %v3195
    %v3197 = vrot.slane %v3196, 1
    %v3198 = vadd.f32 %v3196, %v3197
    %v3199 = vsel %vm3151, %v3187, 0.0
    %v3200 = vrot.slane %v3199, 4
    %v3201 = vadd.f32 %v3199, %v3200
    %v3202 = vrot.slane %v3201, 2
    %v3203 = vadd.f32 %v3201, %v3202
    %v3204 = vrot.slane %v3203, 1
    %v3205 = vadd.f32 %v3203, %v3204
    %v3206 = vsel %vm3151, %v3189, 0.0
    %v3207 = vrot.slane %v3206, 4
    %v3208 = vadd.f32 %v3206, %v3207
    %v3209 = vrot.slane %v3208, 2
    %v3210 = vadd.f32 %v3208, %v3209
    %v3211 = vrot.slane %v3210, 1
    %v3212 = vadd.f32 %v3210, %v3211
    %v3213 = vsel %vm3151, %v3191, 0.0
    %v3214 = vrot.slane %v3213, 4
    %v3215 = vadd.f32 %v3213, %v3214
    %v3216 = vrot.slane %v3215, 2
    %v3217 = vadd.f32 %v3215, %v3216
    %v3218 = vrot.slane %v3217, 1
    %v3219 = vadd.f32 %v3217, %v3218
    %v3220 = vrcp.pop %v3198
    %v3221 = vrcp.pop %v3205
    %v3222 = vrcp.pop %v3212
    %v3223 = vrcp.pop %v3219
    %v3224 = vmul.f32 %v3185, %v3220
    %v3225 = vmul.f32 %v3187, %v3221
    %v3226 = vmul.f32 %v3189, %v3222
    %v3227 = vmul.f32 %v3191, %v3223
    %v3229 = vsel %vm3151, %v3224, 0
    %3231 = vmatprep.subr.mxu0 0.0
    %3232 = vmatpush1.msra.mxu0 %v2632
    %3233 = vmatprep.subr.mxu0 0.0
    %3234 = vmatpush1.msra.mxu0 %v2638
    %3235 = vmatprep.subr.mxu0 0.0
    %3236 = vmatpush1.msra.mxu0 0.0
    %3237 = vmatprep.subr.mxu0 0.0
    %3238 = vmatpush1.msra.mxu0 0.0
    %3239 = vmatprep.subr.mxu0 0.0
    %3240 = vmatpush1.msra.mxu0 0.0
    %3241 = vmatprep.subr.mxu0 0.0
    %3242 = vmatpush1.msra.mxu0 0.0
    %3243 = vmatprep.subr.mxu0 0.0
    %3244 = vmatpush1.msra.mxu0 0.0
    %3245 = vmatprep.subr.mxu0 0.0
    %3246 = vmatpush1.msra.mxu0 0.0
    %3247 = vmatprep.subr.mxu0 0.0
    %3248 = vmatpush1.msra.mxu0 0.0
    %3249 = vmatprep.subr.mxu0 0.0
    %3250 = vmatpush1.msra.mxu0 0.0
    %3251 = vmatprep.subr.mxu0 0.0
    %3252 = vmatpush1.msra.mxu0 0.0
    %3253 = vmatprep.subr.mxu0 0.0
    %3254 = vmatpush1.msra.mxu0 0.0
    %3255 = vmatprep.subr.mxu0 0.0
    %3256 = vmatpush1.msra.mxu0 0.0
    %3257 = vmatprep.subr.mxu0 0.0
    %3258 = vmatpush1.msra.mxu0 0.0
    %3259 = vmatprep.subr.mxu0 0.0
    %3260 = vmatpush1.msra.mxu0 0.0
    %3261 = vmatprep.subr.mxu0 0.0
    %3262 = vmatpush1.msra.mxu0 0.0
    %3263 = vmatprep.subr.mxu0 0.0
    %3264 = vmatpush1.msra.mxu0 0.0
    %3265 = vmatprep.subr.mxu0 0.0
    %3266 = vmatpush1.msra.mxu0 0.0
    %3267 = vmatprep.subr.mxu0 0.0
    %3268 = vmatpush1.msra.mxu0 0.0
    %3269 = vmatprep.subr.mxu0 0.0
    %3270 = vmatpush1.msra.mxu0 0.0
    %3271 = vmatprep.subr.mxu0 0.0
    %3272 = vmatpush1.msra.mxu0 0.0
    %3273 = vmatprep.subr.mxu0 0.0
    %3274 = vmatpush1.msra.mxu0 0.0
    %3275 = vmatprep.subr.mxu0 0.0
    %3276 = vmatpush1.msra.mxu0 0.0
    %3277 = vmatprep.subr.mxu0 0.0
    %3278 = vmatpush1.msra.mxu0 0.0
    %3279 = vmatprep.subr.mxu0 0.0
    %3280 = vmatpush1.msra.mxu0 0.0
    %3281 = vmatprep.subr.mxu0 0.0
    %3282 = vmatpush1.msra.mxu0 0.0
    %3283 = vmatprep.subr.mxu0 0.0
    %3284 = vmatpush1.msra.mxu0 0.0
    %3285 = vmatprep.subr.mxu0 0.0
    %3286 = vmatpush1.msra.mxu0 0.0
    %3287 = vmatprep.subr.mxu0 0.0
    %3288 = vmatpush1.msra.mxu0 0.0
    %3289 = vmatprep.subr.mxu0 0.0
    %3290 = vmatpush1.msra.mxu0 0.0
    %3291 = vmatprep.subr.mxu0 0.0
    %3292 = vmatpush1.msra.mxu0 0.0
    %3293 = vmatprep.subr.mxu0 0.0
    %3294 = vmatpush1.msra.mxu0 0.0
    %3295 = vmatprep.mubr.f32.mxu0 0.0
    %3296 = vmatmul.mubr.f32.gmra.mrb[0].mxu0 %v3229
    %v3297 = vpop.f32.mrb[0].mxu0
    %v3298 = vadd.f32 0.0, %v3297
    %v3299 = vpop.f32.mrb[0].mxu0
    %3300 = vdwg.mxu0
    %v3302 = vsel %vm3151, %v3225, 0
    %3304 = vmatprep.subr.mxu0 0.0
    %3305 = vmatpush1.msra.mxu0 %v2709
    %3306 = vmatprep.subr.mxu0 0.0
    %3307 = vmatpush1.msra.mxu0 %v2715
    %3308 = vmatprep.subr.mxu0 0.0
    %3309 = vmatpush1.msra.mxu0 0.0
    %3310 = vmatprep.subr.mxu0 0.0
    %3311 = vmatpush1.msra.mxu0 0.0
    %3312 = vmatprep.subr.mxu0 0.0
    %3313 = vmatpush1.msra.mxu0 0.0
    %3314 = vmatprep.subr.mxu0 0.0
    %3315 = vmatpush1.msra.mxu0 0.0
    %3316 = vmatprep.subr.mxu0 0.0
    %3317 = vmatpush1.msra.mxu0 0.0
    %3318 = vmatprep.subr.mxu0 0.0
    %3319 = vmatpush1.msra.mxu0 0.0
    %3320 = vmatprep.subr.mxu0 0.0
    %3321 = vmatpush1.msra.mxu0 0.0
    %3322 = vmatprep.subr.mxu0 0.0
    %3323 = vmatpush1.msra.mxu0 0.0
    %3324 = vmatprep.subr.mxu0 0.0
    %3325 = vmatpush1.msra.mxu0 0.0
    %3326 = vmatprep.subr.mxu0 0.0
    %3327 = vmatpush1.msra.mxu0 0.0
    %3328 = vmatprep.subr.mxu0 0.0
    %3329 = vmatpush1.msra.mxu0 0.0
    %3330 = vmatprep.subr.mxu0 0.0
    %3331 = vmatpush1.msra.mxu0 0.0
    %3332 = vmatprep.subr.mxu0 0.0
    %3333 = vmatpush1.msra.mxu0 0.0
    %3334 = vmatprep.subr.mxu0 0.0
    %3335 = vmatpush1.msra.mxu0 0.0
    %3336 = vmatprep.subr.mxu0 0.0
    %3337 = vmatpush1.msra.mxu0 0.0
    %3338 = vmatprep.subr.mxu0 0.0
    %3339 = vmatpush1.msra.mxu0 0.0
    %3340 = vmatprep.subr.mxu0 0.0
    %3341 = vmatpush1.msra.mxu0 0.0
    %3342 = vmatprep.subr.mxu0 0.0
    %3343 = vmatpush1.msra.mxu0 0.0
    %3344 = vmatprep.subr.mxu0 0.0
    %3345 = vmatpush1.msra.mxu0 0.0
    %3346 = vmatprep.subr.mxu0 0.0
    %3347 = vmatpush1.msra.mxu0 0.0
    %3348 = vmatprep.subr.mxu0 0.0
    %3349 = vmatpush1.msra.mxu0 0.0
    %3350 = vmatprep.subr.mxu0 0.0
    %3351 = vmatpush1.msra.mxu0 0.0
    %3352 = vmatprep.subr.mxu0 0.0
    %3353 = vmatpush1.msra.mxu0 0.0
    %3354 = vmatprep.subr.mxu0 0.0
    %3355 = vmatpush1.msra.mxu0 0.0
    %3356 = vmatprep.subr.mxu0 0.0
    %3357 = vmatpush1.msra.mxu0 0.0
    %3358 = vmatprep.subr.mxu0 0.0
    %3359 = vmatpush1.msra.mxu0 0.0
    %3360 = vmatprep.subr.mxu0 0.0
    %3361 = vmatpush1.msra.mxu0 0.0
    %3362 = vmatprep.subr.mxu0 0.0
    %3363 = vmatpush1.msra.mxu0 0.0
    %3364 = vmatprep.subr.mxu0 0.0
    %3365 = vmatpush1.msra.mxu0 0.0
    %3366 = vmatprep.subr.mxu0 0.0
    %3367 = vmatpush1.msra.mxu0 0.0
    %3368 = vmatprep.mubr.f32.mxu0 0.0
    %3369 = vmatmul.mubr.f32.gmra.mrb[0].mxu0 %v3302
    %v3370 = vpop.f32.mrb[0].mxu0
    %v3371 = vadd.f32 0.0, %v3370
    %v3372 = vpop.f32.mrb[0].mxu0
    %3373 = vdwg.mxu0
    %v3375 = vsel %vm3151, %v3226, 0
    %3377 = vmatprep.subr.mxu0 0.0
    %3378 = vmatpush1.msra.mxu0 %v2786
    %3379 = vmatprep.subr.mxu0 0.0
    %3380 = vmatpush1.msra.mxu0 %v2792
    %3381 = vmatprep.subr.mxu0 0.0
    %3382 = vmatpush1.msra.mxu0 0.0
    %3383 = vmatprep.subr.mxu0 0.0
    %3384 = vmatpush1.msra.mxu0 0.0
    %3385 = vmatprep.subr.mxu0 0.0
    %3386 = vmatpush1.msra.mxu0 0.0
    %3387 = vmatprep.subr.mxu0 0.0
    %3388 = vmatpush1.msra.mxu0 0.0
    %3389 = vmatprep.subr.mxu0 0.0
    %3390 = vmatpush1.msra.mxu0 0.0
    %3391 = vmatprep.subr.mxu0 0.0
    %3392 = vmatpush1.msra.mxu0 0.0
    %3393 = vmatprep.subr.mxu0 0.0
    %3394 = vmatpush1.msra.mxu0 0.0
    %3395 = vmatprep.subr.mxu0 0.0
    %3396 = vmatpush1.msra.mxu0 0.0
    %3397 = vmatprep.subr.mxu0 0.0
    %3398 = vmatpush1.msra.mxu0 0.0
    %3399 = vmatprep.subr.mxu0 0.0
    %3400 = vmatpush1.msra.mxu0 0.0
    %3401 = vmatprep.subr.mxu0 0.0
    %3402 = vmatpush1.msra.mxu0 0.0
    %3403 = vmatprep.subr.mxu0 0.0
    %3404 = vmatpush1.msra.mxu0 0.0
    %3405 = vmatprep.subr.mxu0 0.0
    %3406 = vmatpush1.msra.mxu0 0.0
    %3407 = vmatprep.subr.mxu0 0.0
    %3408 = vmatpush1.msra.mxu0 0.0
    %3409 = vmatprep.subr.mxu0 0.0
    %3410 = vmatpush1.msra.mxu0 0.0
    %3411 = vmatprep.subr.mxu0 0.0
    %3412 = vmatpush1.msra.mxu0 0.0
    %3413 = vmatprep.subr.mxu0 0.0
    %3414 = vmatpush1.msra.mxu0 0.0
    %3415 = vmatprep.subr.mxu0 0.0
    %3416 = vmatpush1.msra.mxu0 0.0
    %3417 = vmatprep.subr.mxu0 0.0
    %3418 = vmatpush1.msra.mxu0 0.0
    %3419 = vmatprep.subr.mxu0 0.0
    %3420 = vmatpush1.msra.mxu0 0.0
    %3421 = vmatprep.subr.mxu0 0.0
    %3422 = vmatpush1.msra.mxu0 0.0
    %3423 = vmatprep.subr.mxu0 0.0
    %3424 = vmatpush1.msra.mxu0 0.0
    %3425 = vmatprep.subr.mxu0 0.0
    %3426 = vmatpush1.msra.mxu0 0.0
    %3427 = vmatprep.subr.mxu0 0.0
    %3428 = vmatpush1.msra.mxu0 0.0
    %3429 = vmatprep.subr.mxu0 0.0
    %3430 = vmatpush1.msra.mxu0 0.0
    %3431 = vmatprep.subr.mxu0 0.0
    %3432 = vmatpush1.msra.mxu0 0.0
    %3433 = vmatprep.subr.mxu0 0.0
    %3434 = vmatpush1.msra.mxu0 0.0
    %3435 = vmatprep.subr.mxu0 0.0
    %3436 = vmatpush1.msra.mxu0 0.0
    %3437 = vmatprep.subr.mxu0 0.0
    %3438 = vmatpush1.msra.mxu0 0.0
    %3439 = vmatprep.subr.mxu0 0.0
    %3440 = vmatpush1.msra.mxu0 0.0
    %3441 = vmatprep.mubr.f32.mxu0 0.0
    %3442 = vmatmul.mubr.f32.gmra.mrb[0].mxu0 %v3375
    %v3443 = vpop.f32.mrb[0].mxu0
    %v3444 = vadd.f32 0.0, %v3443
    %v3445 = vpop.f32.mrb[0].mxu0
    %3446 = vdwg.mxu0
    %v3448 = vsel %vm3151, %v3227, 0
    %3450 = vmatprep.subr.mxu0 0.0
    %3451 = vmatpush1.msra.mxu0 %v2863
    %3452 = vmatprep.subr.mxu0 0.0
    %3453 = vmatpush1.msra.mxu0 %v2869
    %3454 = vmatprep.subr.mxu0 0.0
    %3455 = vmatpush1.msra.mxu0 0.0
    %3456 = vmatprep.subr.mxu0 0.0
    %3457 = vmatpush1.msra.mxu0 0.0
    %3458 = vmatprep.subr.mxu0 0.0
    %3459 = vmatpush1.msra.mxu0 0.0
    %3460 = vmatprep.subr.mxu0 0.0
    %3461 = vmatpush1.msra.mxu0 0.0
    %3462 = vmatprep.subr.mxu0 0.0
    %3463 = vmatpush1.msra.mxu0 0.0
    %3464 = vmatprep.subr.mxu0 0.0
    %3465 = vmatpush1.msra.mxu0 0.0
    %3466 = vmatprep.subr.mxu0 0.0
    %3467 = vmatpush1.msra.mxu0 0.0
    %3468 = vmatprep.subr.mxu0 0.0
    %3469 = vmatpush1.msra.mxu0 0.0
    %3470 = vmatprep.subr.mxu0 0.0
    %3471 = vmatpush1.msra.mxu0 0.0
    %3472 = vmatprep.subr.mxu0 0.0
    %3473 = vmatpush1.msra.mxu0 0.0
    %3474 = vmatprep.subr.mxu0 0.0
    %3475 = vmatpush1.msra.mxu0 0.0
    %3476 = vmatprep.subr.mxu0 0.0
    %3477 = vmatpush1.msra.mxu0 0.0
    %3478 = vmatprep.subr.mxu0 0.0
    %3479 = vmatpush1.msra.mxu0 0.0
    %3480 = vmatprep.subr.mxu0 0.0
    %3481 = vmatpush1.msra.mxu0 0.0
    %3482 = vmatprep.subr.mxu0 0.0
    %3483 = vmatpush1.msra.mxu0 0.0
    %3484 = vmatprep.subr.mxu0 0.0
    %3485 = vmatpush1.msra.mxu0 0.0
    %3486 = vmatprep.subr.mxu0 0.0
    %3487 = vmatpush1.msra.mxu0 0.0
    %3488 = vmatprep.subr.mxu0 0.0
    %3489 = vmatpush1.msra.mxu0 0.0
    %3490 = vmatprep.subr.mxu0 0.0
    %3491 = vmatpush1.msra.mxu0 0.0
    %3492 = vmatprep.subr.mxu0 0.0
    %3493 = vmatpush1.msra.mxu0 0.0
    %3494 = vmatprep.subr.mxu0 0.0
    %3495 = vmatpush1.msra.mxu0 0.0
    %3496 = vmatprep.subr.mxu0 0.0
    %3497 = vmatpush1.msra.mxu0 0.0
    %3498 = vmatprep.subr.mxu0 0.0
    %3499 = vmatpush1.msra.mxu0 0.0
    %3500 = vmatprep.subr.mxu0 0.0
    %3501 = vmatpush1.msra.mxu0 0.0
    %3502 = vmatprep.subr.mxu0 0.0
    %3503 = vmatpush1.msra.mxu0 0.0
    %3504 = vmatprep.subr.mxu0 0.0
    %3505 = vmatpush1.msra.mxu0 0.0
    %3506 = vmatprep.subr.mxu0 0.0
    %3507 = vmatpush1.msra.mxu0 0.0
    %3508 = vmatprep.subr.mxu0 0.0
    %3509 = vmatpush1.msra.mxu0 0.0
    %3510 = vmatprep.subr.mxu0 0.0
    %3511 = vmatpush1.msra.mxu0 0.0
    %3512 = vmatprep.subr.mxu0 0.0
    %3513 = vmatpush1.msra.mxu0 0.0
    %3514 = vmatprep.mubr.f32.mxu0 0.0
    %3515 = vmatmul.mubr.f32.gmra.mrb[0].mxu0 %v3448
    %v3516 = vpop.f32.mrb[0].mxu0
    %v3517 = vadd.f32 0.0, %v3516
    %v3518 = vpop.f32.mrb[0].mxu0
    %3519 = vdwg.mxu0
    %3520 = vmatprep.subr.mxu0 0.0
    %3521 = vmatpush1.msra.mxu0 %v634
    %3522 = vmatprep.subr.mxu0 0.0
    %3523 = vmatpush1.msra.mxu0 %v635
    %3524 = vmatprep.subr.mxu0 0.0
    %3525 = vmatpush1.msra.mxu0 %v636
    %3526 = vmatprep.subr.mxu0 0.0
    %3527 = vmatpush1.msra.mxu0 %v637
    %3528 = vmatprep.subr.mxu0 0.0
    %3529 = vmatpush1.msra.mxu0 %v638
    %3530 = vmatprep.subr.mxu0 0.0
    %3531 = vmatpush1.msra.mxu0 %v639
    %3532 = vmatprep.subr.mxu0 0.0
    %3533 = vmatpush1.msra.mxu0 %v640
    %3534 = vmatprep.subr.mxu0 0.0
    %3535 = vmatpush1.msra.mxu0 %v641
    %3536 = vmatprep.subr.mxu0 0.0
    %3537 = vmatpush1.msra.mxu0 %v642
    %3538 = vmatprep.subr.mxu0 0.0
    %3539 = vmatpush1.msra.mxu0 %v643
    %3540 = vmatprep.subr.mxu0 0.0
    %3541 = vmatpush1.msra.mxu0 %v644
    %3542 = vmatprep.subr.mxu0 0.0
    %3543 = vmatpush1.msra.mxu0 %v645
    %3544 = vmatprep.subr.mxu0 0.0
    %3545 = vmatpush1.msra.mxu0 %v646
    %3546 = vmatprep.subr.mxu0 0.0
    %3547 = vmatpush1.msra.mxu0 %v647
    %3548 = vmatprep.subr.mxu0 0.0
    %3549 = vmatpush1.msra.mxu0 %v648
    %3550 = vmatprep.subr.mxu0 0.0
    %3551 = vmatpush1.msra.mxu0 %v649
    %3552 = vmatprep.subr.mxu0 0.0
    %3553 = vmatpush1.msra.mxu0 0.0
    %3554 = vmatprep.subr.mxu0 0.0
    %3555 = vmatpush1.msra.mxu0 0.0
    %3556 = vmatprep.subr.mxu0 0.0
    %3557 = vmatpush1.msra.mxu0 0.0
    %3558 = vmatprep.subr.mxu0 0.0
    %3559 = vmatpush1.msra.mxu0 0.0
    %3560 = vmatprep.subr.mxu0 0.0
    %3561 = vmatpush1.msra.mxu0 0.0
    %3562 = vmatprep.subr.mxu0 0.0
    %3563 = vmatpush1.msra.mxu0 0.0
    %3564 = vmatprep.subr.mxu0 0.0
    %3565 = vmatpush1.msra.mxu0 0.0
    %3566 = vmatprep.subr.mxu0 0.0
    %3567 = vmatpush1.msra.mxu0 0.0
    %3568 = vmatprep.subr.mxu0 0.0
    %3569 = vmatpush1.msra.mxu0 0.0
    %3570 = vmatprep.subr.mxu0 0.0
    %3571 = vmatpush1.msra.mxu0 0.0
    %3572 = vmatprep.subr.mxu0 0.0
    %3573 = vmatpush1.msra.mxu0 0.0
    %3574 = vmatprep.subr.mxu0 0.0
    %3575 = vmatpush1.msra.mxu0 0.0
    %3576 = vmatprep.subr.mxu0 0.0
    %3577 = vmatpush1.msra.mxu0 0.0
    %3578 = vmatprep.subr.mxu0 0.0
    %3579 = vmatpush1.msra.mxu0 0.0
    %3580 = vmatprep.subr.mxu0 0.0
    %3581 = vmatpush1.msra.mxu0 0.0
    %3582 = vmatprep.subr.mxu0 0.0
    %3583 = vmatpush1.msra.mxu0 0.0
    %3584 = vmatprep.mubr.f32.mxu0 0.0
    %3585 = vmatmul.mubr.f32.gmra.mrb[0].mxu0 %v3298
    %v3586 = vpop.f32.mrb[0].mxu0
    %v3587 = vadd.f32 0.0, %v3586
    %v3588 = vpop.f32.mrb[0].mxu0
    %3589 = vdwg.mxu0
    %3590 = vmatprep.subr.mxu0 0.0
    %3591 = vmatpush1.msra.mxu0 %v650
    %3592 = vmatprep.subr.mxu0 0.0
    %3593 = vmatpush1.msra.mxu0 %v651
    %3594 = vmatprep.subr.mxu0 0.0
    %3595 = vmatpush1.msra.mxu0 %v652
    %3596 = vmatprep.subr.mxu0 0.0
    %3597 = vmatpush1.msra.mxu0 %v653
    %3598 = vmatprep.subr.mxu0 0.0
    %3599 = vmatpush1.msra.mxu0 %v654
    %3600 = vmatprep.subr.mxu0 0.0
    %3601 = vmatpush1.msra.mxu0 %v655
    %3602 = vmatprep.subr.mxu0 0.0
    %3603 = vmatpush1.msra.mxu0 %v656
    %3604 = vmatprep.subr.mxu0 0.0
    %3605 = vmatpush1.msra.mxu0 %v657
    %3606 = vmatprep.subr.mxu0 0.0
    %3607 = vmatpush1.msra.mxu0 %v658
    %3608 = vmatprep.subr.mxu0 0.0
    %3609 = vmatpush1.msra.mxu0 %v659
    %3610 = vmatprep.subr.mxu0 0.0
    %3611 = vmatpush1.msra.mxu0 %v660
    %3612 = vmatprep.subr.mxu0 0.0
    %3613 = vmatpush1.msra.mxu0 %v661
    %3614 = vmatprep.subr.mxu0 0.0
    %3615 = vmatpush1.msra.mxu0 %v662
    %3616 = vmatprep.subr.mxu0 0.0
    %3617 = vmatpush1.msra.mxu0 %v663
    %3618 = vmatprep.subr.mxu0 0.0
    %3619 = vmatpush1.msra.mxu0 %v664
    %3620 = vmatprep.subr.mxu0 0.0
    %3621 = vmatpush1.msra.mxu0 %v665
    %3622 = vmatprep.subr.mxu0 0.0
    %3623 = vmatpush1.msra.mxu0 0.0
    %3624 = vmatprep.subr.mxu0 0.0
    %3625 = vmatpush1.msra.mxu0 0.0
    %3626 = vmatprep.subr.mxu0 0.0
    %3627 = vmatpush1.msra.mxu0 0.0
    %3628 = vmatprep.subr.mxu0 0.0
    %3629 = vmatpush1.msra.mxu0 0.0
    %3630 = vmatprep.subr.mxu0 0.0
    %3631 = vmatpush1.msra.mxu0 0.0
    %3632 = vmatprep.subr.mxu0 0.0
    %3633 = vmatpush1.msra.mxu0 0.0
    %3634 = vmatprep.subr.mxu0 0.0
    %3635 = vmatpush1.msra.mxu0 0.0
    %3636 = vmatprep.subr.mxu0 0.0
    %3637 = vmatpush1.msra.mxu0 0.0
    %3638 = vmatprep.subr.mxu0 0.0
    %3639 = vmatpush1.msra.mxu0 0.0
    %3640 = vmatprep.subr.mxu0 0.0
    %3641 = vmatpush1.msra.mxu0 0.0
    %3642 = vmatprep.subr.mxu0 0.0
    %3643 = vmatpush1.msra.mxu0 0.0
    %3644 = vmatprep.subr.mxu0 0.0
    %3645 = vmatpush1.msra.mxu0 0.0
    %3646 = vmatprep.subr.mxu0 0.0
    %3647 = vmatpush1.msra.mxu0 0.0
    %3648 = vmatprep.subr.mxu0 0.0
    %3649 = vmatpush1.msra.mxu0 0.0
    %3650 = vmatprep.subr.mxu0 0.0
    %3651 = vmatpush1.msra.mxu0 0.0
    %3652 = vmatprep.subr.mxu0 0.0
    %3653 = vmatpush1.msra.mxu0 0.0
    %3654 = vmatprep.mubr.f32.mxu0 0.0
    %3655 = vmatmul.mubr.f32.gmra.mrb[0].mxu0 %v3371
    %v3656 = vpop.f32.mrb[0].mxu0
    %v3657 = vadd.f32 0.0, %v3656
    %v3658 = vpop.f32.mrb[0].mxu0
    %3659 = vdwg.mxu0
    %3660 = vmatprep.subr.mxu0 0.0
    %3661 = vmatpush1.msra.mxu0 %v666
    %3662 = vmatprep.subr.mxu0 0.0
    %3663 = vmatpush1.msra.mxu0 %v667
    %3664 = vmatprep.subr.mxu0 0.0
    %3665 = vmatpush1.msra.mxu0 %v668
    %3666 = vmatprep.subr.mxu0 0.0
    %3667 = vmatpush1.msra.mxu0 %v669
    %3668 = vmatprep.subr.mxu0 0.0
    %3669 = vmatpush1.msra.mxu0 %v670
    %3670 = vmatprep.subr.mxu0 0.0
    %3671 = vmatpush1.msra.mxu0 %v671
    %3672 = vmatprep.subr.mxu0 0.0
    %3673 = vmatpush1.msra.mxu0 %v672
    %3674 = vmatprep.subr.mxu0 0.0
    %3675 = vmatpush1.msra.mxu0 %v673
    %3676 = vmatprep.subr.mxu0 0.0
    %3677 = vmatpush1.msra.mxu0 %v674
    %3678 = vmatprep.subr.mxu0 0.0
    %3679 = vmatpush1.msra.mxu0 %v675
    %3680 = vmatprep.subr.mxu0 0.0
    %3681 = vmatpush1.msra.mxu0 %v676
    %3682 = vmatprep.subr.mxu0 0.0
    %3683 = vmatpush1.msra.mxu0 %v677
    %3684 = vmatprep.subr.mxu0 0.0
    %3685 = vmatpush1.msra.mxu0 %v678
    %3686 = vmatprep.subr.mxu0 0.0
    %3687 = vmatpush1.msra.mxu0 %v679
    %3688 = vmatprep.subr.mxu0 0.0
    %3689 = vmatpush1.msra.mxu0 %v680
    %3690 = vmatprep.subr.mxu0 0.0
    %3691 = vmatpush1.msra.mxu0 %v681
    %3692 = vmatprep.subr.mxu0 0.0
    %3693 = vmatpush1.msra.mxu0 0.0
    %3694 = vmatprep.subr.mxu0 0.0
    %3695 = vmatpush1.msra.mxu0 0.0
    %3696 = vmatprep.subr.mxu0 0.0
    %3697 = vmatpush1.msra.mxu0 0.0
    %3698 = vmatprep.subr.mxu0 0.0
    %3699 = vmatpush1.msra.mxu0 0.0
    %3700 = vmatprep.subr.mxu0 0.0
    %3701 = vmatpush1.msra.mxu0 0.0
    %3702 = vmatprep.subr.mxu0 0.0
    %3703 = vmatpush1.msra.mxu0 0.0
    %3704 = vmatprep.subr.mxu0 0.0
    %3705 = vmatpush1.msra.mxu0 0.0
    %3706 = vmatprep.subr.mxu0 0.0
    %3707 = vmatpush1.msra.mxu0 0.0
    %3708 = vmatprep.subr.mxu0 0.0
    %3709 = vmatpush1.msra.mxu0 0.0
    %3710 = vmatprep.subr.mxu0 0.0
    %3711 = vmatpush1.msra.mxu0 0.0
    %3712 = vmatprep.subr.mxu0 0.0
    %3713 = vmatpush1.msra.mxu0 0.0
    %3714 = vmatprep.subr.mxu0 0.0
    %3715 = vmatpush1.msra.mxu0 0.0
    %3716 = vmatprep.subr.mxu0 0.0
    %3717 = vmatpush1.msra.mxu0 0.0
    %3718 = vmatprep.subr.mxu0 0.0
    %3719 = vmatpush1.msra.mxu0 0.0
    %3720 = vmatprep.subr.mxu0 0.0
    %3721 = vmatpush1.msra.mxu0 0.0
    %3722 = vmatprep.subr.mxu0 0.0
    %3723 = vmatpush1.msra.mxu0 0.0
    %3724 = vmatprep.mubr.f32.mxu0 0.0
    %3725 = vmatmul.mubr.f32.gmra.mrb[0].mxu0 %v3444
    %v3726 = vpop.f32.mrb[0].mxu0
    %v3727 = vadd.f32 0.0, %v3726
    %v3728 = vpop.f32.mrb[0].mxu0
    %3729 = vdwg.mxu0
    %3730 = vmatprep.subr.mxu0 0.0
    %3731 = vmatpush1.msra.mxu0 %v682
    %3732 = vmatprep.subr.mxu0 0.0
    %3733 = vmatpush1.msra.mxu0 %v683
    %3734 = vmatprep.subr.mxu0 0.0
    %3735 = vmatpush1.msra.mxu0 %v684
    %3736 = vmatprep.subr.mxu0 0.0
    %3737 = vmatpush1.msra.mxu0 %v685
    %3738 = vmatprep.subr.mxu0 0.0
    %3739 = vmatpush1.msra.mxu0 %v686
    %3740 = vmatprep.subr.mxu0 0.0
    %3741 = vmatpush1.msra.mxu0 %v687
    %3742 = vmatprep.subr.mxu0 0.0
    %3743 = vmatpush1.msra.mxu0 %v688
    %3744 = vmatprep.subr.mxu0 0.0
    %3745 = vmatpush1.msra.mxu0 %v689
    %3746 = vmatprep.subr.mxu0 0.0
    %3747 = vmatpush1.msra.mxu0 %v690
    %3748 = vmatprep.subr.mxu0 0.0
    %3749 = vmatpush1.msra.mxu0 %v691
    %3750 = vmatprep.subr.mxu0 0.0
    %3751 = vmatpush1.msra.mxu0 %v692
    %3752 = vmatprep.subr.mxu0 0.0
    %3753 = vmatpush1.msra.mxu0 %v693
    %3754 = vmatprep.subr.mxu0 0.0
    %3755 = vmatpush1.msra.mxu0 %v694
    %3756 = vmatprep.subr.mxu0 0.0
    %3757 = vmatpush1.msra.mxu0 %v695
    %3758 = vmatprep.subr.mxu0 0.0
    %3759 = vmatpush1.msra.mxu0 %v696
    %3760 = vmatprep.subr.mxu0 0.0
    %3761 = vmatpush1.msra.mxu0 %v697
    %3762 = vmatprep.subr.mxu0 0.0
    %3763 = vmatpush1.msra.mxu0 0.0
    %3764 = vmatprep.subr.mxu0 0.0
    %3765 = vmatpush1.msra.mxu0 0.0
    %3766 = vmatprep.subr.mxu0 0.0
    %3767 = vmatpush1.msra.mxu0 0.0
    %3768 = vmatprep.subr.mxu0 0.0
    %3769 = vmatpush1.msra.mxu0 0.0
    %3770 = vmatprep.subr.mxu0 0.0
    %3771 = vmatpush1.msra.mxu0 0.0
    %3772 = vmatprep.subr.mxu0 0.0
    %3773 = vmatpush1.msra.mxu0 0.0
    %3774 = vmatprep.subr.mxu0 0.0
    %3775 = vmatpush1.msra.mxu0 0.0
    %3776 = vmatprep.subr.mxu0 0.0
    %3777 = vmatpush1.msra.mxu0 0.0
    %3778 = vmatprep.subr.mxu0 0.0
    %3779 = vmatpush1.msra.mxu0 0.0
    %3780 = vmatprep.subr.mxu0 0.0
    %3781 = vmatpush1.msra.mxu0 0.0
    %3782 = vmatprep.subr.mxu0 0.0
    %3783 = vmatpush1.msra.mxu0 0.0
    %3784 = vmatprep.subr.mxu0 0.0
    %3785 = vmatpush1.msra.mxu0 0.0
    %3786 = vmatprep.subr.mxu0 0.0
    %3787 = vmatpush1.msra.mxu0 0.0
    %3788 = vmatprep.subr.mxu0 0.0
    %3789 = vmatpush1.msra.mxu0 0.0
    %3790 = vmatprep.subr.mxu0 0.0
    %3791 = vmatpush1.msra.mxu0 0.0
    %3792 = vmatprep.subr.mxu0 0.0
    %3793 = vmatpush1.msra.mxu0 0.0
    %3794 = vmatprep.mubr.f32.mxu0 0.0
    %3795 = vmatmul.mubr.f32.gmra.mrb[0].mxu0 %v3517
    %v3796 = vpop.f32.mrb[0].mxu0
    %v3797 = vadd.f32 0.0, %v3796
    %v3798 = vpop.f32.mrb[0].mxu0
    %3799 = vdwg.mxu0
    %v3800 = vadd.f32 %v3587, %v3657
    %v3801 = vadd.f32 %v3800, %v3727
    %v3802 = vadd.f32 %v3801, %v3797
    %v3804 = vlaneseq
    %v3805 = vshrl.u32 %v3804, 7
    %v3806 = vsub.s32 0, %v3805
    %v3807 = vrot.slane %v698, %v3806
    %v3809 = vadd.f32 %v3802, %v3807
    %v3810 = vadd.f32 %v2282, %v3809
    %v3811 = vsel %vm2253, %v3810, 0.0
    %3812 = vadd.xlane.f32.xlu0 %v3811
    %v3813 = vpop.xlane.xlu0 %3812
    %v3814 = vmul.f32 %v3813, %v2257
    %v3815 = vsub.f32 %v3810, %v3814
    %v3816 = vsel %vm2253, %v3815, 0.0
    %v3817 = vmul.f32 %v3816, %v3816
    %3818 = vadd.xlane.f32.xlu0 %v3817
    %v3819 = vpop.xlane.xlu0 %3818
    %v3820 = vmul.f32 %v3819, %v2264
    %v3822 = vlaneseq
    %v3823 = vshrl.u32 %v3822, 7
    %v3824 = vsub.s32 0, %v3823
    %v3825 = vrot.slane %v699, %v3824
    %v3827 = vmul.f32 %v3816, %v3825
    %v3828 = vadd.f32 %v3820, 1e-12
    %v3829 = vrsqrt.pop %v3828
    %v3830 = vmul.f32 %v3827, %v3829
    %v3832 = vlaneseq
    %v3833 = vshrl.u32 %v3832, 7
    %v3834 = vsub.s32 0, %v3833
    %v3835 = vrot.slane %v700, %v3834
    %v3837 = vadd.f32 %v3830, %v3835
    %v3839 = vlaneseq
    %v3840 = vshrl.u32 %v3839, 7
    %v3841 = vsub.s32 0, %v3840
    %v3842 = vrot.slane %v717, %v3841
    %3844 = vmatprep.subr.mxu0 0.0
    %3845 = vmatpush1.msra.mxu0 %v701
    %3846 = vmatprep.subr.mxu0 0.0
    %3847 = vmatpush1.msra.mxu0 %v702
    %3848 = vmatprep.subr.mxu0 0.0
    %3849 = vmatpush1.msra.mxu0 %v703
    %3850 = vmatprep.subr.mxu0 0.0
    %3851 = vmatpush1.msra.mxu0 %v704
    %3852 = vmatprep.subr.mxu0 0.0
    %3853 = vmatpush1.msra.mxu0 %v705
    %3854 = vmatprep.subr.mxu0 0.0
    %3855 = vmatpush1.msra.mxu0 %v706
    %3856 = vmatprep.subr.mxu0 0.0
    %3857 = vmatpush1.msra.mxu0 %v707
    %3858 = vmatprep.subr.mxu0 0.0
    %3859 = vmatpush1.msra.mxu0 %v708
    %3860 = vmatprep.subr.mxu0 0.0
    %3861 = vmatpush1.msra.mxu0 %v709
    %3862 = vmatprep.subr.mxu0 0.0
    %3863 = vmatpush1.msra.mxu0 %v710
    %3864 = vmatprep.subr.mxu0 0.0
    %3865 = vmatpush1.msra.mxu0 %v711
    %3866 = vmatprep.subr.mxu0 0.0
    %3867 = vmatpush1.msra.mxu0 %v712
    %3868 = vmatprep.subr.mxu0 0.0
    %3869 = vmatpush1.msra.mxu0 %v713
    %3870 = vmatprep.subr.mxu0 0.0
    %3871 = vmatpush1.msra.mxu0 %v714
    %3872 = vmatprep.subr.mxu0 0.0
    %3873 = vmatpush1.msra.mxu0 %v715
    %3874 = vmatprep.subr.mxu0 0.0
    %3875 = vmatpush1.msra.mxu0 %v716
    %3876 = vmatprep.subr.mxu0 0.0
    %3877 = vmatpush1.msra.mxu0 0.0
    %3878 = vmatprep.subr.mxu0 0.0
    %3879 = vmatpush1.msra.mxu0 0.0
    %3880 = vmatprep.subr.mxu0 0.0
    %3881 = vmatpush1.msra.mxu0 0.0
    %3882 = vmatprep.subr.mxu0 0.0
    %3883 = vmatpush1.msra.mxu0 0.0
    %3884 = vmatprep.subr.mxu0 0.0
    %3885 = vmatpush1.msra.mxu0 0.0
    %3886 = vmatprep.subr.mxu0 0.0
    %3887 = vmatpush1.msra.mxu0 0.0
    %3888 = vmatprep.subr.mxu0 0.0
    %3889 = vmatpush1.msra.mxu0 0.0
    %3890 = vmatprep.subr.mxu0 0.0
    %3891 = vmatpush1.msra.mxu0 0.0
    %3892 = vmatprep.subr.mxu0 0.0
    %3893 = vmatpush1.msra.mxu0 0.0
    %3894 = vmatprep.subr.mxu0 0.0
    %3895 = vmatpush1.msra.mxu0 0.0
    %3896 = vmatprep.subr.mxu0 0.0
    %3897 = vmatpush1.msra.mxu0 0.0
    %3898 = vmatprep.subr.mxu0 0.0
    %3899 = vmatpush1.msra.mxu0 0.0
    %3900 = vmatprep.subr.mxu0 0.0
    %3901 = vmatpush1.msra.mxu0 0.0
    %3902 = vmatprep.subr.mxu0 0.0
    %3903 = vmatpush1.msra.mxu0 0.0
    %3904 = vmatprep.subr.mxu0 0.0
    %3905 = vmatpush1.msra.mxu0 0.0
    %3906 = vmatprep.subr.mxu0 0.0
    %3907 = vmatpush1.msra.mxu0 0.0
    %3908 = vmatprep.mubr.f32.mxu0 0.0
    %3909 = vmatmul.mubr.f32.gmra.mrb[0].mxu0 %v3837
    %v3910 = vpop.f32.mrb[0].mxu0
    %v3911 = vadd.f32 %v3842, %v3910
    %v3912 = vpop.f32.mrb[0].mxu0
    %3913 = vdwg.mxu0
    %v3914 = vmax.f32 %v3911, 0.0
    %3915 = vmatprep.subr.mxu0 0.0
    %3916 = vmatpush1.msra.mxu0 %v718
    %3917 = vmatprep.subr.mxu0 0.0
    %3918 = vmatpush1.msra.mxu0 %v719
    %3919 = vmatprep.subr.mxu0 0.0
    %3920 = vmatpush1.msra.mxu0 %v720
    %3921 = vmatprep.subr.mxu0 0.0
    %3922 = vmatpush1.msra.mxu0 %v721
    %3923 = vmatprep.subr.mxu0 0.0
    %3924 = vmatpush1.msra.mxu0 %v722
    %3925 = vmatprep.subr.mxu0 0.0
    %3926 = vmatpush1.msra.mxu0 %v723
    %3927 = vmatprep.subr.mxu0 0.0
    %3928 = vmatpush1.msra.mxu0 %v724
    %3929 = vmatprep.subr.mxu0 0.0
    %3930 = vmatpush1.msra.mxu0 %v725
    %3931 = vmatprep.subr.mxu0 0.0
    %3932 = vmatpush1.msra.mxu0 %v726
    %3933 = vmatprep.subr.mxu0 0.0
    %3934 = vmatpush1.msra.mxu0 %v727
    %3935 = vmatprep.subr.mxu0 0.0
    %3936 = vmatpush1.msra.mxu0 %v728
    %3937 = vmatprep.subr.mxu0 0.0
    %3938 = vmatpush1.msra.mxu0 %v729
    %3939 = vmatprep.subr.mxu0 0.0
    %3940 = vmatpush1.msra.mxu0 %v730
    %3941 = vmatprep.subr.mxu0 0.0
    %3942 = vmatpush1.msra.mxu0 %v731
    %3943 = vmatprep.subr.mxu0 0.0
    %3944 = vmatpush1.msra.mxu0 %v732
    %3945 = vmatprep.subr.mxu0 0.0
    %3946 = vmatpush1.msra.mxu0 %v733
    %3947 = vmatprep.subr.mxu0 0.0
    %3948 = vmatpush1.msra.mxu0 0.0
    %3949 = vmatprep.subr.mxu0 0.0
    %3950 = vmatpush1.msra.mxu0 0.0
    %3951 = vmatprep.subr.mxu0 0.0
    %3952 = vmatpush1.msra.mxu0 0.0
    %3953 = vmatprep.subr.mxu0 0.0
    %3954 = vmatpush1.msra.mxu0 0.0
    %3955 = vmatprep.subr.mxu0 0.0
    %3956 = vmatpush1.msra.mxu0 0.0
    %3957 = vmatprep.subr.mxu0 0.0
    %3958 = vmatpush1.msra.mxu0 0.0
    %3959 = vmatprep.subr.mxu0 0.0
    %3960 = vmatpush1.msra.mxu0 0.0
    %3961 = vmatprep.subr.mxu0 0.0
    %3962 = vmatpush1.msra.mxu0 0.0
    %3963 = vmatprep.subr.mxu0 0.0
    %3964 = vmatpush1.msra.mxu0 0.0
    %3965 = vmatprep.subr.mxu0 0.0
    %3966 = vmatpush1.msra.mxu0 0.0
    %3967 = vmatprep.subr.mxu0 0.0
    %3968 = vmatpush1.msra.mxu0 0.0
    %3969 = vmatprep.subr.mxu0 0.0
    %3970 = vmatpush1.msra.mxu0 0.0
    %3971 = vmatprep.subr.mxu0 0.0
    %3972 = vmatpush1.msra.mxu0 0.0
    %3973 = vmatprep.subr.mxu0 0.0
    %3974 = vmatpush1.msra.mxu0 0.0
    %3975 = vmatprep.subr.mxu0 0.0
    %3976 = vmatpush1.msra.mxu0 0.0
    %3977 = vmatprep.subr.mxu0 0.0
    %3978 = vmatpush1.msra.mxu0 0.0
    %3979 = vmatprep.mubr.f32.mxu0 0.0
    %3980 = vmatmul.mubr.f32.gmra.mrb[0].mxu0 %v3914
    %v3981 = vpop.f32.mrb[0].mxu0
    %v3982 = vadd.f32 0.0, %v3981
    %v3983 = vpop.f32.mrb[0].mxu0
    %3984 = vdwg.mxu0
    %v3985 = vadd.f32 %v3837, %v3982
    %v3987 = vlaneseq
    %v3988 = vshrl.u32 %v3987, 7
    %v3989 = vsub.s32 0, %v3988
    %v3990 = vrot.slane %v734, %v3989
    %v3992 = vadd.f32 %v3985, %v3990
    %v3993 = vsel %vm2253, %v3992, 0.0
    %3994 = vadd.xlane.f32.xlu0 %v3993
    %v3995 = vpop.xlane.xlu0 %3994
    %v3996 = vmul.f32 %v3995, %v2257
    %v3997 = vsub.f32 %v3992, %v3996
    %v3998 = vsel %vm2253, %v3997, 0.0
    %v3999 = vmul.f32 %v3998, %v3998
    %4000 = vadd.xlane.f32.xlu0 %v3999
    %v4001 = vpop.xlane.xlu0 %4000
    %v4002 = vmul.f32 %v4001, %v2264
    %v4004 = vlaneseq
    %v4005 = vshrl.u32 %v4004, 7
    %v4006 = vsub.s32 0, %v4005
    %v4007 = vrot.slane %v735, %v4006
    %v4009 = vmul.f32 %v3998, %v4007
    %v4010 = vadd.f32 %v4002, 1e-12
    %v4011 = vrsqrt.pop %v4010
    %v4012 = vmul.f32 %v4009, %v4011
    %v4014 = vlaneseq
    %v4015 = vshrl.u32 %v4014, 7
    %v4016 = vsub.s32 0, %v4015
    %v4017 = vrot.slane %v736, %v4016
    %v4019 = vadd.f32 %v4012, %v4017
    %4020 = vst [vmem:[#allocation17] sm:$0xff] %v4019
    // Predicated region
    $region114: #{tpu_custom_call.1} parent=1 // pred_check
      _
    $region115: #{tpu_custom_call.1} parent=1 // pred_check_branch
      %4022 = sbr.rel (0) target = $region117
    $region116: #{tpu_custom_call.1} parent=1 // pred_region
      %s4024 = ssub.s32 128, 128
      %4025 = vsyncadd [#allocation4], %s4024
      %s4027 = sshll.u32 [#allocation17], 4
      %s4028 = int_to_ptr.vmem [resolvable:$true] %s4027
      %4030 = dma.vmem_to_hbm [thread:$0]  %s4028, 128, %s19, [#allocation4]
    $region117: #{tpu_custom_call.1} parent=1 // pred_fallthru
      _
    // Predicated region
    $region118: #{tpu_custom_call.1} parent=1 // pred_check
      _
    $region119: #{tpu_custom_call.1} parent=1 // pred_check_branch
      %4032 = sbr.rel (0) target = $region121
    $region120: #{tpu_custom_call.1} parent=1 // pred_region
      %4033 = dma.done [#allocation4], 128
    $region121: #{tpu_custom_call.1} parent=1 // pred_fallthru
      _
    %4034 = vsyncpa [#allocation3], 1
    %4035 = vsyncpa [#allocation6], 1
    %4036 = vsyncpa [#allocation9], 1
    %4037 = vsyncpa [#allocation12], 1
    %4038 = vsyncpa [#allocation15], 1
    %4039 = vsyncpa [#allocation4], 1

</llo_original>
